<compile_context>
chip_gen: v7x
topology: tpu7x:2x2x1
jax: 0.10.0
libtpu: 0.0.40
codegen_flags: <defaults>
</compile_context>

<pallas_src>
import functools

import jax
import jax.numpy as jnp
from jax.experimental import pallas as pl
from jax.experimental.pallas import tpu as pltpu


def _layer_norm(x, w, b, eps=1e-5):
    mu = jnp.mean(x, axis=-1, keepdims=True)
    xc = x - mu
    var = jnp.mean(xc * xc, axis=-1, keepdims=True)
    return xc * jax.lax.rsqrt(var + eps) * w + b


def transformer_classifier_kernel(
    x_ref,                 # (B*S, H)    f32 embedded tokens (flattened, lane-dense)
    qkv_w_ref,             # (L, H, 3H)  bf16  fused, pre-transposed in_proj weight
    qkv_b_ref,             # (L, 3H)     f32
    out_w_ref,             # (L, H, H)   bf16  pre-transposed out_proj weight
    out_b_ref,             # (L, H)      f32
    ln1_w_ref, ln1_b_ref,  # (L, H)      f32
    ffn_w1_ref,            # (L, H, 4H)  bf16
    ffn_b1_ref,            # (L, 4H)     f32
    ffn_w2_ref,            # (L, 4H, H)  bf16
    ffn_b2_ref,            # (L, H)      f32
    ln2_w_ref, ln2_b_ref,  # (L, H)      f32
    fc_w_ref,              # (H, C)      bf16
    fc_b_ref,              # (1, C)      f32
    out_ref,               # (B, C)      f32
    *, n_layers, n_heads, batch, seq,
):
    f32, bf16 = jnp.float32, jnp.bfloat16
    x = x_ref[...].astype(f32)                  # residual stream kept in f32
    BS, H = x.shape
    B, S = batch, seq
    dh = H // n_heads
    scale = 1.0 / (dh ** 0.5)

    for l in range(n_layers):
        # ---- fused QKV projection: one (BS, H) @ (H, 3H) matmul, bf16 -> f32 acc ----
        qkv = jnp.dot(x.astype(bf16), qkv_w_ref[l],
                      preferred_element_type=f32) + qkv_b_ref[l]   # (BS, 3H)

        # ---- multi-head self-attention (post-norm) ----
        # Per-head score/context matmuls on (B, S, dh) views of the fused QKV slab;
        # the output projection is decomposed per head and accumulated (no lane concat).
        attn = jnp.zeros((BS, H), f32)
        for h in range(n_heads):
            qh = qkv[:, h * dh:(h + 1) * dh].reshape(B, S, dh)
            kh = qkv[:, H + h * dh:H + (h + 1) * dh].reshape(B, S, dh)
            vh = qkv[:, 2 * H + h * dh:2 * H + (h + 1) * dh].reshape(B, S, dh)

            s = jnp.einsum('bqd,bkd->bqk', qh.astype(bf16), kh.astype(bf16),
                           preferred_element_type=f32) * scale
            s = s - jnp.max(s, axis=-1, keepdims=True)
            p = jnp.exp(s)                                          # f32 (EUP)
            p = p * pl.reciprocal(jnp.sum(p, axis=-1, keepdims=True), approx=True)

            ctx = jnp.einsum('bqk,bkd->bqd', p.astype(bf16), vh.astype(bf16),
                             preferred_element_type=f32)            # (B, S, dh)
            attn = attn + jnp.dot(ctx.reshape(BS, dh).astype(bf16),
                                  out_w_ref[l, h * dh:(h + 1) * dh, :],
                                  preferred_element_type=f32)       # (BS, H)
        attn = attn + out_b_ref[l]
        x = _layer_norm(x + attn, ln1_w_ref[l], ln1_b_ref[l])

        # ---- feed-forward (ReLU), lane-dense x @ w matmuls ----
        hid = jnp.dot(x.astype(bf16), ffn_w1_ref[l],
                      preferred_element_type=f32) + ffn_b1_ref[l]   # (BS, 4H)
        hid = jnp.maximum(hid, 0.0)
        ff = jnp.dot(hid.astype(bf16), ffn_w2_ref[l],
                     preferred_element_type=f32) + ffn_b2_ref[l]    # (BS, H)
        x = _layer_norm(x + ff, ln2_w_ref[l], ln2_b_ref[l])

    # ---- AdaptiveAvgPool1d(1) over sequence, then Linear classifier ----
    pooled = jnp.mean(x.reshape(B, S, H), axis=1)                   # (B, H)
    logits = jnp.dot(pooled.astype(bf16), fc_w_ref[...],
                     preferred_element_type=f32) + fc_b_ref[...]    # (B, C)
    out_ref[...] = logits.astype(out_ref.dtype)


def transformer_classifier_forward(token_ids, params, *, n_layers, n_heads, n_classes):
    # glue: embedding gather + host-side weight pre-transpose / dtype prep
    emb = jnp.take(params['embedding'], token_ids, axis=0)          # (B, S, H)
    B, S, H = emb.shape
    L, F, bf16 = n_layers, 4 * H, jnp.bfloat16

    args = (
        emb.reshape(B * S, H).astype(jnp.float32),
        jnp.transpose(params['in_proj_w'], (0, 2, 1)).astype(bf16),    # (L, H, 3H)
        params['in_proj_b'].astype(jnp.float32),                       # (L, 3H)
        jnp.transpose(params['out_proj_w'], (0, 2, 1)).astype(bf16),   # (L, H, H)
        params['out_proj_b'].astype(jnp.float32),                      # (L, H)
        params['ln1_w'], params['ln1_b'],
        jnp.transpose(params['ffn_w1'], (0, 2, 1)).astype(bf16),       # (L, H, 4H)
        params['ffn_b1'],
        jnp.transpose(params['ffn_w2'], (0, 2, 1)).astype(bf16),       # (L, 4H, H)
        params['ffn_b2'],
        params['ln2_w'], params['ln2_b'],
        params['fc_w'].T.astype(bf16),                                 # (H, C)
        params['fc_b'],                                                # (1, C)
    )

    BS = B * S
    flops = L * (2 * BS * H * 3 * H        # fused QKV
                 + 2 * 2 * BS * S * H      # scores + context
                 + 2 * BS * H * H          # out proj
                 + 2 * 2 * BS * H * F      # FFN
                 ) + 2 * B * H * n_classes
    transcendentals = L * (B * n_heads * S * S + 4 * BS)
    bytes_accessed = sum(int(a.size) * a.dtype.itemsize for a in args) + B * n_classes * 4

    vmem = pl.BlockSpec(memory_space=pltpu.MemorySpace.VMEM)
    kernel = functools.partial(transformer_classifier_kernel,
                               n_layers=n_layers, n_heads=n_heads, batch=B, seq=S)
    return pl.pallas_call(
        kernel,
        out_shape=jax.ShapeDtypeStruct((B, n_classes), jnp.float32),
        in_specs=[vmem] * len(args),
        out_specs=vmem,
        cost_estimate=pl.CostEstimate(flops=flops,
                                      transcendentals=transcendentals,
                                      bytes_accessed=bytes_accessed),
        compiler_params=pltpu.CompilerParams(vmem_limit_bytes=32 * 1024 * 1024),
    )(*args)


def init_params(key, vocab_size, hidden, n_layers, n_heads, n_classes):
    H, F, L = hidden, 4 * hidden, n_layers
    ks = jax.random.split(key, 12)

    def nrm(k, shape, scale=0.05):
        return scale * jax.random.normal(k, shape, jnp.float32)

    return dict(
        embedding=nrm(ks[0], (vocab_size, H)),
        in_proj_w=nrm(ks[1], (L, 3 * H, H)),
        in_proj_b=nrm(ks[2], (L, 3 * H)),
        out_proj_w=nrm(ks[3], (L, H, H)),
        out_proj_b=nrm(ks[4], (L, H)),
        ln1_w=jnp.ones((L, H), jnp.float32),
        ln1_b=jnp.zeros((L, H), jnp.float32),
        ffn_w1=nrm(ks[5], (L, F, H)),
        ffn_b1=nrm(ks[6], (L, F)),
        ffn_w2=nrm(ks[7], (L, H, F)),
        ffn_b2=nrm(ks[8], (L, H)),
        ln2_w=jnp.ones((L, H), jnp.float32),
        ln2_b=jnp.zeros((L, H), jnp.float32),
        fc_w=nrm(ks[9], (n_classes, H)),
        fc_b=nrm(ks[10], (1, n_classes)),
    )


def reference_forward(token_ids, params, *, n_layers, n_heads):
    """Plain-JAX f32 mirror of the PyTorch forward (eval mode) for validation."""
    x = jnp.take(params['embedding'], token_ids, axis=0)
    B, S, H = x.shape
    dh = H // n_heads
    for l in range(n_layers):
        w_in, b_in = params['in_proj_w'][l], params['in_proj_b'][l]
        qkv = x @ w_in.T + b_in
        q, k, v = qkv[..., :H], qkv[..., H:2 * H], qkv[..., 2 * H:]

        def heads(t):
            return t.reshape(B, S, n_heads, dh).transpose(0, 2, 1, 3)

        qh, kh, vh = heads(q), heads(k), heads(v)
        s = jnp.einsum('bhqd,bhkd->bhqk', qh, kh) / (dh ** 0.5)
        p = jax.nn.softmax(s, axis=-1)
        a = jnp.einsum('bhqk,bhkd->bhqd', p, vh).transpose(0, 2, 1, 3).reshape(B, S, H)
        a = a @ params['out_proj_w'][l].T + params['out_proj_b'][l]
        x = _layer_norm(x + a, params['ln1_w'][l], params['ln1_b'][l])

        h1 = jnp.maximum(x @ params['ffn_w1'][l].T + params['ffn_b1'][l], 0.0)
        ff = h1 @ params['ffn_w2'][l].T + params['ffn_b2'][l]
        x = _layer_norm(x + ff, params['ln2_w'][l], params['ln2_b'][l])

    pooled = jnp.mean(x, axis=1)
    return pooled @ params['fc_w'].T + params['fc_b']


if __name__ == "__main__":
    vocab_size, hidden, n_layers, n_heads, n_classes = 64, 32, 2, 4, 4
    B, S = 2, 8

    key = jax.random.PRNGKey(0)
    kp, kx = jax.random.split(key)
    params = init_params(kp, vocab_size, hidden, n_layers, n_heads, n_classes)
    tokens = jax.random.randint(kx, (B, S), 0, vocab_size, dtype=jnp.int32)

    out = transformer_classifier_forward(
        tokens, params, n_layers=n_layers, n_heads=n_heads, n_classes=n_classes)
    out = jax.block_until_ready(out)

    ref = reference_forward(tokens, params, n_layers=n_layers, n_heads=n_heads)

    assert out.shape == (B, n_classes)
    assert bool(jnp.all(jnp.isfinite(out)))
    # bf16 MXU operands vs f32 reference -> slightly relaxed tolerance
    assert bool(jnp.allclose(out, ref, rtol=3e-2, atol=3e-2)), (out, ref)
    print("KERNEL_OK")
</pallas_src>

<mosaic_0001>
module attributes {stable_mosaic.version = 11 : i64} {
  func.func @transformer_classifier_kernel(%arg0: memref<16x32xf32, #tpu.memory_space<vmem>>, %arg1: memref<2x32x96xbf16, #tpu.memory_space<vmem>>, %arg2: memref<2x96xf32, #tpu.memory_space<vmem>>, %arg3: memref<2x32x32xbf16, #tpu.memory_space<vmem>>, %arg4: memref<2x32xf32, #tpu.memory_space<vmem>>, %arg5: memref<2x32xf32, #tpu.memory_space<vmem>>, %arg6: memref<2x32xf32, #tpu.memory_space<vmem>>, %arg7: memref<2x32x128xbf16, #tpu.memory_space<vmem>>, %arg8: memref<2x128xf32, #tpu.memory_space<vmem>>, %arg9: memref<2x128x32xbf16, #tpu.memory_space<vmem>>, %arg10: memref<2x32xf32, #tpu.memory_space<vmem>>, %arg11: memref<2x32xf32, #tpu.memory_space<vmem>>, %arg12: memref<2x32xf32, #tpu.memory_space<vmem>>, %arg13: memref<32x4xbf16, #tpu.memory_space<vmem>>, %arg14: memref<1x4xf32, #tpu.memory_space<vmem>>, %arg15: memref<2x4xf32, #tpu.memory_space<vmem>>) attributes {dimension_semantics = [], scalar_prefetch = 0 : i64, scratch_operands = 0 : i64, tpu.core_type = #tpu.core_type<tc>} {
    %c0 = arith.constant 0 : index
    %c0_0 = arith.constant 0 : index
    %0 = vector.load %arg0[%c0, %c0_0] : memref<16x32xf32, #tpu.memory_space<vmem>>, vector<16x32xf32>
    %1 = arith.truncf %0 : vector<16x32xf32> to vector<16x32xbf16>
    %c0_1 = arith.constant 0 : index
    %c0_2 = arith.constant 0 : index
    %c0_3 = arith.constant 0 : index
    %2 = vector.load %arg1[%c0_1, %c0_2, %c0_3] : memref<2x32x96xbf16, #tpu.memory_space<vmem>>, vector<1x32x96xbf16>
    %3 = vector.shape_cast %2 : vector<1x32x96xbf16> to vector<32x96xbf16>
    %cst = arith.constant dense<0.000000e+00> : vector<16x96xf32>
    %4 = tpu.matmul %1, %3, %cst {dimension_numbers = #tpu.dot_dimension_numbers<[1], [0], [0], [1], [0, 0, 1, 1], [], []>} : vector<16x32xbf16>, vector<32x96xbf16>, vector<16x96xf32> -> vector<16x96xf32>
    %c0_4 = arith.constant 0 : index
    %c0_5 = arith.constant 0 : index
    %5 = vector.load %arg2[%c0_4, %c0_5] : memref<2x96xf32, #tpu.memory_space<vmem>>, vector<1x96xf32>
    %6 = vector.shape_cast %5 : vector<1x96xf32> to vector<96xf32>
    %7 = vector.shape_cast %6 : vector<96xf32> to vector<1x96xf32>
    %8 = vector.broadcast %7 : vector<1x96xf32> to vector<16x96xf32>
    %9 = arith.addf %4, %8 : vector<16x96xf32>
    %cst_6 = arith.constant 0.000000e+00 : f32
    %10 = vector.broadcast %cst_6 : f32 to vector<16x32xf32>
    %11 = vector.extract_strided_slice %9 {offsets = [0, 0], sizes = [16, 8], strides = [1, 1]} : vector<16x96xf32> to vector<16x8xf32>
    %12 = vector.shape_cast %11 : vector<16x8xf32> to vector<2x8x8xf32>
    %13 = vector.extract_strided_slice %9 {offsets = [0, 32], sizes = [16, 8], strides = [1, 1]} : vector<16x96xf32> to vector<16x8xf32>
    %14 = vector.shape_cast %13 : vector<16x8xf32> to vector<2x8x8xf32>
    %15 = vector.extract_strided_slice %9 {offsets = [0, 64], sizes = [16, 8], strides = [1, 1]} : vector<16x96xf32> to vector<16x8xf32>
    %16 = vector.shape_cast %15 : vector<16x8xf32> to vector<2x8x8xf32>
    %17 = arith.truncf %12 : vector<2x8x8xf32> to vector<2x8x8xbf16>
    %18 = arith.truncf %14 : vector<2x8x8xf32> to vector<2x8x8xbf16>
    "tpu.trace_start"() <{level = 10 : i32, message = "bqd,bkd->bqk"}> : () -> ()
    %cst_7 = arith.constant dense<0.000000e+00> : vector<2x8x8xf32>
    %19 = tpu.matmul %17, %18, %cst_7 {dimension_numbers = #tpu.dot_dimension_numbers<[2], [2], [1], [1], [0, 0, 0, 1, 1, 1], [0], [0]>} : vector<2x8x8xbf16>, vector<2x8x8xbf16>, vector<2x8x8xf32> -> vector<2x8x8xf32>
    "tpu.trace_stop"() : () -> ()
    %cst_8 = arith.constant 0.353553385 : f32
    %20 = vector.broadcast %cst_8 : f32 to vector<2x8x8xf32>
    %21 = arith.mulf %19, %20 : vector<2x8x8xf32>
    %cst_9 = arith.constant dense<0xFF800000> : vector<2x8xf32>
    %22 = vector.multi_reduction <maximumf>, %21, %cst_9 [2] : vector<2x8x8xf32> to vector<2x8xf32>
    %23 = vector.shape_cast %22 : vector<2x8xf32> to vector<2x8x1xf32>
    %24 = vector.broadcast %23 : vector<2x8x1xf32> to vector<2x8x8xf32>
    %25 = arith.subf %21, %24 : vector<2x8x8xf32>
    %26 = math.exp %25 : vector<2x8x8xf32>
    %cst_10 = arith.constant dense<0.000000e+00> : vector<2x8xf32>
    %27 = vector.multi_reduction <add>, %26, %cst_10 [2] : vector<2x8x8xf32> to vector<2x8xf32>
    %28 = vector.shape_cast %27 : vector<2x8xf32> to vector<2x8x1xf32>
    %29 = tpu.reciprocal %28 {approx = true} : vector<2x8x1xf32> -> vector<2x8x1xf32>
    %30 = vector.broadcast %29 : vector<2x8x1xf32> to vector<2x8x8xf32>
    %31 = arith.mulf %26, %30 : vector<2x8x8xf32>
    %32 = arith.truncf %31 : vector<2x8x8xf32> to vector<2x8x8xbf16>
    %33 = arith.truncf %16 : vector<2x8x8xf32> to vector<2x8x8xbf16>
    "tpu.trace_start"() <{level = 10 : i32, message = "bqk,bkd->bqd"}> : () -> ()
    %cst_11 = arith.constant dense<0.000000e+00> : vector<2x8x8xf32>
    %34 = tpu.matmul %32, %33, %cst_11 {dimension_numbers = #tpu.dot_dimension_numbers<[2], [1], [1], [2], [0, 0, 0, 1, 1, 2], [0], [0]>} : vector<2x8x8xbf16>, vector<2x8x8xbf16>, vector<2x8x8xf32> -> vector<2x8x8xf32>
    "tpu.trace_stop"() : () -> ()
    %35 = vector.shape_cast %34 : vector<2x8x8xf32> to vector<16x8xf32>
    %36 = arith.truncf %35 : vector<16x8xf32> to vector<16x8xbf16>
    %c0_12 = arith.constant 0 : index
    %c0_13 = arith.constant 0 : index
    %c0_14 = arith.constant 0 : index
    %37 = vector.load %arg3[%c0_12, %c0_13, %c0_14] : memref<2x32x32xbf16, #tpu.memory_space<vmem>>, vector<1x8x32xbf16>
    %38 = vector.shape_cast %37 : vector<1x8x32xbf16> to vector<8x32xbf16>
    %cst_15 = arith.constant dense<0.000000e+00> : vector<16x32xf32>
    %39 = tpu.matmul %36, %38, %cst_15 {dimension_numbers = #tpu.dot_dimension_numbers<[1], [0], [0], [1], [0, 0, 1, 1], [], []>} : vector<16x8xbf16>, vector<8x32xbf16>, vector<16x32xf32> -> vector<16x32xf32>
    %40 = arith.addf %10, %39 : vector<16x32xf32>
    %41 = vector.extract_strided_slice %9 {offsets = [0, 8], sizes = [16, 8], strides = [1, 1]} : vector<16x96xf32> to vector<16x8xf32>
    %42 = vector.shape_cast %41 : vector<16x8xf32> to vector<2x8x8xf32>
    %43 = vector.extract_strided_slice %9 {offsets = [0, 40], sizes = [16, 8], strides = [1, 1]} : vector<16x96xf32> to vector<16x8xf32>
    %44 = vector.shape_cast %43 : vector<16x8xf32> to vector<2x8x8xf32>
    %45 = vector.extract_strided_slice %9 {offsets = [0, 72], sizes = [16, 8], strides = [1, 1]} : vector<16x96xf32> to vector<16x8xf32>
    %46 = vector.shape_cast %45 : vector<16x8xf32> to vector<2x8x8xf32>
    %47 = arith.truncf %42 : vector<2x8x8xf32> to vector<2x8x8xbf16>
    %48 = arith.truncf %44 : vector<2x8x8xf32> to vector<2x8x8xbf16>
    "tpu.trace_start"() <{level = 10 : i32, message = "bqd,bkd->bqk"}> : () -> ()
    %cst_16 = arith.constant dense<0.000000e+00> : vector<2x8x8xf32>
    %49 = tpu.matmul %47, %48, %cst_16 {dimension_numbers = #tpu.dot_dimension_numbers<[2], [2], [1], [1], [0, 0, 0, 1, 1, 1], [0], [0]>} : vector<2x8x8xbf16>, vector<2x8x8xbf16>, vector<2x8x8xf32> -> vector<2x8x8xf32>
    "tpu.trace_stop"() : () -> ()
    %cst_17 = arith.constant 0.353553385 : f32
    %50 = vector.broadcast %cst_17 : f32 to vector<2x8x8xf32>
    %51 = arith.mulf %49, %50 : vector<2x8x8xf32>
    %cst_18 = arith.constant dense<0xFF800000> : vector<2x8xf32>
    %52 = vector.multi_reduction <maximumf>, %51, %cst_18 [2] : vector<2x8x8xf32> to vector<2x8xf32>
    %53 = vector.shape_cast %52 : vector<2x8xf32> to vector<2x8x1xf32>
    %54 = vector.broadcast %53 : vector<2x8x1xf32> to vector<2x8x8xf32>
    %55 = arith.subf %51, %54 : vector<2x8x8xf32>
    %56 = math.exp %55 : vector<2x8x8xf32>
    %cst_19 = arith.constant dense<0.000000e+00> : vector<2x8xf32>
    %57 = vector.multi_reduction <add>, %56, %cst_19 [2] : vector<2x8x8xf32> to vector<2x8xf32>
    %58 = vector.shape_cast %57 : vector<2x8xf32> to vector<2x8x1xf32>
    %59 = tpu.reciprocal %58 {approx = true} : vector<2x8x1xf32> -> vector<2x8x1xf32>
    %60 = vector.broadcast %59 : vector<2x8x1xf32> to vector<2x8x8xf32>
    %61 = arith.mulf %56, %60 : vector<2x8x8xf32>
    %62 = arith.truncf %61 : vector<2x8x8xf32> to vector<2x8x8xbf16>
    %63 = arith.truncf %46 : vector<2x8x8xf32> to vector<2x8x8xbf16>
    "tpu.trace_start"() <{level = 10 : i32, message = "bqk,bkd->bqd"}> : () -> ()
    %cst_20 = arith.constant dense<0.000000e+00> : vector<2x8x8xf32>
    %64 = tpu.matmul %62, %63, %cst_20 {dimension_numbers = #tpu.dot_dimension_numbers<[2], [1], [1], [2], [0, 0, 0, 1, 1, 2], [0], [0]>} : vector<2x8x8xbf16>, vector<2x8x8xbf16>, vector<2x8x8xf32> -> vector<2x8x8xf32>
    "tpu.trace_stop"() : () -> ()
    %65 = vector.shape_cast %64 : vector<2x8x8xf32> to vector<16x8xf32>
    %66 = arith.truncf %65 : vector<16x8xf32> to vector<16x8xbf16>
    %c0_21 = arith.constant 0 : index
    %c8 = arith.constant 8 : index
    %c0_22 = arith.constant 0 : index
    %67 = vector.load %arg3[%c0_21, %c8, %c0_22] : memref<2x32x32xbf16, #tpu.memory_space<vmem>>, vector<1x8x32xbf16>
    %68 = vector.shape_cast %67 : vector<1x8x32xbf16> to vector<8x32xbf16>
    %cst_23 = arith.constant dense<0.000000e+00> : vector<16x32xf32>
    %69 = tpu.matmul %66, %68, %cst_23 {dimension_numbers = #tpu.dot_dimension_numbers<[1], [0], [0], [1], [0, 0, 1, 1], [], []>} : vector<16x8xbf16>, vector<8x32xbf16>, vector<16x32xf32> -> vector<16x32xf32>
    %70 = arith.addf %40, %69 : vector<16x32xf32>
    %71 = vector.extract_strided_slice %9 {offsets = [0, 16], sizes = [16, 8], strides = [1, 1]} : vector<16x96xf32> to vector<16x8xf32>
    %72 = vector.shape_cast %71 : vector<16x8xf32> to vector<2x8x8xf32>
    %73 = vector.extract_strided_slice %9 {offsets = [0, 48], sizes = [16, 8], strides = [1, 1]} : vector<16x96xf32> to vector<16x8xf32>
    %74 = vector.shape_cast %73 : vector<16x8xf32> to vector<2x8x8xf32>
    %75 = vector.extract_strided_slice %9 {offsets = [0, 80], sizes = [16, 8], strides = [1, 1]} : vector<16x96xf32> to vector<16x8xf32>
    %76 = vector.shape_cast %75 : vector<16x8xf32> to vector<2x8x8xf32>
    %77 = arith.truncf %72 : vector<2x8x8xf32> to vector<2x8x8xbf16>
    %78 = arith.truncf %74 : vector<2x8x8xf32> to vector<2x8x8xbf16>
    "tpu.trace_start"() <{level = 10 : i32, message = "bqd,bkd->bqk"}> : () -> ()
    %cst_24 = arith.constant dense<0.000000e+00> : vector<2x8x8xf32>
    %79 = tpu.matmul %77, %78, %cst_24 {dimension_numbers = #tpu.dot_dimension_numbers<[2], [2], [1], [1], [0, 0, 0, 1, 1, 1], [0], [0]>} : vector<2x8x8xbf16>, vector<2x8x8xbf16>, vector<2x8x8xf32> -> vector<2x8x8xf32>
    "tpu.trace_stop"() : () -> ()
    %cst_25 = arith.constant 0.353553385 : f32
    %80 = vector.broadcast %cst_25 : f32 to vector<2x8x8xf32>
    %81 = arith.mulf %79, %80 : vector<2x8x8xf32>
    %cst_26 = arith.constant dense<0xFF800000> : vector<2x8xf32>
    %82 = vector.multi_reduction <maximumf>, %81, %cst_26 [2] : vector<2x8x8xf32> to vector<2x8xf32>
    %83 = vector.shape_cast %82 : vector<2x8xf32> to vector<2x8x1xf32>
    %84 = vector.broadcast %83 : vector<2x8x1xf32> to vector<2x8x8xf32>
    %85 = arith.subf %81, %84 : vector<2x8x8xf32>
    %86 = math.exp %85 : vector<2x8x8xf32>
    %cst_27 = arith.constant dense<0.000000e+00> : vector<2x8xf32>
    %87 = vector.multi_reduction <add>, %86, %cst_27 [2] : vector<2x8x8xf32> to vector<2x8xf32>
    %88 = vector.shape_cast %87 : vector<2x8xf32> to vector<2x8x1xf32>
    %89 = tpu.reciprocal %88 {approx = true} : vector<2x8x1xf32> -> vector<2x8x1xf32>
    %90 = vector.broadcast %89 : vector<2x8x1xf32> to vector<2x8x8xf32>
    %91 = arith.mulf %86, %90 : vector<2x8x8xf32>
    %92 = arith.truncf %91 : vector<2x8x8xf32> to vector<2x8x8xbf16>
    %93 = arith.truncf %76 : vector<2x8x8xf32> to vector<2x8x8xbf16>
    "tpu.trace_start"() <{level = 10 : i32, message = "bqk,bkd->bqd"}> : () -> ()
    %cst_28 = arith.constant dense<0.000000e+00> : vector<2x8x8xf32>
    %94 = tpu.matmul %92, %93, %cst_28 {dimension_numbers = #tpu.dot_dimension_numbers<[2], [1], [1], [2], [0, 0, 0, 1, 1, 2], [0], [0]>} : vector<2x8x8xbf16>, vector<2x8x8xbf16>, vector<2x8x8xf32> -> vector<2x8x8xf32>
    "tpu.trace_stop"() : () -> ()
    %95 = vector.shape_cast %94 : vector<2x8x8xf32> to vector<16x8xf32>
    %96 = arith.truncf %95 : vector<16x8xf32> to vector<16x8xbf16>
    %c0_29 = arith.constant 0 : index
    %c16 = arith.constant 16 : index
    %c0_30 = arith.constant 0 : index
    %97 = vector.load %arg3[%c0_29, %c16, %c0_30] : memref<2x32x32xbf16, #tpu.memory_space<vmem>>, vector<1x8x32xbf16>
    %98 = vector.shape_cast %97 : vector<1x8x32xbf16> to vector<8x32xbf16>
    %cst_31 = arith.constant dense<0.000000e+00> : vector<16x32xf32>
    %99 = tpu.matmul %96, %98, %cst_31 {dimension_numbers = #tpu.dot_dimension_numbers<[1], [0], [0], [1], [0, 0, 1, 1], [], []>} : vector<16x8xbf16>, vector<8x32xbf16>, vector<16x32xf32> -> vector<16x32xf32>
    %100 = arith.addf %70, %99 : vector<16x32xf32>
    %101 = vector.extract_strided_slice %9 {offsets = [0, 24], sizes = [16, 8], strides = [1, 1]} : vector<16x96xf32> to vector<16x8xf32>
    %102 = vector.shape_cast %101 : vector<16x8xf32> to vector<2x8x8xf32>
    %103 = vector.extract_strided_slice %9 {offsets = [0, 56], sizes = [16, 8], strides = [1, 1]} : vector<16x96xf32> to vector<16x8xf32>
    %104 = vector.shape_cast %103 : vector<16x8xf32> to vector<2x8x8xf32>
    %105 = vector.extract_strided_slice %9 {offsets = [0, 88], sizes = [16, 8], strides = [1, 1]} : vector<16x96xf32> to vector<16x8xf32>
    %106 = vector.shape_cast %105 : vector<16x8xf32> to vector<2x8x8xf32>
    %107 = arith.truncf %102 : vector<2x8x8xf32> to vector<2x8x8xbf16>
    %108 = arith.truncf %104 : vector<2x8x8xf32> to vector<2x8x8xbf16>
    "tpu.trace_start"() <{level = 10 : i32, message = "bqd,bkd->bqk"}> : () -> ()
    %cst_32 = arith.constant dense<0.000000e+00> : vector<2x8x8xf32>
    %109 = tpu.matmul %107, %108, %cst_32 {dimension_numbers = #tpu.dot_dimension_numbers<[2], [2], [1], [1], [0, 0, 0, 1, 1, 1], [0], [0]>} : vector<2x8x8xbf16>, vector<2x8x8xbf16>, vector<2x8x8xf32> -> vector<2x8x8xf32>
    "tpu.trace_stop"() : () -> ()
    %cst_33 = arith.constant 0.353553385 : f32
    %110 = vector.broadcast %cst_33 : f32 to vector<2x8x8xf32>
    %111 = arith.mulf %109, %110 : vector<2x8x8xf32>
    %cst_34 = arith.constant dense<0xFF800000> : vector<2x8xf32>
    %112 = vector.multi_reduction <maximumf>, %111, %cst_34 [2] : vector<2x8x8xf32> to vector<2x8xf32>
    %113 = vector.shape_cast %112 : vector<2x8xf32> to vector<2x8x1xf32>
    %114 = vector.broadcast %113 : vector<2x8x1xf32> to vector<2x8x8xf32>
    %115 = arith.subf %111, %114 : vector<2x8x8xf32>
    %116 = math.exp %115 : vector<2x8x8xf32>
    %cst_35 = arith.constant dense<0.000000e+00> : vector<2x8xf32>
    %117 = vector.multi_reduction <add>, %116, %cst_35 [2] : vector<2x8x8xf32> to vector<2x8xf32>
    %118 = vector.shape_cast %117 : vector<2x8xf32> to vector<2x8x1xf32>
    %119 = tpu.reciprocal %118 {approx = true} : vector<2x8x1xf32> -> vector<2x8x1xf32>
    %120 = vector.broadcast %119 : vector<2x8x1xf32> to vector<2x8x8xf32>
    %121 = arith.mulf %116, %120 : vector<2x8x8xf32>
    %122 = arith.truncf %121 : vector<2x8x8xf32> to vector<2x8x8xbf16>
    %123 = arith.truncf %106 : vector<2x8x8xf32> to vector<2x8x8xbf16>
    "tpu.trace_start"() <{level = 10 : i32, message = "bqk,bkd->bqd"}> : () -> ()
    %cst_36 = arith.constant dense<0.000000e+00> : vector<2x8x8xf32>
    %124 = tpu.matmul %122, %123, %cst_36 {dimension_numbers = #tpu.dot_dimension_numbers<[2], [1], [1], [2], [0, 0, 0, 1, 1, 2], [0], [0]>} : vector<2x8x8xbf16>, vector<2x8x8xbf16>, vector<2x8x8xf32> -> vector<2x8x8xf32>
    "tpu.trace_stop"() : () -> ()
    %125 = vector.shape_cast %124 : vector<2x8x8xf32> to vector<16x8xf32>
    %126 = arith.truncf %125 : vector<16x8xf32> to vector<16x8xbf16>
    %c0_37 = arith.constant 0 : index
    %c24 = arith.constant 24 : index
    %c0_38 = arith.constant 0 : index
    %127 = vector.load %arg3[%c0_37, %c24, %c0_38] : memref<2x32x32xbf16, #tpu.memory_space<vmem>>, vector<1x8x32xbf16>
    %128 = vector.shape_cast %127 : vector<1x8x32xbf16> to vector<8x32xbf16>
    %cst_39 = arith.constant dense<0.000000e+00> : vector<16x32xf32>
    %129 = tpu.matmul %126, %128, %cst_39 {dimension_numbers = #tpu.dot_dimension_numbers<[1], [0], [0], [1], [0, 0, 1, 1], [], []>} : vector<16x8xbf16>, vector<8x32xbf16>, vector<16x32xf32> -> vector<16x32xf32>
    %130 = arith.addf %100, %129 : vector<16x32xf32>
    %c0_40 = arith.constant 0 : index
    %c0_41 = arith.constant 0 : index
    %131 = vector.load %arg4[%c0_40, %c0_41] : memref<2x32xf32, #tpu.memory_space<vmem>>, vector<1x32xf32>
    %132 = vector.shape_cast %131 : vector<1x32xf32> to vector<32xf32>
    %133 = vector.shape_cast %132 : vector<32xf32> to vector<1x32xf32>
    %134 = vector.broadcast %133 : vector<1x32xf32> to vector<16x32xf32>
    %135 = arith.addf %130, %134 : vector<16x32xf32>
    %136 = arith.addf %0, %135 : vector<16x32xf32>
    %c0_42 = arith.constant 0 : index
    %c0_43 = arith.constant 0 : index
    %137 = vector.load %arg5[%c0_42, %c0_43] : memref<2x32xf32, #tpu.memory_space<vmem>>, vector<1x32xf32>
    %138 = vector.shape_cast %137 : vector<1x32xf32> to vector<32xf32>
    %c0_44 = arith.constant 0 : index
    %c0_45 = arith.constant 0 : index
    %139 = vector.load %arg6[%c0_44, %c0_45] : memref<2x32xf32, #tpu.memory_space<vmem>>, vector<1x32xf32>
    %140 = vector.shape_cast %139 : vector<1x32xf32> to vector<32xf32>
    %cst_46 = arith.constant dense<0.000000e+00> : vector<16xf32>
    %141 = vector.multi_reduction <add>, %136, %cst_46 [1] : vector<16x32xf32> to vector<16xf32>
    %142 = vector.shape_cast %141 : vector<16xf32> to vector<16x1xf32>
    %cst_47 = arith.constant 3.200000e+01 : f32
    %143 = vector.broadcast %cst_47 : f32 to vector<16x1xf32>
    %144 = arith.divf %142, %143 : vector<16x1xf32>
    %145 = vector.broadcast %144 : vector<16x1xf32> to vector<16x32xf32>
    %146 = arith.subf %136, %145 : vector<16x32xf32>
    %147 = arith.mulf %146, %146 : vector<16x32xf32>
    %cst_48 = arith.constant dense<0.000000e+00> : vector<16xf32>
    %148 = vector.multi_reduction <add>, %147, %cst_48 [1] : vector<16x32xf32> to vector<16xf32>
    %149 = vector.shape_cast %148 : vector<16xf32> to vector<16x1xf32>
    %cst_49 = arith.constant 3.200000e+01 : f32
    %150 = vector.broadcast %cst_49 : f32 to vector<16x1xf32>
    %151 = arith.divf %149, %150 : vector<16x1xf32>
    %cst_50 = arith.constant 9.99999974E-6 : f32
    %152 = vector.broadcast %cst_50 : f32 to vector<16x1xf32>
    %153 = arith.addf %151, %152 : vector<16x1xf32>
    %154 = math.rsqrt %153 : vector<16x1xf32>
    %155 = vector.broadcast %154 : vector<16x1xf32> to vector<16x32xf32>
    %156 = arith.mulf %146, %155 : vector<16x32xf32>
    %157 = vector.shape_cast %138 : vector<32xf32> to vector<1x32xf32>
    %158 = vector.broadcast %157 : vector<1x32xf32> to vector<16x32xf32>
    %159 = arith.mulf %156, %158 : vector<16x32xf32>
    %160 = vector.shape_cast %140 : vector<32xf32> to vector<1x32xf32>
    %161 = vector.broadcast %160 : vector<1x32xf32> to vector<16x32xf32>
    %162 = arith.addf %159, %161 : vector<16x32xf32>
    %163 = arith.truncf %162 : vector<16x32xf32> to vector<16x32xbf16>
    %c0_51 = arith.constant 0 : index
    %c0_52 = arith.constant 0 : index
    %c0_53 = arith.constant 0 : index
    %164 = vector.load %arg7[%c0_51, %c0_52, %c0_53] : memref<2x32x128xbf16, #tpu.memory_space<vmem>>, vector<1x32x128xbf16>
    %165 = vector.shape_cast %164 : vector<1x32x128xbf16> to vector<32x128xbf16>
    %cst_54 = arith.constant dense<0.000000e+00> : vector<16x128xf32>
    %166 = tpu.matmul %163, %165, %cst_54 {dimension_numbers = #tpu.dot_dimension_numbers<[1], [0], [0], [1], [0, 0, 1, 1], [], []>} : vector<16x32xbf16>, vector<32x128xbf16>, vector<16x128xf32> -> vector<16x128xf32>
    %c0_55 = arith.constant 0 : index
    %c0_56 = arith.constant 0 : index
    %167 = vector.load %arg8[%c0_55, %c0_56] : memref<2x128xf32, #tpu.memory_space<vmem>>, vector<1x128xf32>
    %168 = vector.shape_cast %167 : vector<1x128xf32> to vector<128xf32>
    %169 = vector.shape_cast %168 : vector<128xf32> to vector<1x128xf32>
    %170 = vector.broadcast %169 : vector<1x128xf32> to vector<16x128xf32>
    %171 = arith.addf %166, %170 : vector<16x128xf32>
    %cst_57 = arith.constant 0.000000e+00 : f32
    %172 = vector.broadcast %cst_57 : f32 to vector<16x128xf32>
    %173 = arith.maximumf %171, %172 : vector<16x128xf32>
    %174 = arith.truncf %173 : vector<16x128xf32> to vector<16x128xbf16>
    %c0_58 = arith.constant 0 : index
    %c0_59 = arith.constant 0 : index
    %c0_60 = arith.constant 0 : index
    %175 = vector.load %arg9[%c0_58, %c0_59, %c0_60] : memref<2x128x32xbf16, #tpu.memory_space<vmem>>, vector<1x128x32xbf16>
    %176 = vector.shape_cast %175 : vector<1x128x32xbf16> to vector<128x32xbf16>
    %cst_61 = arith.constant dense<0.000000e+00> : vector<16x32xf32>
    %177 = tpu.matmul %174, %176, %cst_61 {dimension_numbers = #tpu.dot_dimension_numbers<[1], [0], [0], [1], [0, 0, 1, 1], [], []>} : vector<16x128xbf16>, vector<128x32xbf16>, vector<16x32xf32> -> vector<16x32xf32>
    %c0_62 = arith.constant 0 : index
    %c0_63 = arith.constant 0 : index
    %178 = vector.load %arg10[%c0_62, %c0_63] : memref<2x32xf32, #tpu.memory_space<vmem>>, vector<1x32xf32>
    %179 = vector.shape_cast %178 : vector<1x32xf32> to vector<32xf32>
    %180 = vector.shape_cast %179 : vector<32xf32> to vector<1x32xf32>
    %181 = vector.broadcast %180 : vector<1x32xf32> to vector<16x32xf32>
    %182 = arith.addf %177, %181 : vector<16x32xf32>
    %183 = arith.addf %162, %182 : vector<16x32xf32>
    %c0_64 = arith.constant 0 : index
    %c0_65 = arith.constant 0 : index
    %184 = vector.load %arg11[%c0_64, %c0_65] : memref<2x32xf32, #tpu.memory_space<vmem>>, vector<1x32xf32>
    %185 = vector.shape_cast %184 : vector<1x32xf32> to vector<32xf32>
    %c0_66 = arith.constant 0 : index
    %c0_67 = arith.constant 0 : index
    %186 = vector.load %arg12[%c0_66, %c0_67] : memref<2x32xf32, #tpu.memory_space<vmem>>, vector<1x32xf32>
    %187 = vector.shape_cast %186 : vector<1x32xf32> to vector<32xf32>
    %cst_68 = arith.constant dense<0.000000e+00> : vector<16xf32>
    %188 = vector.multi_reduction <add>, %183, %cst_68 [1] : vector<16x32xf32> to vector<16xf32>
    %189 = vector.shape_cast %188 : vector<16xf32> to vector<16x1xf32>
    %cst_69 = arith.constant 3.200000e+01 : f32
    %190 = vector.broadcast %cst_69 : f32 to vector<16x1xf32>
    %191 = arith.divf %189, %190 : vector<16x1xf32>
    %192 = vector.broadcast %191 : vector<16x1xf32> to vector<16x32xf32>
    %193 = arith.subf %183, %192 : vector<16x32xf32>
    %194 = arith.mulf %193, %193 : vector<16x32xf32>
    %cst_70 = arith.constant dense<0.000000e+00> : vector<16xf32>
    %195 = vector.multi_reduction <add>, %194, %cst_70 [1] : vector<16x32xf32> to vector<16xf32>
    %196 = vector.shape_cast %195 : vector<16xf32> to vector<16x1xf32>
    %cst_71 = arith.constant 3.200000e+01 : f32
    %197 = vector.broadcast %cst_71 : f32 to vector<16x1xf32>
    %198 = arith.divf %196, %197 : vector<16x1xf32>
    %cst_72 = arith.constant 9.99999974E-6 : f32
    %199 = vector.broadcast %cst_72 : f32 to vector<16x1xf32>
    %200 = arith.addf %198, %199 : vector<16x1xf32>
    %201 = math.rsqrt %200 : vector<16x1xf32>
    %202 = vector.broadcast %201 : vector<16x1xf32> to vector<16x32xf32>
    %203 = arith.mulf %193, %202 : vector<16x32xf32>
    %204 = vector.shape_cast %185 : vector<32xf32> to vector<1x32xf32>
    %205 = vector.broadcast %204 : vector<1x32xf32> to vector<16x32xf32>
    %206 = arith.mulf %203, %205 : vector<16x32xf32>
    %207 = vector.shape_cast %187 : vector<32xf32> to vector<1x32xf32>
    %208 = vector.broadcast %207 : vector<1x32xf32> to vector<16x32xf32>
    %209 = arith.addf %206, %208 : vector<16x32xf32>
    %210 = arith.truncf %209 : vector<16x32xf32> to vector<16x32xbf16>
    %c1 = arith.constant 1 : index
    %c0_73 = arith.constant 0 : index
    %c0_74 = arith.constant 0 : index
    %211 = vector.load %arg1[%c1, %c0_73, %c0_74] : memref<2x32x96xbf16, #tpu.memory_space<vmem>>, vector<1x32x96xbf16>
    %212 = vector.shape_cast %211 : vector<1x32x96xbf16> to vector<32x96xbf16>
    %cst_75 = arith.constant dense<0.000000e+00> : vector<16x96xf32>
    %213 = tpu.matmul %210, %212, %cst_75 {dimension_numbers = #tpu.dot_dimension_numbers<[1], [0], [0], [1], [0, 0, 1, 1], [], []>} : vector<16x32xbf16>, vector<32x96xbf16>, vector<16x96xf32> -> vector<16x96xf32>
    %c1_76 = arith.constant 1 : index
    %c0_77 = arith.constant 0 : index
    %214 = vector.load %arg2[%c1_76, %c0_77] : memref<2x96xf32, #tpu.memory_space<vmem>>, vector<1x96xf32>
    %215 = vector.shape_cast %214 : vector<1x96xf32> to vector<96xf32>
    %216 = vector.shape_cast %215 : vector<96xf32> to vector<1x96xf32>
    %217 = vector.broadcast %216 : vector<1x96xf32> to vector<16x96xf32>
    %218 = arith.addf %213, %217 : vector<16x96xf32>
    %cst_78 = arith.constant 0.000000e+00 : f32
    %219 = vector.broadcast %cst_78 : f32 to vector<16x32xf32>
    %220 = vector.extract_strided_slice %218 {offsets = [0, 0], sizes = [16, 8], strides = [1, 1]} : vector<16x96xf32> to vector<16x8xf32>
    %221 = vector.shape_cast %220 : vector<16x8xf32> to vector<2x8x8xf32>
    %222 = vector.extract_strided_slice %218 {offsets = [0, 32], sizes = [16, 8], strides = [1, 1]} : vector<16x96xf32> to vector<16x8xf32>
    %223 = vector.shape_cast %222 : vector<16x8xf32> to vector<2x8x8xf32>
    %224 = vector.extract_strided_slice %218 {offsets = [0, 64], sizes = [16, 8], strides = [1, 1]} : vector<16x96xf32> to vector<16x8xf32>
    %225 = vector.shape_cast %224 : vector<16x8xf32> to vector<2x8x8xf32>
    %226 = arith.truncf %221 : vector<2x8x8xf32> to vector<2x8x8xbf16>
    %227 = arith.truncf %223 : vector<2x8x8xf32> to vector<2x8x8xbf16>
    "tpu.trace_start"() <{level = 10 : i32, message = "bqd,bkd->bqk"}> : () -> ()
    %cst_79 = arith.constant dense<0.000000e+00> : vector<2x8x8xf32>
    %228 = tpu.matmul %226, %227, %cst_79 {dimension_numbers = #tpu.dot_dimension_numbers<[2], [2], [1], [1], [0, 0, 0, 1, 1, 1], [0], [0]>} : vector<2x8x8xbf16>, vector<2x8x8xbf16>, vector<2x8x8xf32> -> vector<2x8x8xf32>
    "tpu.trace_stop"() : () -> ()
    %cst_80 = arith.constant 0.353553385 : f32
    %229 = vector.broadcast %cst_80 : f32 to vector<2x8x8xf32>
    %230 = arith.mulf %228, %229 : vector<2x8x8xf32>
    %cst_81 = arith.constant dense<0xFF800000> : vector<2x8xf32>
    %231 = vector.multi_reduction <maximumf>, %230, %cst_81 [2] : vector<2x8x8xf32> to vector<2x8xf32>
    %232 = vector.shape_cast %231 : vector<2x8xf32> to vector<2x8x1xf32>
    %233 = vector.broadcast %232 : vector<2x8x1xf32> to vector<2x8x8xf32>
    %234 = arith.subf %230, %233 : vector<2x8x8xf32>
    %235 = math.exp %234 : vector<2x8x8xf32>
    %cst_82 = arith.constant dense<0.000000e+00> : vector<2x8xf32>
    %236 = vector.multi_reduction <add>, %235, %cst_82 [2] : vector<2x8x8xf32> to vector<2x8xf32>
    %237 = vector.shape_cast %236 : vector<2x8xf32> to vector<2x8x1xf32>
    %238 = tpu.reciprocal %237 {approx = true} : vector<2x8x1xf32> -> vector<2x8x1xf32>
    %239 = vector.broadcast %238 : vector<2x8x1xf32> to vector<2x8x8xf32>
    %240 = arith.mulf %235, %239 : vector<2x8x8xf32>
    %241 = arith.truncf %240 : vector<2x8x8xf32> to vector<2x8x8xbf16>
    %242 = arith.truncf %225 : vector<2x8x8xf32> to vector<2x8x8xbf16>
    "tpu.trace_start"() <{level = 10 : i32, message = "bqk,bkd->bqd"}> : () -> ()
    %cst_83 = arith.constant dense<0.000000e+00> : vector<2x8x8xf32>
    %243 = tpu.matmul %241, %242, %cst_83 {dimension_numbers = #tpu.dot_dimension_numbers<[2], [1], [1], [2], [0, 0, 0, 1, 1, 2], [0], [0]>} : vector<2x8x8xbf16>, vector<2x8x8xbf16>, vector<2x8x8xf32> -> vector<2x8x8xf32>
    "tpu.trace_stop"() : () -> ()
    %244 = vector.shape_cast %243 : vector<2x8x8xf32> to vector<16x8xf32>
    %245 = arith.truncf %244 : vector<16x8xf32> to vector<16x8xbf16>
    %c1_84 = arith.constant 1 : index
    %c0_85 = arith.constant 0 : index
    %c0_86 = arith.constant 0 : index
    %246 = vector.load %arg3[%c1_84, %c0_85, %c0_86] : memref<2x32x32xbf16, #tpu.memory_space<vmem>>, vector<1x8x32xbf16>
    %247 = vector.shape_cast %246 : vector<1x8x32xbf16> to vector<8x32xbf16>
    %cst_87 = arith.constant dense<0.000000e+00> : vector<16x32xf32>
    %248 = tpu.matmul %245, %247, %cst_87 {dimension_numbers = #tpu.dot_dimension_numbers<[1], [0], [0], [1], [0, 0, 1, 1], [], []>} : vector<16x8xbf16>, vector<8x32xbf16>, vector<16x32xf32> -> vector<16x32xf32>
    %249 = arith.addf %219, %248 : vector<16x32xf32>
    %250 = vector.extract_strided_slice %218 {offsets = [0, 8], sizes = [16, 8], strides = [1, 1]} : vector<16x96xf32> to vector<16x8xf32>
    %251 = vector.shape_cast %250 : vector<16x8xf32> to vector<2x8x8xf32>
    %252 = vector.extract_strided_slice %218 {offsets = [0, 40], sizes = [16, 8], strides = [1, 1]} : vector<16x96xf32> to vector<16x8xf32>
    %253 = vector.shape_cast %252 : vector<16x8xf32> to vector<2x8x8xf32>
    %254 = vector.extract_strided_slice %218 {offsets = [0, 72], sizes = [16, 8], strides = [1, 1]} : vector<16x96xf32> to vector<16x8xf32>
    %255 = vector.shape_cast %254 : vector<16x8xf32> to vector<2x8x8xf32>
    %256 = arith.truncf %251 : vector<2x8x8xf32> to vector<2x8x8xbf16>
    %257 = arith.truncf %253 : vector<2x8x8xf32> to vector<2x8x8xbf16>
    "tpu.trace_start"() <{level = 10 : i32, message = "bqd,bkd->bqk"}> : () -> ()
    %cst_88 = arith.constant dense<0.000000e+00> : vector<2x8x8xf32>
    %258 = tpu.matmul %256, %257, %cst_88 {dimension_numbers = #tpu.dot_dimension_numbers<[2], [2], [1], [1], [0, 0, 0, 1, 1, 1], [0], [0]>} : vector<2x8x8xbf16>, vector<2x8x8xbf16>, vector<2x8x8xf32> -> vector<2x8x8xf32>
    "tpu.trace_stop"() : () -> ()
    %cst_89 = arith.constant 0.353553385 : f32
    %259 = vector.broadcast %cst_89 : f32 to vector<2x8x8xf32>
    %260 = arith.mulf %258, %259 : vector<2x8x8xf32>
    %cst_90 = arith.constant dense<0xFF800000> : vector<2x8xf32>
    %261 = vector.multi_reduction <maximumf>, %260, %cst_90 [2] : vector<2x8x8xf32> to vector<2x8xf32>
    %262 = vector.shape_cast %261 : vector<2x8xf32> to vector<2x8x1xf32>
    %263 = vector.broadcast %262 : vector<2x8x1xf32> to vector<2x8x8xf32>
    %264 = arith.subf %260, %263 : vector<2x8x8xf32>
    %265 = math.exp %264 : vector<2x8x8xf32>
    %cst_91 = arith.constant dense<0.000000e+00> : vector<2x8xf32>
    %266 = vector.multi_reduction <add>, %265, %cst_91 [2] : vector<2x8x8xf32> to vector<2x8xf32>
    %267 = vector.shape_cast %266 : vector<2x8xf32> to vector<2x8x1xf32>
    %268 = tpu.reciprocal %267 {approx = true} : vector<2x8x1xf32> -> vector<2x8x1xf32>
    %269 = vector.broadcast %268 : vector<2x8x1xf32> to vector<2x8x8xf32>
    %270 = arith.mulf %265, %269 : vector<2x8x8xf32>
    %271 = arith.truncf %270 : vector<2x8x8xf32> to vector<2x8x8xbf16>
    %272 = arith.truncf %255 : vector<2x8x8xf32> to vector<2x8x8xbf16>
    "tpu.trace_start"() <{level = 10 : i32, message = "bqk,bkd->bqd"}> : () -> ()
    %cst_92 = arith.constant dense<0.000000e+00> : vector<2x8x8xf32>
    %273 = tpu.matmul %271, %272, %cst_92 {dimension_numbers = #tpu.dot_dimension_numbers<[2], [1], [1], [2], [0, 0, 0, 1, 1, 2], [0], [0]>} : vector<2x8x8xbf16>, vector<2x8x8xbf16>, vector<2x8x8xf32> -> vector<2x8x8xf32>
    "tpu.trace_stop"() : () -> ()
    %274 = vector.shape_cast %273 : vector<2x8x8xf32> to vector<16x8xf32>
    %275 = arith.truncf %274 : vector<16x8xf32> to vector<16x8xbf16>
    %c1_93 = arith.constant 1 : index
    %c8_94 = arith.constant 8 : index
    %c0_95 = arith.constant 0 : index
    %276 = vector.load %arg3[%c1_93, %c8_94, %c0_95] : memref<2x32x32xbf16, #tpu.memory_space<vmem>>, vector<1x8x32xbf16>
    %277 = vector.shape_cast %276 : vector<1x8x32xbf16> to vector<8x32xbf16>
    %cst_96 = arith.constant dense<0.000000e+00> : vector<16x32xf32>
    %278 = tpu.matmul %275, %277, %cst_96 {dimension_numbers = #tpu.dot_dimension_numbers<[1], [0], [0], [1], [0, 0, 1, 1], [], []>} : vector<16x8xbf16>, vector<8x32xbf16>, vector<16x32xf32> -> vector<16x32xf32>
    %279 = arith.addf %249, %278 : vector<16x32xf32>
    %280 = vector.extract_strided_slice %218 {offsets = [0, 16], sizes = [16, 8], strides = [1, 1]} : vector<16x96xf32> to vector<16x8xf32>
    %281 = vector.shape_cast %280 : vector<16x8xf32> to vector<2x8x8xf32>
    %282 = vector.extract_strided_slice %218 {offsets = [0, 48], sizes = [16, 8], strides = [1, 1]} : vector<16x96xf32> to vector<16x8xf32>
    %283 = vector.shape_cast %282 : vector<16x8xf32> to vector<2x8x8xf32>
    %284 = vector.extract_strided_slice %218 {offsets = [0, 80], sizes = [16, 8], strides = [1, 1]} : vector<16x96xf32> to vector<16x8xf32>
    %285 = vector.shape_cast %284 : vector<16x8xf32> to vector<2x8x8xf32>
    %286 = arith.truncf %281 : vector<2x8x8xf32> to vector<2x8x8xbf16>
    %287 = arith.truncf %283 : vector<2x8x8xf32> to vector<2x8x8xbf16>
    "tpu.trace_start"() <{level = 10 : i32, message = "bqd,bkd->bqk"}> : () -> ()
    %cst_97 = arith.constant dense<0.000000e+00> : vector<2x8x8xf32>
    %288 = tpu.matmul %286, %287, %cst_97 {dimension_numbers = #tpu.dot_dimension_numbers<[2], [2], [1], [1], [0, 0, 0, 1, 1, 1], [0], [0]>} : vector<2x8x8xbf16>, vector<2x8x8xbf16>, vector<2x8x8xf32> -> vector<2x8x8xf32>
    "tpu.trace_stop"() : () -> ()
    %cst_98 = arith.constant 0.353553385 : f32
    %289 = vector.broadcast %cst_98 : f32 to vector<2x8x8xf32>
    %290 = arith.mulf %288, %289 : vector<2x8x8xf32>
    %cst_99 = arith.constant dense<0xFF800000> : vector<2x8xf32>
    %291 = vector.multi_reduction <maximumf>, %290, %cst_99 [2] : vector<2x8x8xf32> to vector<2x8xf32>
    %292 = vector.shape_cast %291 : vector<2x8xf32> to vector<2x8x1xf32>
    %293 = vector.broadcast %292 : vector<2x8x1xf32> to vector<2x8x8xf32>
    %294 = arith.subf %290, %293 : vector<2x8x8xf32>
    %295 = math.exp %294 : vector<2x8x8xf32>
    %cst_100 = arith.constant dense<0.000000e+00> : vector<2x8xf32>
    %296 = vector.multi_reduction <add>, %295, %cst_100 [2] : vector<2x8x8xf32> to vector<2x8xf32>
    %297 = vector.shape_cast %296 : vector<2x8xf32> to vector<2x8x1xf32>
    %298 = tpu.reciprocal %297 {approx = true} : vector<2x8x1xf32> -> vector<2x8x1xf32>
    %299 = vector.broadcast %298 : vector<2x8x1xf32> to vector<2x8x8xf32>
    %300 = arith.mulf %295, %299 : vector<2x8x8xf32>
    %301 = arith.truncf %300 : vector<2x8x8xf32> to vector<2x8x8xbf16>
    %302 = arith.truncf %285 : vector<2x8x8xf32> to vector<2x8x8xbf16>
    "tpu.trace_start"() <{level = 10 : i32, message = "bqk,bkd->bqd"}> : () -> ()
    %cst_101 = arith.constant dense<0.000000e+00> : vector<2x8x8xf32>
    %303 = tpu.matmul %301, %302, %cst_101 {dimension_numbers = #tpu.dot_dimension_numbers<[2], [1], [1], [2], [0, 0, 0, 1, 1, 2], [0], [0]>} : vector<2x8x8xbf16>, vector<2x8x8xbf16>, vector<2x8x8xf32> -> vector<2x8x8xf32>
    "tpu.trace_stop"() : () -> ()
    %304 = vector.shape_cast %303 : vector<2x8x8xf32> to vector<16x8xf32>
    %305 = arith.truncf %304 : vector<16x8xf32> to vector<16x8xbf16>
    %c1_102 = arith.constant 1 : index
    %c16_103 = arith.constant 16 : index
    %c0_104 = arith.constant 0 : index
    %306 = vector.load %arg3[%c1_102, %c16_103, %c0_104] : memref<2x32x32xbf16, #tpu.memory_space<vmem>>, vector<1x8x32xbf16>
    %307 = vector.shape_cast %306 : vector<1x8x32xbf16> to vector<8x32xbf16>
    %cst_105 = arith.constant dense<0.000000e+00> : vector<16x32xf32>
    %308 = tpu.matmul %305, %307, %cst_105 {dimension_numbers = #tpu.dot_dimension_numbers<[1], [0], [0], [1], [0, 0, 1, 1], [], []>} : vector<16x8xbf16>, vector<8x32xbf16>, vector<16x32xf32> -> vector<16x32xf32>
    %309 = arith.addf %279, %308 : vector<16x32xf32>
    %310 = vector.extract_strided_slice %218 {offsets = [0, 24], sizes = [16, 8], strides = [1, 1]} : vector<16x96xf32> to vector<16x8xf32>
    %311 = vector.shape_cast %310 : vector<16x8xf32> to vector<2x8x8xf32>
    %312 = vector.extract_strided_slice %218 {offsets = [0, 56], sizes = [16, 8], strides = [1, 1]} : vector<16x96xf32> to vector<16x8xf32>
    %313 = vector.shape_cast %312 : vector<16x8xf32> to vector<2x8x8xf32>
    %314 = vector.extract_strided_slice %218 {offsets = [0, 88], sizes = [16, 8], strides = [1, 1]} : vector<16x96xf32> to vector<16x8xf32>
    %315 = vector.shape_cast %314 : vector<16x8xf32> to vector<2x8x8xf32>
    %316 = arith.truncf %311 : vector<2x8x8xf32> to vector<2x8x8xbf16>
    %317 = arith.truncf %313 : vector<2x8x8xf32> to vector<2x8x8xbf16>
    "tpu.trace_start"() <{level = 10 : i32, message = "bqd,bkd->bqk"}> : () -> ()
    %cst_106 = arith.constant dense<0.000000e+00> : vector<2x8x8xf32>
    %318 = tpu.matmul %316, %317, %cst_106 {dimension_numbers = #tpu.dot_dimension_numbers<[2], [2], [1], [1], [0, 0, 0, 1, 1, 1], [0], [0]>} : vector<2x8x8xbf16>, vector<2x8x8xbf16>, vector<2x8x8xf32> -> vector<2x8x8xf32>
    "tpu.trace_stop"() : () -> ()
    %cst_107 = arith.constant 0.353553385 : f32
    %319 = vector.broadcast %cst_107 : f32 to vector<2x8x8xf32>
    %320 = arith.mulf %318, %319 : vector<2x8x8xf32>
    %cst_108 = arith.constant dense<0xFF800000> : vector<2x8xf32>
    %321 = vector.multi_reduction <maximumf>, %320, %cst_108 [2] : vector<2x8x8xf32> to vector<2x8xf32>
    %322 = vector.shape_cast %321 : vector<2x8xf32> to vector<2x8x1xf32>
    %323 = vector.broadcast %322 : vector<2x8x1xf32> to vector<2x8x8xf32>
    %324 = arith.subf %320, %323 : vector<2x8x8xf32>
    %325 = math.exp %324 : vector<2x8x8xf32>
    %cst_109 = arith.constant dense<0.000000e+00> : vector<2x8xf32>
    %326 = vector.multi_reduction <add>, %325, %cst_109 [2] : vector<2x8x8xf32> to vector<2x8xf32>
    %327 = vector.shape_cast %326 : vector<2x8xf32> to vector<2x8x1xf32>
    %328 = tpu.reciprocal %327 {approx = true} : vector<2x8x1xf32> -> vector<2x8x1xf32>
    %329 = vector.broadcast %328 : vector<2x8x1xf32> to vector<2x8x8xf32>
    %330 = arith.mulf %325, %329 : vector<2x8x8xf32>
    %331 = arith.truncf %330 : vector<2x8x8xf32> to vector<2x8x8xbf16>
    %332 = arith.truncf %315 : vector<2x8x8xf32> to vector<2x8x8xbf16>
    "tpu.trace_start"() <{level = 10 : i32, message = "bqk,bkd->bqd"}> : () -> ()
    %cst_110 = arith.constant dense<0.000000e+00> : vector<2x8x8xf32>
    %333 = tpu.matmul %331, %332, %cst_110 {dimension_numbers = #tpu.dot_dimension_numbers<[2], [1], [1], [2], [0, 0, 0, 1, 1, 2], [0], [0]>} : vector<2x8x8xbf16>, vector<2x8x8xbf16>, vector<2x8x8xf32> -> vector<2x8x8xf32>
    "tpu.trace_stop"() : () -> ()
    %334 = vector.shape_cast %333 : vector<2x8x8xf32> to vector<16x8xf32>
    %335 = arith.truncf %334 : vector<16x8xf32> to vector<16x8xbf16>
    %c1_111 = arith.constant 1 : index
    %c24_112 = arith.constant 24 : index
    %c0_113 = arith.constant 0 : index
    %336 = vector.load %arg3[%c1_111, %c24_112, %c0_113] : memref<2x32x32xbf16, #tpu.memory_space<vmem>>, vector<1x8x32xbf16>
    %337 = vector.shape_cast %336 : vector<1x8x32xbf16> to vector<8x32xbf16>
    %cst_114 = arith.constant dense<0.000000e+00> : vector<16x32xf32>
    %338 = tpu.matmul %335, %337, %cst_114 {dimension_numbers = #tpu.dot_dimension_numbers<[1], [0], [0], [1], [0, 0, 1, 1], [], []>} : vector<16x8xbf16>, vector<8x32xbf16>, vector<16x32xf32> -> vector<16x32xf32>
    %339 = arith.addf %309, %338 : vector<16x32xf32>
    %c1_115 = arith.constant 1 : index
    %c0_116 = arith.constant 0 : index
    %340 = vector.load %arg4[%c1_115, %c0_116] : memref<2x32xf32, #tpu.memory_space<vmem>>, vector<1x32xf32>
    %341 = vector.shape_cast %340 : vector<1x32xf32> to vector<32xf32>
    %342 = vector.shape_cast %341 : vector<32xf32> to vector<1x32xf32>
    %343 = vector.broadcast %342 : vector<1x32xf32> to vector<16x32xf32>
    %344 = arith.addf %339, %343 : vector<16x32xf32>
    %345 = arith.addf %209, %344 : vector<16x32xf32>
    %c1_117 = arith.constant 1 : index
    %c0_118 = arith.constant 0 : index
    %346 = vector.load %arg5[%c1_117, %c0_118] : memref<2x32xf32, #tpu.memory_space<vmem>>, vector<1x32xf32>
    %347 = vector.shape_cast %346 : vector<1x32xf32> to vector<32xf32>
    %c1_119 = arith.constant 1 : index
    %c0_120 = arith.constant 0 : index
    %348 = vector.load %arg6[%c1_119, %c0_120] : memref<2x32xf32, #tpu.memory_space<vmem>>, vector<1x32xf32>
    %349 = vector.shape_cast %348 : vector<1x32xf32> to vector<32xf32>
    %cst_121 = arith.constant dense<0.000000e+00> : vector<16xf32>
    %350 = vector.multi_reduction <add>, %345, %cst_121 [1] : vector<16x32xf32> to vector<16xf32>
    %351 = vector.shape_cast %350 : vector<16xf32> to vector<16x1xf32>
    %cst_122 = arith.constant 3.200000e+01 : f32
    %352 = vector.broadcast %cst_122 : f32 to vector<16x1xf32>
    %353 = arith.divf %351, %352 : vector<16x1xf32>
    %354 = vector.broadcast %353 : vector<16x1xf32> to vector<16x32xf32>
    %355 = arith.subf %345, %354 : vector<16x32xf32>
    %356 = arith.mulf %355, %355 : vector<16x32xf32>
    %cst_123 = arith.constant dense<0.000000e+00> : vector<16xf32>
    %357 = vector.multi_reduction <add>, %356, %cst_123 [1] : vector<16x32xf32> to vector<16xf32>
    %358 = vector.shape_cast %357 : vector<16xf32> to vector<16x1xf32>
    %cst_124 = arith.constant 3.200000e+01 : f32
    %359 = vector.broadcast %cst_124 : f32 to vector<16x1xf32>
    %360 = arith.divf %358, %359 : vector<16x1xf32>
    %cst_125 = arith.constant 9.99999974E-6 : f32
    %361 = vector.broadcast %cst_125 : f32 to vector<16x1xf32>
    %362 = arith.addf %360, %361 : vector<16x1xf32>
    %363 = math.rsqrt %362 : vector<16x1xf32>
    %364 = vector.broadcast %363 : vector<16x1xf32> to vector<16x32xf32>
    %365 = arith.mulf %355, %364 : vector<16x32xf32>
    %366 = vector.shape_cast %347 : vector<32xf32> to vector<1x32xf32>
    %367 = vector.broadcast %366 : vector<1x32xf32> to vector<16x32xf32>
    %368 = arith.mulf %365, %367 : vector<16x32xf32>
    %369 = vector.shape_cast %349 : vector<32xf32> to vector<1x32xf32>
    %370 = vector.broadcast %369 : vector<1x32xf32> to vector<16x32xf32>
    %371 = arith.addf %368, %370 : vector<16x32xf32>
    %372 = arith.truncf %371 : vector<16x32xf32> to vector<16x32xbf16>
    %c1_126 = arith.constant 1 : index
    %c0_127 = arith.constant 0 : index
    %c0_128 = arith.constant 0 : index
    %373 = vector.load %arg7[%c1_126, %c0_127, %c0_128] : memref<2x32x128xbf16, #tpu.memory_space<vmem>>, vector<1x32x128xbf16>
    %374 = vector.shape_cast %373 : vector<1x32x128xbf16> to vector<32x128xbf16>
    %cst_129 = arith.constant dense<0.000000e+00> : vector<16x128xf32>
    %375 = tpu.matmul %372, %374, %cst_129 {dimension_numbers = #tpu.dot_dimension_numbers<[1], [0], [0], [1], [0, 0, 1, 1], [], []>} : vector<16x32xbf16>, vector<32x128xbf16>, vector<16x128xf32> -> vector<16x128xf32>
    %c1_130 = arith.constant 1 : index
    %c0_131 = arith.constant 0 : index
    %376 = vector.load %arg8[%c1_130, %c0_131] : memref<2x128xf32, #tpu.memory_space<vmem>>, vector<1x128xf32>
    %377 = vector.shape_cast %376 : vector<1x128xf32> to vector<128xf32>
    %378 = vector.shape_cast %377 : vector<128xf32> to vector<1x128xf32>
    %379 = vector.broadcast %378 : vector<1x128xf32> to vector<16x128xf32>
    %380 = arith.addf %375, %379 : vector<16x128xf32>
    %cst_132 = arith.constant 0.000000e+00 : f32
    %381 = vector.broadcast %cst_132 : f32 to vector<16x128xf32>
    %382 = arith.maximumf %380, %381 : vector<16x128xf32>
    %383 = arith.truncf %382 : vector<16x128xf32> to vector<16x128xbf16>
    %c1_133 = arith.constant 1 : index
    %c0_134 = arith.constant 0 : index
    %c0_135 = arith.constant 0 : index
    %384 = vector.load %arg9[%c1_133, %c0_134, %c0_135] : memref<2x128x32xbf16, #tpu.memory_space<vmem>>, vector<1x128x32xbf16>
    %385 = vector.shape_cast %384 : vector<1x128x32xbf16> to vector<128x32xbf16>
    %cst_136 = arith.constant dense<0.000000e+00> : vector<16x32xf32>
    %386 = tpu.matmul %383, %385, %cst_136 {dimension_numbers = #tpu.dot_dimension_numbers<[1], [0], [0], [1], [0, 0, 1, 1], [], []>} : vector<16x128xbf16>, vector<128x32xbf16>, vector<16x32xf32> -> vector<16x32xf32>
    %c1_137 = arith.constant 1 : index
    %c0_138 = arith.constant 0 : index
    %387 = vector.load %arg10[%c1_137, %c0_138] : memref<2x32xf32, #tpu.memory_space<vmem>>, vector<1x32xf32>
    %388 = vector.shape_cast %387 : vector<1x32xf32> to vector<32xf32>
    %389 = vector.shape_cast %388 : vector<32xf32> to vector<1x32xf32>
    %390 = vector.broadcast %389 : vector<1x32xf32> to vector<16x32xf32>
    %391 = arith.addf %386, %390 : vector<16x32xf32>
    %392 = arith.addf %371, %391 : vector<16x32xf32>
    %c1_139 = arith.constant 1 : index
    %c0_140 = arith.constant 0 : index
    %393 = vector.load %arg11[%c1_139, %c0_140] : memref<2x32xf32, #tpu.memory_space<vmem>>, vector<1x32xf32>
    %394 = vector.shape_cast %393 : vector<1x32xf32> to vector<32xf32>
    %c1_141 = arith.constant 1 : index
    %c0_142 = arith.constant 0 : index
    %395 = vector.load %arg12[%c1_141, %c0_142] : memref<2x32xf32, #tpu.memory_space<vmem>>, vector<1x32xf32>
    %396 = vector.shape_cast %395 : vector<1x32xf32> to vector<32xf32>
    %cst_143 = arith.constant dense<0.000000e+00> : vector<16xf32>
    %397 = vector.multi_reduction <add>, %392, %cst_143 [1] : vector<16x32xf32> to vector<16xf32>
    %398 = vector.shape_cast %397 : vector<16xf32> to vector<16x1xf32>
    %cst_144 = arith.constant 3.200000e+01 : f32
    %399 = vector.broadcast %cst_144 : f32 to vector<16x1xf32>
    %400 = arith.divf %398, %399 : vector<16x1xf32>
    %401 = vector.broadcast %400 : vector<16x1xf32> to vector<16x32xf32>
    %402 = arith.subf %392, %401 : vector<16x32xf32>
    %403 = arith.mulf %402, %402 : vector<16x32xf32>
    %cst_145 = arith.constant dense<0.000000e+00> : vector<16xf32>
    %404 = vector.multi_reduction <add>, %403, %cst_145 [1] : vector<16x32xf32> to vector<16xf32>
    %405 = vector.shape_cast %404 : vector<16xf32> to vector<16x1xf32>
    %cst_146 = arith.constant 3.200000e+01 : f32
    %406 = vector.broadcast %cst_146 : f32 to vector<16x1xf32>
    %407 = arith.divf %405, %406 : vector<16x1xf32>
    %cst_147 = arith.constant 9.99999974E-6 : f32
    %408 = vector.broadcast %cst_147 : f32 to vector<16x1xf32>
    %409 = arith.addf %407, %408 : vector<16x1xf32>
    %410 = math.rsqrt %409 : vector<16x1xf32>
    %411 = vector.broadcast %410 : vector<16x1xf32> to vector<16x32xf32>
    %412 = arith.mulf %402, %411 : vector<16x32xf32>
    %413 = vector.shape_cast %394 : vector<32xf32> to vector<1x32xf32>
    %414 = vector.broadcast %413 : vector<1x32xf32> to vector<16x32xf32>
    %415 = arith.mulf %412, %414 : vector<16x32xf32>
    %416 = vector.shape_cast %396 : vector<32xf32> to vector<1x32xf32>
    %417 = vector.broadcast %416 : vector<1x32xf32> to vector<16x32xf32>
    %418 = arith.addf %415, %417 : vector<16x32xf32>
    %419 = vector.shape_cast %418 : vector<16x32xf32> to vector<2x8x32xf32>
    %cst_148 = arith.constant dense<0.000000e+00> : vector<2x32xf32>
    %420 = vector.multi_reduction <add>, %419, %cst_148 [1] : vector<2x8x32xf32> to vector<2x32xf32>
    %cst_149 = arith.constant 8.000000e+00 : f32
    %421 = vector.broadcast %cst_149 : f32 to vector<2x32xf32>
    %422 = arith.divf %420, %421 : vector<2x32xf32>
    %423 = arith.truncf %422 : vector<2x32xf32> to vector<2x32xbf16>
    %c0_150 = arith.constant 0 : index
    %c0_151 = arith.constant 0 : index
    %424 = vector.load %arg13[%c0_150, %c0_151] : memref<32x4xbf16, #tpu.memory_space<vmem>>, vector<32x4xbf16>
    %cst_152 = arith.constant dense<0.000000e+00> : vector<2x4xf32>
    %425 = tpu.matmul %423, %424, %cst_152 {dimension_numbers = #tpu.dot_dimension_numbers<[1], [0], [0], [1], [0, 0, 1, 1], [], []>} : vector<2x32xbf16>, vector<32x4xbf16>, vector<2x4xf32> -> vector<2x4xf32>
    %c0_153 = arith.constant 0 : index
    %c0_154 = arith.constant 0 : index
    %426 = vector.load %arg14[%c0_153, %c0_154] : memref<1x4xf32, #tpu.memory_space<vmem>>, vector<1x4xf32>
    %427 = vector.broadcast %426 : vector<1x4xf32> to vector<2x4xf32>
    %428 = arith.addf %425, %427 : vector<2x4xf32>
    %c0_155 = arith.constant 0 : index
    %c0_156 = arith.constant 0 : index
    %429 = vector.load %arg15[%c0_155, %c0_156] : memref<2x4xf32, #tpu.memory_space<vmem>>, vector<2x4xf32>
    tpu.vector_store %arg15[%c0_155, %c0_156], %428 {strides = array<i32>} : memref<2x4xf32, #tpu.memory_space<vmem>>, vector<2x4xf32>,
    return
  }
}

</mosaic_0001>

<llo_original>
// kernel: tpu_custom_call.1
$region0: #{tpu_custom_call.1}
  #allocation0 [shape = 'u32[]', space=smem, size = 0x4, offset = 0x4, fixed_abs, tag = 'smem constant byte address 0x4 - core index']
  #allocation1 [shape = 'u32[144,128]{1,0:T(1,128)}', space=vmem, size = 0x12000, scoped, tag = 'internal scratch']
  %s0 = inlined_call_operand.vmem [shape: f32[16,32], index: 0, kind: input, shape index: {}]
  %s1 = inlined_call_operand.vmem [shape: bf16[2,32,96], index: 1, kind: input, shape index: {}]
  %s2 = inlined_call_operand.vmem [shape: f32[2,96], index: 2, kind: input, shape index: {}]
  %s3 = inlined_call_operand.vmem [shape: bf16[2,32,32], index: 3, kind: input, shape index: {}]
  %s4 = inlined_call_operand.vmem [shape: f32[2,32], index: 4, kind: input, shape index: {}]
  %s5 = inlined_call_operand.vmem [shape: f32[2,32], index: 5, kind: input, shape index: {}]
  %s6 = inlined_call_operand.vmem [shape: f32[2,32], index: 6, kind: input, shape index: {}]
  %s7 = inlined_call_operand.vmem [shape: bf16[2,32,128], index: 7, kind: input, shape index: {}]
  %s8 = inlined_call_operand.vmem [shape: f32[2,128], index: 8, kind: input, shape index: {}]
  %s9 = inlined_call_operand.vmem [shape: bf16[2,128,32], index: 9, kind: input, shape index: {}]
  %s10 = inlined_call_operand.vmem [shape: f32[2,32], index: 10, kind: input, shape index: {}]
  %s11 = inlined_call_operand.vmem [shape: f32[2,32], index: 11, kind: input, shape index: {}]
  %s12 = inlined_call_operand.vmem [shape: f32[2,32], index: 12, kind: input, shape index: {}]
  %s13 = inlined_call_operand.vmem [shape: bf16[32,4], index: 13, kind: input, shape index: {}]
  %s14 = inlined_call_operand.vmem [shape: f32[1,4], index: 14, kind: input, shape index: {}]
  %s15 = inlined_call_operand.hbm [shape: f32[2,4], index: 15, kind: output, shape index: {}]
  %s16 = sld [smem:[#allocation0]]
  $region70: #{tpu_custom_call.1} parent=0
    _
  %s18 = ssub.s32 1, %s16
  %s19 = scalar_select 0, %s18, %s16
  $region1: #{tpu_custom_call.1} parent=0
    #allocation2 [shape = 'u8[1024]{0}', space=vmem, size = 0x400, scoped, tag = 'output window, operand 0, single buffered']
    #allocation3 [shape = 's32[1]{0}', space=sflag, size = 0x4, scoped, tag = 'scoped memory for tpu_custom_call.1']
    %20 = vsyncpa [#allocation3], 0
    // Predicated region
    $region2: #{tpu_custom_call.1} parent=1 // pred_check
      _
    $region3: #{tpu_custom_call.1} parent=1 // pred_check_branch
      %22 = sbr.rel (0) target = $region5
    $region4: #{tpu_custom_call.1} parent=1 // pred_region
      _
    $region5: #{tpu_custom_call.1} parent=1 // pred_fallthru
      _
    // Predicated region
    $region6: #{tpu_custom_call.1} parent=1 // pred_check
      _
    $region7: #{tpu_custom_call.1} parent=1 // pred_check_branch
      %24 = sbr.rel (0) target = $region9
    $region8: #{tpu_custom_call.1} parent=1 // pred_region
      _
    $region9: #{tpu_custom_call.1} parent=1 // pred_fallthru
      _
    // Predicated region
    $region10: #{tpu_custom_call.1} parent=1 // pred_check
      _
    $region11: #{tpu_custom_call.1} parent=1 // pred_check_branch
      %26 = sbr.rel (0) target = $region13
    $region12: #{tpu_custom_call.1} parent=1 // pred_region
      _
    $region13: #{tpu_custom_call.1} parent=1 // pred_fallthru
      _
    // Predicated region
    $region14: #{tpu_custom_call.1} parent=1 // pred_check
      _
    $region15: #{tpu_custom_call.1} parent=1 // pred_check_branch
      %28 = sbr.rel (0) target = $region17
    $region16: #{tpu_custom_call.1} parent=1 // pred_region
      _
    $region17: #{tpu_custom_call.1} parent=1 // pred_fallthru
      _
    // Predicated region
    $region18: #{tpu_custom_call.1} parent=1 // pred_check
      _
    $region19: #{tpu_custom_call.1} parent=1 // pred_check_branch
      %30 = sbr.rel (0) target = $region21
    $region20: #{tpu_custom_call.1} parent=1 // pred_region
      _
    $region21: #{tpu_custom_call.1} parent=1 // pred_fallthru
      _
    // Predicated region
    $region22: #{tpu_custom_call.1} parent=1 // pred_check
      _
    $region23: #{tpu_custom_call.1} parent=1 // pred_check_branch
      %32 = sbr.rel (0) target = $region25
    $region24: #{tpu_custom_call.1} parent=1 // pred_region
      _
    $region25: #{tpu_custom_call.1} parent=1 // pred_fallthru
      _
    // Predicated region
    $region26: #{tpu_custom_call.1} parent=1 // pred_check
      _
    $region27: #{tpu_custom_call.1} parent=1 // pred_check_branch
      %34 = sbr.rel (0) target = $region29
    $region28: #{tpu_custom_call.1} parent=1 // pred_region
      _
    $region29: #{tpu_custom_call.1} parent=1 // pred_fallthru
      _
    // Predicated region
    $region30: #{tpu_custom_call.1} parent=1 // pred_check
      _
    $region31: #{tpu_custom_call.1} parent=1 // pred_check_branch
      %36 = sbr.rel (0) target = $region33
    $region32: #{tpu_custom_call.1} parent=1 // pred_region
      _
    $region33: #{tpu_custom_call.1} parent=1 // pred_fallthru
      _
    // Predicated region
    $region34: #{tpu_custom_call.1} parent=1 // pred_check
      _
    $region35: #{tpu_custom_call.1} parent=1 // pred_check_branch
      %38 = sbr.rel (0) target = $region37
    $region36: #{tpu_custom_call.1} parent=1 // pred_region
      _
    $region37: #{tpu_custom_call.1} parent=1 // pred_fallthru
      _
    // Predicated region
    $region38: #{tpu_custom_call.1} parent=1 // pred_check
      _
    $region39: #{tpu_custom_call.1} parent=1 // pred_check_branch
      %40 = sbr.rel (0) target = $region41
    $region40: #{tpu_custom_call.1} parent=1 // pred_region
      _
    $region41: #{tpu_custom_call.1} parent=1 // pred_fallthru
      _
    // Predicated region
    $region42: #{tpu_custom_call.1} parent=1 // pred_check
      _
    $region43: #{tpu_custom_call.1} parent=1 // pred_check_branch
      %42 = sbr.rel (0) target = $region45
    $region44: #{tpu_custom_call.1} parent=1 // pred_region
      _
    $region45: #{tpu_custom_call.1} parent=1 // pred_fallthru
      _
    // Predicated region
    $region46: #{tpu_custom_call.1} parent=1 // pred_check
      _
    $region47: #{tpu_custom_call.1} parent=1 // pred_check_branch
      %44 = sbr.rel (0) target = $region49
    $region48: #{tpu_custom_call.1} parent=1 // pred_region
      _
    $region49: #{tpu_custom_call.1} parent=1 // pred_fallthru
      _
    // Predicated region
    $region50: #{tpu_custom_call.1} parent=1 // pred_check
      _
    $region51: #{tpu_custom_call.1} parent=1 // pred_check_branch
      %46 = sbr.rel (0) target = $region53
    $region52: #{tpu_custom_call.1} parent=1 // pred_region
      _
    $region53: #{tpu_custom_call.1} parent=1 // pred_fallthru
      _
    // Predicated region
    $region54: #{tpu_custom_call.1} parent=1 // pred_check
      _
    $region55: #{tpu_custom_call.1} parent=1 // pred_check_branch
      %48 = sbr.rel (0) target = $region57
    $region56: #{tpu_custom_call.1} parent=1 // pred_region
      _
    $region57: #{tpu_custom_call.1} parent=1 // pred_fallthru
      _
    // Predicated region
    $region58: #{tpu_custom_call.1} parent=1 // pred_check
      _
    $region59: #{tpu_custom_call.1} parent=1 // pred_check_branch
      %50 = sbr.rel (0) target = $region61
    $region60: #{tpu_custom_call.1} parent=1 // pred_region
      _
    $region61: #{tpu_custom_call.1} parent=1 // pred_fallthru
      _
    %v52 = vld [vmem:[%s0] sm:$0xff]
    %v53 = vld [vmem:[%s0 + $0x8] sm:$0xff]
    %v54 = vpack.c.bf16 %v53, %v52
    %v55 = vld [vmem:[%s1] sm:$0xf]
    %v56 = vld [vmem:[%s1 + $0x4] sm:$0xf]
    %v57 = vld [vmem:[%s1 + $0x8] sm:$0xf]
    %v58 = vld [vmem:[%s1 + $0xc] sm:$0xf]
    %v59 = vld [vmem:[%s2] sm:$0x1]
    %v60 = vlaneseq
    %v61 = vshrl.u32 %v60, 7
    %v62 = vsub.s32 0, %v61
    %v63 = vrot.slane %v59, %v62
    %v68 = vunpack.c.l.b16 %v55
    %v69 = vunpack.c.l.b16 %v56
    %v70 = vunpack.c.l.b16 %v57
    %v71 = vunpack.c.l.b16 %v58
    %v72 = vpack.c.b16 %v69, %v68
    %v73 = vpack.c.b16 %v71, %v70
    %vm76 = vcmask 261120
    %v78 = vsel %vm76, %v54, 0
    %80 = vmatprep.subr.bf16.mxu0 0
    %81 = vmatpush1.bf16.msra.mxu0 %v72
    %82 = vmatprep.subr.bf16.mxu0 0
    %83 = vmatpush1.bf16.msra.mxu0 %v73
    %84 = vmatprep.subr.bf16.mxu0 0
    %85 = vmatpush1.bf16.msra.mxu0 0
    %86 = vmatprep.subr.bf16.mxu0 0
    %87 = vmatpush1.bf16.msra.mxu0 0
    %88 = vmatprep.subr.bf16.mxu0 0
    %89 = vmatpush1.bf16.msra.mxu0 0
    %90 = vmatprep.subr.bf16.mxu0 0
    %91 = vmatpush1.bf16.msra.mxu0 0
    %92 = vmatprep.subr.bf16.mxu0 0
    %93 = vmatpush1.bf16.msra.mxu0 0
    %94 = vmatprep.subr.bf16.mxu0 0
    %95 = vmatpush1.bf16.msra.mxu0 0
    %96 = vmatprep.subr.bf16.mxu0 0
    %97 = vmatpush1.bf16.msra.mxu0 0
    %98 = vmatprep.subr.bf16.mxu0 0
    %99 = vmatpush1.bf16.msra.mxu0 0
    %100 = vmatprep.subr.bf16.mxu0 0
    %101 = vmatpush1.bf16.msra.mxu0 0
    %102 = vmatprep.subr.bf16.mxu0 0
    %103 = vmatpush1.bf16.msra.mxu0 0
    %104 = vmatprep.subr.bf16.mxu0 0
    %105 = vmatpush1.bf16.msra.mxu0 0
    %106 = vmatprep.subr.bf16.mxu0 0
    %107 = vmatpush1.bf16.msra.mxu0 0
    %108 = vmatprep.subr.bf16.mxu0 0
    %109 = vmatpush1.bf16.msra.mxu0 0
    %110 = vmatprep.subr.bf16.mxu0 0
    %111 = vmatpush1.bf16.msra.mxu0 0
    %112 = vmatprep.mubr.bf16.mxu0 0
    %113 = vmatmul.mubr.bf16.gmra.mrb[0].mxu0 %v78
    %v114 = vpop.f32.mrb[0].mxu0
    %v115 = vadd.f32 %v63, %v114
    %v116 = vpop.f32.mrb[0].mxu0
    %v117 = vpop.f32.mrb[0].mxu0
    %v118 = vadd.f32 %v63, %v117
    %v119 = vpop.f32.mrb[0].mxu0
    %120 = vdwg.mxu0
    %v121 = vpack.c.bf16 %v115, %v115
    %v122 = vpack.c.bf16 %v118, %v118
    %124 = vrot.lane.b32.xlu0 %v121, 96
    %v125 = vpop.permute.xlu0 %124
    %vm126 = vcmask 64512
    %v128 = vsel %vm126, %v121, 0
    %v131 = vsel %vm126, %v125, 0
    %133 = vmatprep.subr.bf16.mxu0 0
    %134 = vmatpush1.bf16.xpose.msra.mxu0 %v131
    %135 = vmatprep.subr.bf16.mxu0 0
    %136 = vmatpush1.bf16.xpose.msra.mxu0 0
    %137 = vmatprep.subr.bf16.mxu0 0
    %138 = vmatpush1.bf16.xpose.msra.mxu0 0
    %139 = vmatprep.subr.bf16.mxu0 0
    %140 = vmatpush1.bf16.xpose.msra.mxu0 0
    %141 = vmatprep.subr.bf16.mxu0 0
    %142 = vmatpush1.bf16.xpose.msra.mxu0 0
    %143 = vmatprep.subr.bf16.mxu0 0
    %144 = vmatpush1.bf16.xpose.msra.mxu0 0
    %145 = vmatprep.subr.bf16.mxu0 0
    %146 = vmatpush1.bf16.xpose.msra.mxu0 0
    %147 = vmatprep.subr.bf16.mxu0 0
    %148 = vmatpush1.bf16.xpose.msra.mxu0 0
    %149 = vmatprep.subr.bf16.mxu0 0
    %150 = vmatpush1.bf16.xpose.msra.mxu0 0
    %151 = vmatprep.subr.bf16.mxu0 0
    %152 = vmatpush1.bf16.xpose.msra.mxu0 0
    %153 = vmatprep.subr.bf16.mxu0 0
    %154 = vmatpush1.bf16.xpose.msra.mxu0 0
    %155 = vmatprep.subr.bf16.mxu0 0
    %156 = vmatpush1.bf16.xpose.msra.mxu0 0
    %157 = vmatprep.subr.bf16.mxu0 0
    %158 = vmatpush1.bf16.xpose.msra.mxu0 0
    %159 = vmatprep.subr.bf16.mxu0 0
    %160 = vmatpush1.bf16.xpose.msra.mxu0 0
    %161 = vmatprep.subr.bf16.mxu0 0
    %162 = vmatpush1.bf16.xpose.msra.mxu0 0
    %163 = vmatprep.subr.bf16.mxu0 0
    %164 = vmatpush1.bf16.xpose.msra.mxu0 0
    %165 = vmatprep.mubr.bf16.mxu0 0
    %166 = vmatmul.mubr.bf16.gmra.mrb[0].mxu0 %v128
    %v167 = vpop.f32.mrb[0].mxu0
    %v168 = vadd.f32 0.0, %v167
    %v169 = vpop.f32.mrb[0].mxu0
    %v170 = vpop.f32.mrb[0].mxu0
    %v171 = vpop.f32.mrb[0].mxu0
    %172 = vdwg.mxu0
    %174 = vrot.lane.b32.xlu0 %v122, 96
    %v175 = vpop.permute.xlu0 %174
    %v177 = vsel %vm126, %v122, 0
    %v180 = vsel %vm126, %v175, 0
    %182 = vmatprep.subr.bf16.mxu0 0
    %183 = vmatpush1.bf16.xpose.msra.mxu0 %v180
    %184 = vmatprep.subr.bf16.mxu0 0
    %185 = vmatpush1.bf16.xpose.msra.mxu0 0
    %186 = vmatprep.subr.bf16.mxu0 0
    %187 = vmatpush1.bf16.xpose.msra.mxu0 0
    %188 = vmatprep.subr.bf16.mxu0 0
    %189 = vmatpush1.bf16.xpose.msra.mxu0 0
    %190 = vmatprep.subr.bf16.mxu0 0
    %191 = vmatpush1.bf16.xpose.msra.mxu0 0
    %192 = vmatprep.subr.bf16.mxu0 0
    %193 = vmatpush1.bf16.xpose.msra.mxu0 0
    %194 = vmatprep.subr.bf16.mxu0 0
    %195 = vmatpush1.bf16.xpose.msra.mxu0 0
    %196 = vmatprep.subr.bf16.mxu0 0
    %197 = vmatpush1.bf16.xpose.msra.mxu0 0
    %198 = vmatprep.subr.bf16.mxu0 0
    %199 = vmatpush1.bf16.xpose.msra.mxu0 0
    %200 = vmatprep.subr.bf16.mxu0 0
    %201 = vmatpush1.bf16.xpose.msra.mxu0 0
    %202 = vmatprep.subr.bf16.mxu0 0
    %203 = vmatpush1.bf16.xpose.msra.mxu0 0
    %204 = vmatprep.subr.bf16.mxu0 0
    %205 = vmatpush1.bf16.xpose.msra.mxu0 0
    %206 = vmatprep.subr.bf16.mxu0 0
    %207 = vmatpush1.bf16.xpose.msra.mxu0 0
    %208 = vmatprep.subr.bf16.mxu0 0
    %209 = vmatpush1.bf16.xpose.msra.mxu0 0
    %210 = vmatprep.subr.bf16.mxu0 0
    %211 = vmatpush1.bf16.xpose.msra.mxu0 0
    %212 = vmatprep.subr.bf16.mxu0 0
    %213 = vmatpush1.bf16.xpose.msra.mxu0 0
    %214 = vmatprep.mubr.bf16.mxu0 0
    %215 = vmatmul.mubr.bf16.gmra.mrb[0].mxu0 %v177
    %v216 = vpop.f32.mrb[0].mxu0
    %v217 = vadd.f32 0.0, %v216
    %v218 = vpop.f32.mrb[0].mxu0
    %v219 = vpop.f32.mrb[0].mxu0
    %v220 = vpop.f32.mrb[0].mxu0
    %221 = vdwg.mxu0
    %v222 = vmul.f32 %v168, 0.35355338
    %v223 = vmul.f32 %v217, 0.35355338
    %v224 = vsel %vm126, %v222, -inf
    %225 = vmax.xlane.f32.xlu0 %v224
    %v226 = vpop.xlane.xlu0 %225
    %v227 = vsel %vm126, %v223, -inf
    %228 = vmax.xlane.f32.xlu0 %v227
    %v229 = vpop.xlane.xlu0 %228
    %v230 = vsub.f32 %v222, %v226
    %v231 = vsub.f32 %v223, %v229
    %v232 = vmul.f32 %v230, 1.442695
    %v233 = vpow.pop %v232
    %v234 = vmul.f32 %v231, 1.442695
    %v235 = vpow.pop %v234
    %v236 = vsel %vm126, %v233, 0.0
    %237 = vadd.xlane.f32.xlu0 %v236
    %v238 = vpop.xlane.xlu0 %237
    %v239 = vsel %vm126, %v235, 0.0
    %240 = vadd.xlane.f32.xlu0 %v239
    %v241 = vpop.xlane.xlu0 %240
    %v242 = vrcp.pop %v238
    %v243 = vrcp.pop %v241
    %v244 = vmul.f32 %v233, %v242
    %v245 = vmul.f32 %v235, %v243
    %v246 = vpack.c.bf16 %v244, %v244
    %v247 = vpack.c.bf16 %v245, %v245
    %248 = vrot.lane.b32.xlu0 %v121, 64
    %v249 = vpop.permute.xlu0 %248
    %v251 = vsel %vm126, %v246, 0
    %vm253 = vcmask 1043456
    %v255 = vsel %vm253, %v249, 0
    %257 = vmatprep.subr.bf16.mxu0 0
    %258 = vmatpush1.bf16.msra.mxu0 %v255
    %259 = vmatprep.subr.bf16.mxu0 0
    %260 = vmatpush1.bf16.msra.mxu0 0
    %261 = vmatprep.subr.bf16.mxu0 0
    %262 = vmatpush1.bf16.msra.mxu0 0
    %263 = vmatprep.subr.bf16.mxu0 0
    %264 = vmatpush1.bf16.msra.mxu0 0
    %265 = vmatprep.subr.bf16.mxu0 0
    %266 = vmatpush1.bf16.msra.mxu0 0
    %267 = vmatprep.subr.bf16.mxu0 0
    %268 = vmatpush1.bf16.msra.mxu0 0
    %269 = vmatprep.subr.bf16.mxu0 0
    %270 = vmatpush1.bf16.msra.mxu0 0
    %271 = vmatprep.subr.bf16.mxu0 0
    %272 = vmatpush1.bf16.msra.mxu0 0
    %273 = vmatprep.subr.bf16.mxu0 0
    %274 = vmatpush1.bf16.msra.mxu0 0
    %275 = vmatprep.subr.bf16.mxu0 0
    %276 = vmatpush1.bf16.msra.mxu0 0
    %277 = vmatprep.subr.bf16.mxu0 0
    %278 = vmatpush1.bf16.msra.mxu0 0
    %279 = vmatprep.subr.bf16.mxu0 0
    %280 = vmatpush1.bf16.msra.mxu0 0
    %281 = vmatprep.subr.bf16.mxu0 0
    %282 = vmatpush1.bf16.msra.mxu0 0
    %283 = vmatprep.subr.bf16.mxu0 0
    %284 = vmatpush1.bf16.msra.mxu0 0
    %285 = vmatprep.subr.bf16.mxu0 0
    %286 = vmatpush1.bf16.msra.mxu0 0
    %287 = vmatprep.subr.bf16.mxu0 0
    %288 = vmatpush1.bf16.msra.mxu0 0
    %289 = vmatprep.mubr.bf16.mxu0 0
    %290 = vmatmul.mubr.bf16.gmra.mrb[0].mxu0 %v251
    %v291 = vpop.f32.mrb[0].mxu0
    %v292 = vadd.f32 0.0, %v291
    %v293 = vpop.f32.mrb[0].mxu0
    %v294 = vpop.f32.mrb[0].mxu0
    %v295 = vpop.f32.mrb[0].mxu0
    %296 = vdwg.mxu0
    %297 = vrot.lane.b32.xlu0 %v122, 64
    %v298 = vpop.permute.xlu0 %297
    %v300 = vsel %vm126, %v247, 0
    %v303 = vsel %vm253, %v298, 0
    %305 = vmatprep.subr.bf16.mxu0 0
    %306 = vmatpush1.bf16.msra.mxu0 %v303
    %307 = vmatprep.subr.bf16.mxu0 0
    %308 = vmatpush1.bf16.msra.mxu0 0
    %309 = vmatprep.subr.bf16.mxu0 0
    %310 = vmatpush1.bf16.msra.mxu0 0
    %311 = vmatprep.subr.bf16.mxu0 0
    %312 = vmatpush1.bf16.msra.mxu0 0
    %313 = vmatprep.subr.bf16.mxu0 0
    %314 = vmatpush1.bf16.msra.mxu0 0
    %315 = vmatprep.subr.bf16.mxu0 0
    %316 = vmatpush1.bf16.msra.mxu0 0
    %317 = vmatprep.subr.bf16.mxu0 0
    %318 = vmatpush1.bf16.msra.mxu0 0
    %319 = vmatprep.subr.bf16.mxu0 0
    %320 = vmatpush1.bf16.msra.mxu0 0
    %321 = vmatprep.subr.bf16.mxu0 0
    %322 = vmatpush1.bf16.msra.mxu0 0
    %323 = vmatprep.subr.bf16.mxu0 0
    %324 = vmatpush1.bf16.msra.mxu0 0
    %325 = vmatprep.subr.bf16.mxu0 0
    %326 = vmatpush1.bf16.msra.mxu0 0
    %327 = vmatprep.subr.bf16.mxu0 0
    %328 = vmatpush1.bf16.msra.mxu0 0
    %329 = vmatprep.subr.bf16.mxu0 0
    %330 = vmatpush1.bf16.msra.mxu0 0
    %331 = vmatprep.subr.bf16.mxu0 0
    %332 = vmatpush1.bf16.msra.mxu0 0
    %333 = vmatprep.subr.bf16.mxu0 0
    %334 = vmatpush1.bf16.msra.mxu0 0
    %335 = vmatprep.subr.bf16.mxu0 0
    %336 = vmatpush1.bf16.msra.mxu0 0
    %337 = vmatprep.mubr.bf16.mxu0 0
    %338 = vmatmul.mubr.bf16.gmra.mrb[0].mxu0 %v300
    %v339 = vpop.f32.mrb[0].mxu0
    %v340 = vadd.f32 0.0, %v339
    %v341 = vpop.f32.mrb[0].mxu0
    %v342 = vpop.f32.mrb[0].mxu0
    %v343 = vpop.f32.mrb[0].mxu0
    %344 = vdwg.mxu0
    %v345 = vpack.c.bf16 %v340, %v292
    %v346 = vld [vmem:[%s3] sm:$0xf]
    %347 = vrot.lane.b32.xlu0 %v121, 120
    %v348 = vpop.permute.xlu0 %347
    %349 = vrot.lane.b32.xlu0 %v121, 88
    %v350 = vpop.permute.xlu0 %349
    %v352 = vsel %vm126, %v348, 0
    %v355 = vsel %vm126, %v350, 0
    %357 = vmatprep.subr.bf16.mxu0 0
    %358 = vmatpush1.bf16.xpose.msra.mxu0 %v355
    %359 = vmatprep.subr.bf16.mxu0 0
    %360 = vmatpush1.bf16.xpose.msra.mxu0 0
    %361 = vmatprep.subr.bf16.mxu0 0
    %362 = vmatpush1.bf16.xpose.msra.mxu0 0
    %363 = vmatprep.subr.bf16.mxu0 0
    %364 = vmatpush1.bf16.xpose.msra.mxu0 0
    %365 = vmatprep.subr.bf16.mxu0 0
    %366 = vmatpush1.bf16.xpose.msra.mxu0 0
    %367 = vmatprep.subr.bf16.mxu0 0
    %368 = vmatpush1.bf16.xpose.msra.mxu0 0
    %369 = vmatprep.subr.bf16.mxu0 0
    %370 = vmatpush1.bf16.xpose.msra.mxu0 0
    %371 = vmatprep.subr.bf16.mxu0 0
    %372 = vmatpush1.bf16.xpose.msra.mxu0 0
    %373 = vmatprep.subr.bf16.mxu0 0
    %374 = vmatpush1.bf16.xpose.msra.mxu0 0
    %375 = vmatprep.subr.bf16.mxu0 0
    %376 = vmatpush1.bf16.xpose.msra.mxu0 0
    %377 = vmatprep.subr.bf16.mxu0 0
    %378 = vmatpush1.bf16.xpose.msra.mxu0 0
    %379 = vmatprep.subr.bf16.mxu0 0
    %380 = vmatpush1.bf16.xpose.msra.mxu0 0
    %381 = vmatprep.subr.bf16.mxu0 0
    %382 = vmatpush1.bf16.xpose.msra.mxu0 0
    %383 = vmatprep.subr.bf16.mxu0 0
    %384 = vmatpush1.bf16.xpose.msra.mxu0 0
    %385 = vmatprep.subr.bf16.mxu0 0
    %386 = vmatpush1.bf16.xpose.msra.mxu0 0
    %387 = vmatprep.subr.bf16.mxu0 0
    %388 = vmatpush1.bf16.xpose.msra.mxu0 0
    %389 = vmatprep.mubr.bf16.mxu0 0
    %390 = vmatmul.mubr.bf16.gmra.mrb[0].mxu0 %v352
    %v391 = vpop.f32.mrb[0].mxu0
    %v392 = vadd.f32 0.0, %v391
    %v393 = vpop.f32.mrb[0].mxu0
    %v394 = vpop.f32.mrb[0].mxu0
    %v395 = vpop.f32.mrb[0].mxu0
    %396 = vdwg.mxu0
    %397 = vrot.lane.b32.xlu0 %v122, 120
    %v398 = vpop.permute.xlu0 %397
    %399 = vrot.lane.b32.xlu0 %v122, 88
    %v400 = vpop.permute.xlu0 %399
    %v402 = vsel %vm126, %v398, 0
    %v405 = vsel %vm126, %v400, 0
    %407 = vmatprep.subr.bf16.mxu0 0
    %408 = vmatpush1.bf16.xpose.msra.mxu0 %v405
    %409 = vmatprep.subr.bf16.mxu0 0
    %410 = vmatpush1.bf16.xpose.msra.mxu0 0
    %411 = vmatprep.subr.bf16.mxu0 0
    %412 = vmatpush1.bf16.xpose.msra.mxu0 0
    %413 = vmatprep.subr.bf16.mxu0 0
    %414 = vmatpush1.bf16.xpose.msra.mxu0 0
    %415 = vmatprep.subr.bf16.mxu0 0
    %416 = vmatpush1.bf16.xpose.msra.mxu0 0
    %417 = vmatprep.subr.bf16.mxu0 0
    %418 = vmatpush1.bf16.xpose.msra.mxu0 0
    %419 = vmatprep.subr.bf16.mxu0 0
    %420 = vmatpush1.bf16.xpose.msra.mxu0 0
    %421 = vmatprep.subr.bf16.mxu0 0
    %422 = vmatpush1.bf16.xpose.msra.mxu0 0
    %423 = vmatprep.subr.bf16.mxu0 0
    %424 = vmatpush1.bf16.xpose.msra.mxu0 0
    %425 = vmatprep.subr.bf16.mxu0 0
    %426 = vmatpush1.bf16.xpose.msra.mxu0 0
    %427 = vmatprep.subr.bf16.mxu0 0
    %428 = vmatpush1.bf16.xpose.msra.mxu0 0
    %429 = vmatprep.subr.bf16.mxu0 0
    %430 = vmatpush1.bf16.xpose.msra.mxu0 0
    %431 = vmatprep.subr.bf16.mxu0 0
    %432 = vmatpush1.bf16.xpose.msra.mxu0 0
    %433 = vmatprep.subr.bf16.mxu0 0
    %434 = vmatpush1.bf16.xpose.msra.mxu0 0
    %435 = vmatprep.subr.bf16.mxu0 0
    %436 = vmatpush1.bf16.xpose.msra.mxu0 0
    %437 = vmatprep.subr.bf16.mxu0 0
    %438 = vmatpush1.bf16.xpose.msra.mxu0 0
    %439 = vmatprep.mubr.bf16.mxu0 0
    %440 = vmatmul.mubr.bf16.gmra.mrb[0].mxu0 %v402
    %v441 = vpop.f32.mrb[0].mxu0
    %v442 = vadd.f32 0.0, %v441
    %v443 = vpop.f32.mrb[0].mxu0
    %v444 = vpop.f32.mrb[0].mxu0
    %v445 = vpop.f32.mrb[0].mxu0
    %446 = vdwg.mxu0
    %v447 = vmul.f32 %v392, 0.35355338
    %v448 = vmul.f32 %v442, 0.35355338
    %v449 = vsel %vm126, %v447, -inf
    %450 = vmax.xlane.f32.xlu0 %v449
    %v451 = vpop.xlane.xlu0 %450
    %v452 = vsel %vm126, %v448, -inf
    %453 = vmax.xlane.f32.xlu0 %v452
    %v454 = vpop.xlane.xlu0 %453
    %v455 = vsub.f32 %v447, %v451
    %v456 = vsub.f32 %v448, %v454
    %v457 = vmul.f32 %v455, 1.442695
    %v458 = vpow.pop %v457
    %v459 = vmul.f32 %v456, 1.442695
    %v460 = vpow.pop %v459
    %v461 = vsel %vm126, %v458, 0.0
    %462 = vadd.xlane.f32.xlu0 %v461
    %v463 = vpop.xlane.xlu0 %462
    %v464 = vsel %vm126, %v460, 0.0
    %465 = vadd.xlane.f32.xlu0 %v464
    %v466 = vpop.xlane.xlu0 %465
    %v467 = vrcp.pop %v463
    %v468 = vrcp.pop %v466
    %v469 = vmul.f32 %v458, %v467
    %v470 = vmul.f32 %v460, %v468
    %v471 = vpack.c.bf16 %v469, %v469
    %v472 = vpack.c.bf16 %v470, %v470
    %473 = vrot.lane.b32.xlu0 %v121, 56
    %v474 = vpop.permute.xlu0 %473
    %v476 = vsel %vm126, %v471, 0
    %v479 = vsel %vm253, %v474, 0
    %481 = vmatprep.subr.bf16.mxu0 0
    %482 = vmatpush1.bf16.msra.mxu0 %v479
    %483 = vmatprep.subr.bf16.mxu0 0
    %484 = vmatpush1.bf16.msra.mxu0 0
    %485 = vmatprep.subr.bf16.mxu0 0
    %486 = vmatpush1.bf16.msra.mxu0 0
    %487 = vmatprep.subr.bf16.mxu0 0
    %488 = vmatpush1.bf16.msra.mxu0 0
    %489 = vmatprep.subr.bf16.mxu0 0
    %490 = vmatpush1.bf16.msra.mxu0 0
    %491 = vmatprep.subr.bf16.mxu0 0
    %492 = vmatpush1.bf16.msra.mxu0 0
    %493 = vmatprep.subr.bf16.mxu0 0
    %494 = vmatpush1.bf16.msra.mxu0 0
    %495 = vmatprep.subr.bf16.mxu0 0
    %496 = vmatpush1.bf16.msra.mxu0 0
    %497 = vmatprep.subr.bf16.mxu0 0
    %498 = vmatpush1.bf16.msra.mxu0 0
    %499 = vmatprep.subr.bf16.mxu0 0
    %500 = vmatpush1.bf16.msra.mxu0 0
    %501 = vmatprep.subr.bf16.mxu0 0
    %502 = vmatpush1.bf16.msra.mxu0 0
    %503 = vmatprep.subr.bf16.mxu0 0
    %504 = vmatpush1.bf16.msra.mxu0 0
    %505 = vmatprep.subr.bf16.mxu0 0
    %506 = vmatpush1.bf16.msra.mxu0 0
    %507 = vmatprep.subr.bf16.mxu0 0
    %508 = vmatpush1.bf16.msra.mxu0 0
    %509 = vmatprep.subr.bf16.mxu0 0
    %510 = vmatpush1.bf16.msra.mxu0 0
    %511 = vmatprep.subr.bf16.mxu0 0
    %512 = vmatpush1.bf16.msra.mxu0 0
    %513 = vmatprep.mubr.bf16.mxu0 0
    %514 = vmatmul.mubr.bf16.gmra.mrb[0].mxu0 %v476
    %v515 = vpop.f32.mrb[0].mxu0
    %v516 = vadd.f32 0.0, %v515
    %v517 = vpop.f32.mrb[0].mxu0
    %v518 = vpop.f32.mrb[0].mxu0
    %v519 = vpop.f32.mrb[0].mxu0
    %520 = vdwg.mxu0
    %521 = vrot.lane.b32.xlu0 %v122, 56
    %v522 = vpop.permute.xlu0 %521
    %v524 = vsel %vm126, %v472, 0
    %v527 = vsel %vm253, %v522, 0
    %529 = vmatprep.subr.bf16.mxu0 0
    %530 = vmatpush1.bf16.msra.mxu0 %v527
    %531 = vmatprep.subr.bf16.mxu0 0
    %532 = vmatpush1.bf16.msra.mxu0 0
    %533 = vmatprep.subr.bf16.mxu0 0
    %534 = vmatpush1.bf16.msra.mxu0 0
    %535 = vmatprep.subr.bf16.mxu0 0
    %536 = vmatpush1.bf16.msra.mxu0 0
    %537 = vmatprep.subr.bf16.mxu0 0
    %538 = vmatpush1.bf16.msra.mxu0 0
    %539 = vmatprep.subr.bf16.mxu0 0
    %540 = vmatpush1.bf16.msra.mxu0 0
    %541 = vmatprep.subr.bf16.mxu0 0
    %542 = vmatpush1.bf16.msra.mxu0 0
    %543 = vmatprep.subr.bf16.mxu0 0
    %544 = vmatpush1.bf16.msra.mxu0 0
    %545 = vmatprep.subr.bf16.mxu0 0
    %546 = vmatpush1.bf16.msra.mxu0 0
    %547 = vmatprep.subr.bf16.mxu0 0
    %548 = vmatpush1.bf16.msra.mxu0 0
    %549 = vmatprep.subr.bf16.mxu0 0
    %550 = vmatpush1.bf16.msra.mxu0 0
    %551 = vmatprep.subr.bf16.mxu0 0
    %552 = vmatpush1.bf16.msra.mxu0 0
    %553 = vmatprep.subr.bf16.mxu0 0
    %554 = vmatpush1.bf16.msra.mxu0 0
    %555 = vmatprep.subr.bf16.mxu0 0
    %556 = vmatpush1.bf16.msra.mxu0 0
    %557 = vmatprep.subr.bf16.mxu0 0
    %558 = vmatpush1.bf16.msra.mxu0 0
    %559 = vmatprep.subr.bf16.mxu0 0
    %560 = vmatpush1.bf16.msra.mxu0 0
    %561 = vmatprep.mubr.bf16.mxu0 0
    %562 = vmatmul.mubr.bf16.gmra.mrb[0].mxu0 %v524
    %v563 = vpop.f32.mrb[0].mxu0
    %v564 = vadd.f32 0.0, %v563
    %v565 = vpop.f32.mrb[0].mxu0
    %v566 = vpop.f32.mrb[0].mxu0
    %v567 = vpop.f32.mrb[0].mxu0
    %568 = vdwg.mxu0
    %v569 = vpack.c.bf16 %v564, %v516
    %v570 = vld [vmem:[%s3 + $0x4] sm:$0xf]
    %v572 = vsel %vm126, %v569, 0
    %v575 = vsel %vm253, %v570, 0
    %577 = vmatprep.subr.bf16.mxu0 0
    %578 = vmatpush1.bf16.msra.mxu0 %v575
    %579 = vmatprep.subr.bf16.mxu0 0
    %580 = vmatpush1.bf16.msra.mxu0 0
    %581 = vmatprep.subr.bf16.mxu0 0
    %582 = vmatpush1.bf16.msra.mxu0 0
    %583 = vmatprep.subr.bf16.mxu0 0
    %584 = vmatpush1.bf16.msra.mxu0 0
    %585 = vmatprep.subr.bf16.mxu0 0
    %586 = vmatpush1.bf16.msra.mxu0 0
    %587 = vmatprep.subr.bf16.mxu0 0
    %588 = vmatpush1.bf16.msra.mxu0 0
    %589 = vmatprep.subr.bf16.mxu0 0
    %590 = vmatpush1.bf16.msra.mxu0 0
    %591 = vmatprep.subr.bf16.mxu0 0
    %592 = vmatpush1.bf16.msra.mxu0 0
    %593 = vmatprep.subr.bf16.mxu0 0
    %594 = vmatpush1.bf16.msra.mxu0 0
    %595 = vmatprep.subr.bf16.mxu0 0
    %596 = vmatpush1.bf16.msra.mxu0 0
    %597 = vmatprep.subr.bf16.mxu0 0
    %598 = vmatpush1.bf16.msra.mxu0 0
    %599 = vmatprep.subr.bf16.mxu0 0
    %600 = vmatpush1.bf16.msra.mxu0 0
    %601 = vmatprep.subr.bf16.mxu0 0
    %602 = vmatpush1.bf16.msra.mxu0 0
    %603 = vmatprep.subr.bf16.mxu0 0
    %604 = vmatpush1.bf16.msra.mxu0 0
    %605 = vmatprep.subr.bf16.mxu0 0
    %606 = vmatpush1.bf16.msra.mxu0 0
    %607 = vmatprep.subr.bf16.mxu0 0
    %608 = vmatpush1.bf16.msra.mxu0 0
    %609 = vmatprep.mubr.bf16.mxu0 0
    %610 = vmatmul.mubr.bf16.gmra.mrb[0].mxu0 %v572
    %v611 = vpop.f32.mrb[0].mxu0
    %v612 = vadd.f32 0.0, %v611
    %v613 = vpop.f32.mrb[0].mxu0
    %v614 = vpop.f32.mrb[0].mxu0
    %v615 = vadd.f32 0.0, %v614
    %v616 = vpop.f32.mrb[0].mxu0
    %617 = vdwg.mxu0
    %v619 = vsel %vm126, %v345, 0
    %v622 = vsel %vm253, %v346, 0
    %624 = vmatprep.subr.bf16.mxu0 0
    %625 = vmatpush1.bf16.msra.mxu0 %v622
    %626 = vmatprep.subr.bf16.mxu0 0
    %627 = vmatpush1.bf16.msra.mxu0 0
    %628 = vmatprep.subr.bf16.mxu0 0
    %629 = vmatpush1.bf16.msra.mxu0 0
    %630 = vmatprep.subr.bf16.mxu0 0
    %631 = vmatpush1.bf16.msra.mxu0 0
    %632 = vmatprep.subr.bf16.mxu0 0
    %633 = vmatpush1.bf16.msra.mxu0 0
    %634 = vmatprep.subr.bf16.mxu0 0
    %635 = vmatpush1.bf16.msra.mxu0 0
    %636 = vmatprep.subr.bf16.mxu0 0
    %637 = vmatpush1.bf16.msra.mxu0 0
    %638 = vmatprep.subr.bf16.mxu0 0
    %639 = vmatpush1.bf16.msra.mxu0 0
    %640 = vmatprep.subr.bf16.mxu0 0
    %641 = vmatpush1.bf16.msra.mxu0 0
    %642 = vmatprep.subr.bf16.mxu0 0
    %643 = vmatpush1.bf16.msra.mxu0 0
    %644 = vmatprep.subr.bf16.mxu0 0
    %645 = vmatpush1.bf16.msra.mxu0 0
    %646 = vmatprep.subr.bf16.mxu0 0
    %647 = vmatpush1.bf16.msra.mxu0 0
    %648 = vmatprep.subr.bf16.mxu0 0
    %649 = vmatpush1.bf16.msra.mxu0 0
    %650 = vmatprep.subr.bf16.mxu0 0
    %651 = vmatpush1.bf16.msra.mxu0 0
    %652 = vmatprep.subr.bf16.mxu0 0
    %653 = vmatpush1.bf16.msra.mxu0 0
    %654 = vmatprep.subr.bf16.mxu0 0
    %655 = vmatpush1.bf16.msra.mxu0 0
    %656 = vmatprep.mubr.bf16.mxu0 0
    %657 = vmatmul.mubr.bf16.gmra.mrb[0].mxu0 %v619
    %v658 = vpop.f32.mrb[0].mxu0
    %v659 = vadd.f32 %v612, %v658
    %v660 = vpop.f32.mrb[0].mxu0
    %v661 = vpop.f32.mrb[0].mxu0
    %v662 = vadd.f32 %v615, %v661
    %v663 = vpop.f32.mrb[0].mxu0
    %664 = vdwg.mxu0
    %665 = vrot.lane.b32.xlu0 %v121, 112
    %v666 = vpop.permute.xlu0 %665
    %667 = vrot.lane.b32.xlu0 %v121, 80
    %v668 = vpop.permute.xlu0 %667
    %v670 = vsel %vm126, %v666, 0
    %v673 = vsel %vm126, %v668, 0
    %675 = vmatprep.subr.bf16.mxu0 0
    %676 = vmatpush1.bf16.xpose.msra.mxu0 %v673
    %677 = vmatprep.subr.bf16.mxu0 0
    %678 = vmatpush1.bf16.xpose.msra.mxu0 0
    %679 = vmatprep.subr.bf16.mxu0 0
    %680 = vmatpush1.bf16.xpose.msra.mxu0 0
    %681 = vmatprep.subr.bf16.mxu0 0
    %682 = vmatpush1.bf16.xpose.msra.mxu0 0
    %683 = vmatprep.subr.bf16.mxu0 0
    %684 = vmatpush1.bf16.xpose.msra.mxu0 0
    %685 = vmatprep.subr.bf16.mxu0 0
    %686 = vmatpush1.bf16.xpose.msra.mxu0 0
    %687 = vmatprep.subr.bf16.mxu0 0
    %688 = vmatpush1.bf16.xpose.msra.mxu0 0
    %689 = vmatprep.subr.bf16.mxu0 0
    %690 = vmatpush1.bf16.xpose.msra.mxu0 0
    %691 = vmatprep.subr.bf16.mxu0 0
    %692 = vmatpush1.bf16.xpose.msra.mxu0 0
    %693 = vmatprep.subr.bf16.mxu0 0
    %694 = vmatpush1.bf16.xpose.msra.mxu0 0
    %695 = vmatprep.subr.bf16.mxu0 0
    %696 = vmatpush1.bf16.xpose.msra.mxu0 0
    %697 = vmatprep.subr.bf16.mxu0 0
    %698 = vmatpush1.bf16.xpose.msra.mxu0 0
    %699 = vmatprep.subr.bf16.mxu0 0
    %700 = vmatpush1.bf16.xpose.msra.mxu0 0
    %701 = vmatprep.subr.bf16.mxu0 0
    %702 = vmatpush1.bf16.xpose.msra.mxu0 0
    %703 = vmatprep.subr.bf16.mxu0 0
    %704 = vmatpush1.bf16.xpose.msra.mxu0 0
    %705 = vmatprep.subr.bf16.mxu0 0
    %706 = vmatpush1.bf16.xpose.msra.mxu0 0
    %707 = vmatprep.mubr.bf16.mxu0 0
    %708 = vmatmul.mubr.bf16.gmra.mrb[0].mxu0 %v670
    %v709 = vpop.f32.mrb[0].mxu0
    %v710 = vadd.f32 0.0, %v709
    %v711 = vpop.f32.mrb[0].mxu0
    %v712 = vpop.f32.mrb[0].mxu0
    %v713 = vpop.f32.mrb[0].mxu0
    %714 = vdwg.mxu0
    %715 = vrot.lane.b32.xlu0 %v122, 112
    %v716 = vpop.permute.xlu0 %715
    %717 = vrot.lane.b32.xlu0 %v122, 80
    %v718 = vpop.permute.xlu0 %717
    %v720 = vsel %vm126, %v716, 0
    %v723 = vsel %vm126, %v718, 0
    %725 = vmatprep.subr.bf16.mxu0 0
    %726 = vmatpush1.bf16.xpose.msra.mxu0 %v723
    %727 = vmatprep.subr.bf16.mxu0 0
    %728 = vmatpush1.bf16.xpose.msra.mxu0 0
    %729 = vmatprep.subr.bf16.mxu0 0
    %730 = vmatpush1.bf16.xpose.msra.mxu0 0
    %731 = vmatprep.subr.bf16.mxu0 0
    %732 = vmatpush1.bf16.xpose.msra.mxu0 0
    %733 = vmatprep.subr.bf16.mxu0 0
    %734 = vmatpush1.bf16.xpose.msra.mxu0 0
    %735 = vmatprep.subr.bf16.mxu0 0
    %736 = vmatpush1.bf16.xpose.msra.mxu0 0
    %737 = vmatprep.subr.bf16.mxu0 0
    %738 = vmatpush1.bf16.xpose.msra.mxu0 0
    %739 = vmatprep.subr.bf16.mxu0 0
    %740 = vmatpush1.bf16.xpose.msra.mxu0 0
    %741 = vmatprep.subr.bf16.mxu0 0
    %742 = vmatpush1.bf16.xpose.msra.mxu0 0
    %743 = vmatprep.subr.bf16.mxu0 0
    %744 = vmatpush1.bf16.xpose.msra.mxu0 0
    %745 = vmatprep.subr.bf16.mxu0 0
    %746 = vmatpush1.bf16.xpose.msra.mxu0 0
    %747 = vmatprep.subr.bf16.mxu0 0
    %748 = vmatpush1.bf16.xpose.msra.mxu0 0
    %749 = vmatprep.subr.bf16.mxu0 0
    %750 = vmatpush1.bf16.xpose.msra.mxu0 0
    %751 = vmatprep.subr.bf16.mxu0 0
    %752 = vmatpush1.bf16.xpose.msra.mxu0 0
    %753 = vmatprep.subr.bf16.mxu0 0
    %754 = vmatpush1.bf16.xpose.msra.mxu0 0
    %755 = vmatprep.subr.bf16.mxu0 0
    %756 = vmatpush1.bf16.xpose.msra.mxu0 0
    %757 = vmatprep.mubr.bf16.mxu0 0
    %758 = vmatmul.mubr.bf16.gmra.mrb[0].mxu0 %v720
    %v759 = vpop.f32.mrb[0].mxu0
    %v760 = vadd.f32 0.0, %v759
    %v761 = vpop.f32.mrb[0].mxu0
    %v762 = vpop.f32.mrb[0].mxu0
    %v763 = vpop.f32.mrb[0].mxu0
    %764 = vdwg.mxu0
    %v765 = vmul.f32 %v710, 0.35355338
    %v766 = vmul.f32 %v760, 0.35355338
    %v767 = vsel %vm126, %v765, -inf
    %768 = vmax.xlane.f32.xlu0 %v767
    %v769 = vpop.xlane.xlu0 %768
    %v770 = vsel %vm126, %v766, -inf
    %771 = vmax.xlane.f32.xlu0 %v770
    %v772 = vpop.xlane.xlu0 %771
    %v773 = vsub.f32 %v765, %v769
    %v774 = vsub.f32 %v766, %v772
    %v775 = vmul.f32 %v773, 1.442695
    %v776 = vpow.pop %v775
    %v777 = vmul.f32 %v774, 1.442695
    %v778 = vpow.pop %v777
    %v779 = vsel %vm126, %v776, 0.0
    %780 = vadd.xlane.f32.xlu0 %v779
    %v781 = vpop.xlane.xlu0 %780
    %v782 = vsel %vm126, %v778, 0.0
    %783 = vadd.xlane.f32.xlu0 %v782
    %v784 = vpop.xlane.xlu0 %783
    %v785 = vrcp.pop %v781
    %v786 = vrcp.pop %v784
    %v787 = vmul.f32 %v776, %v785
    %v788 = vmul.f32 %v778, %v786
    %v789 = vpack.c.bf16 %v787, %v787
    %v790 = vpack.c.bf16 %v788, %v788
    %791 = vrot.lane.b32.xlu0 %v121, 48
    %v792 = vpop.permute.xlu0 %791
    %v794 = vsel %vm126, %v789, 0
    %v797 = vsel %vm253, %v792, 0
    %799 = vmatprep.subr.bf16.mxu0 0
    %800 = vmatpush1.bf16.msra.mxu0 %v797
    %801 = vmatprep.subr.bf16.mxu0 0
    %802 = vmatpush1.bf16.msra.mxu0 0
    %803 = vmatprep.subr.bf16.mxu0 0
    %804 = vmatpush1.bf16.msra.mxu0 0
    %805 = vmatprep.subr.bf16.mxu0 0
    %806 = vmatpush1.bf16.msra.mxu0 0
    %807 = vmatprep.subr.bf16.mxu0 0
    %808 = vmatpush1.bf16.msra.mxu0 0
    %809 = vmatprep.subr.bf16.mxu0 0
    %810 = vmatpush1.bf16.msra.mxu0 0
    %811 = vmatprep.subr.bf16.mxu0 0
    %812 = vmatpush1.bf16.msra.mxu0 0
    %813 = vmatprep.subr.bf16.mxu0 0
    %814 = vmatpush1.bf16.msra.mxu0 0
    %815 = vmatprep.subr.bf16.mxu0 0
    %816 = vmatpush1.bf16.msra.mxu0 0
    %817 = vmatprep.subr.bf16.mxu0 0
    %818 = vmatpush1.bf16.msra.mxu0 0
    %819 = vmatprep.subr.bf16.mxu0 0
    %820 = vmatpush1.bf16.msra.mxu0 0
    %821 = vmatprep.subr.bf16.mxu0 0
    %822 = vmatpush1.bf16.msra.mxu0 0
    %823 = vmatprep.subr.bf16.mxu0 0
    %824 = vmatpush1.bf16.msra.mxu0 0
    %825 = vmatprep.subr.bf16.mxu0 0
    %826 = vmatpush1.bf16.msra.mxu0 0
    %827 = vmatprep.subr.bf16.mxu0 0
    %828 = vmatpush1.bf16.msra.mxu0 0
    %829 = vmatprep.subr.bf16.mxu0 0
    %830 = vmatpush1.bf16.msra.mxu0 0
    %831 = vmatprep.mubr.bf16.mxu0 0
    %832 = vmatmul.mubr.bf16.gmra.mrb[0].mxu0 %v794
    %v833 = vpop.f32.mrb[0].mxu0
    %v834 = vadd.f32 0.0, %v833
    %v835 = vpop.f32.mrb[0].mxu0
    %v836 = vpop.f32.mrb[0].mxu0
    %v837 = vpop.f32.mrb[0].mxu0
    %838 = vdwg.mxu0
    %839 = vrot.lane.b32.xlu0 %v122, 48
    %v840 = vpop.permute.xlu0 %839
    %v842 = vsel %vm126, %v790, 0
    %v845 = vsel %vm253, %v840, 0
    %847 = vmatprep.subr.bf16.mxu0 0
    %848 = vmatpush1.bf16.msra.mxu0 %v845
    %849 = vmatprep.subr.bf16.mxu0 0
    %850 = vmatpush1.bf16.msra.mxu0 0
    %851 = vmatprep.subr.bf16.mxu0 0
    %852 = vmatpush1.bf16.msra.mxu0 0
    %853 = vmatprep.subr.bf16.mxu0 0
    %854 = vmatpush1.bf16.msra.mxu0 0
    %855 = vmatprep.subr.bf16.mxu0 0
    %856 = vmatpush1.bf16.msra.mxu0 0
    %857 = vmatprep.subr.bf16.mxu0 0
    %858 = vmatpush1.bf16.msra.mxu0 0
    %859 = vmatprep.subr.bf16.mxu0 0
    %860 = vmatpush1.bf16.msra.mxu0 0
    %861 = vmatprep.subr.bf16.mxu0 0
    %862 = vmatpush1.bf16.msra.mxu0 0
    %863 = vmatprep.subr.bf16.mxu0 0
    %864 = vmatpush1.bf16.msra.mxu0 0
    %865 = vmatprep.subr.bf16.mxu0 0
    %866 = vmatpush1.bf16.msra.mxu0 0
    %867 = vmatprep.subr.bf16.mxu0 0
    %868 = vmatpush1.bf16.msra.mxu0 0
    %869 = vmatprep.subr.bf16.mxu0 0
    %870 = vmatpush1.bf16.msra.mxu0 0
    %871 = vmatprep.subr.bf16.mxu0 0
    %872 = vmatpush1.bf16.msra.mxu0 0
    %873 = vmatprep.subr.bf16.mxu0 0
    %874 = vmatpush1.bf16.msra.mxu0 0
    %875 = vmatprep.subr.bf16.mxu0 0
    %876 = vmatpush1.bf16.msra.mxu0 0
    %877 = vmatprep.subr.bf16.mxu0 0
    %878 = vmatpush1.bf16.msra.mxu0 0
    %879 = vmatprep.mubr.bf16.mxu0 0
    %880 = vmatmul.mubr.bf16.gmra.mrb[0].mxu0 %v842
    %v881 = vpop.f32.mrb[0].mxu0
    %v882 = vadd.f32 0.0, %v881
    %v883 = vpop.f32.mrb[0].mxu0
    %v884 = vpop.f32.mrb[0].mxu0
    %v885 = vpop.f32.mrb[0].mxu0
    %886 = vdwg.mxu0
    %v887 = vpack.c.bf16 %v882, %v834
    %v888 = vld [vmem:[%s3 + $0x8] sm:$0xf]
    %v890 = vsel %vm126, %v887, 0
    %v893 = vsel %vm253, %v888, 0
    %895 = vmatprep.subr.bf16.mxu0 0
    %896 = vmatpush1.bf16.msra.mxu0 %v893
    %897 = vmatprep.subr.bf16.mxu0 0
    %898 = vmatpush1.bf16.msra.mxu0 0
    %899 = vmatprep.subr.bf16.mxu0 0
    %900 = vmatpush1.bf16.msra.mxu0 0
    %901 = vmatprep.subr.bf16.mxu0 0
    %902 = vmatpush1.bf16.msra.mxu0 0
    %903 = vmatprep.subr.bf16.mxu0 0
    %904 = vmatpush1.bf16.msra.mxu0 0
    %905 = vmatprep.subr.bf16.mxu0 0
    %906 = vmatpush1.bf16.msra.mxu0 0
    %907 = vmatprep.subr.bf16.mxu0 0
    %908 = vmatpush1.bf16.msra.mxu0 0
    %909 = vmatprep.subr.bf16.mxu0 0
    %910 = vmatpush1.bf16.msra.mxu0 0
    %911 = vmatprep.subr.bf16.mxu0 0
    %912 = vmatpush1.bf16.msra.mxu0 0
    %913 = vmatprep.subr.bf16.mxu0 0
    %914 = vmatpush1.bf16.msra.mxu0 0
    %915 = vmatprep.subr.bf16.mxu0 0
    %916 = vmatpush1.bf16.msra.mxu0 0
    %917 = vmatprep.subr.bf16.mxu0 0
    %918 = vmatpush1.bf16.msra.mxu0 0
    %919 = vmatprep.subr.bf16.mxu0 0
    %920 = vmatpush1.bf16.msra.mxu0 0
    %921 = vmatprep.subr.bf16.mxu0 0
    %922 = vmatpush1.bf16.msra.mxu0 0
    %923 = vmatprep.subr.bf16.mxu0 0
    %924 = vmatpush1.bf16.msra.mxu0 0
    %925 = vmatprep.subr.bf16.mxu0 0
    %926 = vmatpush1.bf16.msra.mxu0 0
    %927 = vmatprep.mubr.bf16.mxu0 0
    %928 = vmatmul.mubr.bf16.gmra.mrb[0].mxu0 %v890
    %v929 = vpop.f32.mrb[0].mxu0
    %v930 = vadd.f32 0.0, %v929
    %v931 = vpop.f32.mrb[0].mxu0
    %v932 = vpop.f32.mrb[0].mxu0
    %v933 = vadd.f32 0.0, %v932
    %v934 = vpop.f32.mrb[0].mxu0
    %935 = vdwg.mxu0
    %v936 = vadd.f32 %v659, %v930
    %v937 = vadd.f32 %v662, %v933
    %938 = vrot.lane.b32.xlu0 %v121, 104
    %v939 = vpop.permute.xlu0 %938
    %940 = vrot.lane.b32.xlu0 %v121, 72
    %v941 = vpop.permute.xlu0 %940
    %v943 = vsel %vm126, %v939, 0
    %v946 = vsel %vm126, %v941, 0
    %948 = vmatprep.subr.bf16.mxu0 0
    %949 = vmatpush1.bf16.xpose.msra.mxu0 %v946
    %950 = vmatprep.subr.bf16.mxu0 0
    %951 = vmatpush1.bf16.xpose.msra.mxu0 0
    %952 = vmatprep.subr.bf16.mxu0 0
    %953 = vmatpush1.bf16.xpose.msra.mxu0 0
    %954 = vmatprep.subr.bf16.mxu0 0
    %955 = vmatpush1.bf16.xpose.msra.mxu0 0
    %956 = vmatprep.subr.bf16.mxu0 0
    %957 = vmatpush1.bf16.xpose.msra.mxu0 0
    %958 = vmatprep.subr.bf16.mxu0 0
    %959 = vmatpush1.bf16.xpose.msra.mxu0 0
    %960 = vmatprep.subr.bf16.mxu0 0
    %961 = vmatpush1.bf16.xpose.msra.mxu0 0
    %962 = vmatprep.subr.bf16.mxu0 0
    %963 = vmatpush1.bf16.xpose.msra.mxu0 0
    %964 = vmatprep.subr.bf16.mxu0 0
    %965 = vmatpush1.bf16.xpose.msra.mxu0 0
    %966 = vmatprep.subr.bf16.mxu0 0
    %967 = vmatpush1.bf16.xpose.msra.mxu0 0
    %968 = vmatprep.subr.bf16.mxu0 0
    %969 = vmatpush1.bf16.xpose.msra.mxu0 0
    %970 = vmatprep.subr.bf16.mxu0 0
    %971 = vmatpush1.bf16.xpose.msra.mxu0 0
    %972 = vmatprep.subr.bf16.mxu0 0
    %973 = vmatpush1.bf16.xpose.msra.mxu0 0
    %974 = vmatprep.subr.bf16.mxu0 0
    %975 = vmatpush1.bf16.xpose.msra.mxu0 0
    %976 = vmatprep.subr.bf16.mxu0 0
    %977 = vmatpush1.bf16.xpose.msra.mxu0 0
    %978 = vmatprep.subr.bf16.mxu0 0
    %979 = vmatpush1.bf16.xpose.msra.mxu0 0
    %980 = vmatprep.mubr.bf16.mxu0 0
    %981 = vmatmul.mubr.bf16.gmra.mrb[0].mxu0 %v943
    %v982 = vpop.f32.mrb[0].mxu0
    %v983 = vadd.f32 0.0, %v982
    %v984 = vpop.f32.mrb[0].mxu0
    %v985 = vpop.f32.mrb[0].mxu0
    %v986 = vpop.f32.mrb[0].mxu0
    %987 = vdwg.mxu0
    %988 = vrot.lane.b32.xlu0 %v122, 104
    %v989 = vpop.permute.xlu0 %988
    %990 = vrot.lane.b32.xlu0 %v122, 72
    %v991 = vpop.permute.xlu0 %990
    %v993 = vsel %vm126, %v989, 0
    %v996 = vsel %vm126, %v991, 0
    %998 = vmatprep.subr.bf16.mxu0 0
    %999 = vmatpush1.bf16.xpose.msra.mxu0 %v996
    %1000 = vmatprep.subr.bf16.mxu0 0
    %1001 = vmatpush1.bf16.xpose.msra.mxu0 0
    %1002 = vmatprep.subr.bf16.mxu0 0
    %1003 = vmatpush1.bf16.xpose.msra.mxu0 0
    %1004 = vmatprep.subr.bf16.mxu0 0
    %1005 = vmatpush1.bf16.xpose.msra.mxu0 0
    %1006 = vmatprep.subr.bf16.mxu0 0
    %1007 = vmatpush1.bf16.xpose.msra.mxu0 0
    %1008 = vmatprep.subr.bf16.mxu0 0
    %1009 = vmatpush1.bf16.xpose.msra.mxu0 0
    %1010 = vmatprep.subr.bf16.mxu0 0
    %1011 = vmatpush1.bf16.xpose.msra.mxu0 0
    %1012 = vmatprep.subr.bf16.mxu0 0
    %1013 = vmatpush1.bf16.xpose.msra.mxu0 0
    %1014 = vmatprep.subr.bf16.mxu0 0
    %1015 = vmatpush1.bf16.xpose.msra.mxu0 0
    %1016 = vmatprep.subr.bf16.mxu0 0
    %1017 = vmatpush1.bf16.xpose.msra.mxu0 0
    %1018 = vmatprep.subr.bf16.mxu0 0
    %1019 = vmatpush1.bf16.xpose.msra.mxu0 0
    %1020 = vmatprep.subr.bf16.mxu0 0
    %1021 = vmatpush1.bf16.xpose.msra.mxu0 0
    %1022 = vmatprep.subr.bf16.mxu0 0
    %1023 = vmatpush1.bf16.xpose.msra.mxu0 0
    %1024 = vmatprep.subr.bf16.mxu0 0
    %1025 = vmatpush1.bf16.xpose.msra.mxu0 0
    %1026 = vmatprep.subr.bf16.mxu0 0
    %1027 = vmatpush1.bf16.xpose.msra.mxu0 0
    %1028 = vmatprep.subr.bf16.mxu0 0
    %1029 = vmatpush1.bf16.xpose.msra.mxu0 0
    %1030 = vmatprep.mubr.bf16.mxu0 0
    %1031 = vmatmul.mubr.bf16.gmra.mrb[0].mxu0 %v993
    %v1032 = vpop.f32.mrb[0].mxu0
    %v1033 = vadd.f32 0.0, %v1032
    %v1034 = vpop.f32.mrb[0].mxu0
    %v1035 = vpop.f32.mrb[0].mxu0
    %v1036 = vpop.f32.mrb[0].mxu0
    %1037 = vdwg.mxu0
    %v1038 = vmul.f32 %v983, 0.35355338
    %v1039 = vmul.f32 %v1033, 0.35355338
    %v1040 = vsel %vm126, %v1038, -inf
    %1041 = vmax.xlane.f32.xlu0 %v1040
    %v1042 = vpop.xlane.xlu0 %1041
    %v1043 = vsel %vm126, %v1039, -inf
    %1044 = vmax.xlane.f32.xlu0 %v1043
    %v1045 = vpop.xlane.xlu0 %1044
    %v1046 = vsub.f32 %v1038, %v1042
    %v1047 = vsub.f32 %v1039, %v1045
    %v1048 = vmul.f32 %v1046, 1.442695
    %v1049 = vpow.pop %v1048
    %v1050 = vmul.f32 %v1047, 1.442695
    %v1051 = vpow.pop %v1050
    %v1052 = vsel %vm126, %v1049, 0.0
    %1053 = vadd.xlane.f32.xlu0 %v1052
    %v1054 = vpop.xlane.xlu0 %1053
    %v1055 = vsel %vm126, %v1051, 0.0
    %1056 = vadd.xlane.f32.xlu0 %v1055
    %v1057 = vpop.xlane.xlu0 %1056
    %v1058 = vrcp.pop %v1054
    %v1059 = vrcp.pop %v1057
    %v1060 = vmul.f32 %v1049, %v1058
    %v1061 = vmul.f32 %v1051, %v1059
    %v1062 = vpack.c.bf16 %v1060, %v1060
    %v1063 = vpack.c.bf16 %v1061, %v1061
    %1064 = vrot.lane.b32.xlu0 %v121, 40
    %v1065 = vpop.permute.xlu0 %1064
    %v1067 = vsel %vm126, %v1062, 0
    %v1070 = vsel %vm253, %v1065, 0
    %1072 = vmatprep.subr.bf16.mxu0 0
    %1073 = vmatpush1.bf16.msra.mxu0 %v1070
    %1074 = vmatprep.subr.bf16.mxu0 0
    %1075 = vmatpush1.bf16.msra.mxu0 0
    %1076 = vmatprep.subr.bf16.mxu0 0
    %1077 = vmatpush1.bf16.msra.mxu0 0
    %1078 = vmatprep.subr.bf16.mxu0 0
    %1079 = vmatpush1.bf16.msra.mxu0 0
    %1080 = vmatprep.subr.bf16.mxu0 0
    %1081 = vmatpush1.bf16.msra.mxu0 0
    %1082 = vmatprep.subr.bf16.mxu0 0
    %1083 = vmatpush1.bf16.msra.mxu0 0
    %1084 = vmatprep.subr.bf16.mxu0 0
    %1085 = vmatpush1.bf16.msra.mxu0 0
    %1086 = vmatprep.subr.bf16.mxu0 0
    %1087 = vmatpush1.bf16.msra.mxu0 0
    %1088 = vmatprep.subr.bf16.mxu0 0
    %1089 = vmatpush1.bf16.msra.mxu0 0
    %1090 = vmatprep.subr.bf16.mxu0 0
    %1091 = vmatpush1.bf16.msra.mxu0 0
    %1092 = vmatprep.subr.bf16.mxu0 0
    %1093 = vmatpush1.bf16.msra.mxu0 0
    %1094 = vmatprep.subr.bf16.mxu0 0
    %1095 = vmatpush1.bf16.msra.mxu0 0
    %1096 = vmatprep.subr.bf16.mxu0 0
    %1097 = vmatpush1.bf16.msra.mxu0 0
    %1098 = vmatprep.subr.bf16.mxu0 0
    %1099 = vmatpush1.bf16.msra.mxu0 0
    %1100 = vmatprep.subr.bf16.mxu0 0
    %1101 = vmatpush1.bf16.msra.mxu0 0
    %1102 = vmatprep.subr.bf16.mxu0 0
    %1103 = vmatpush1.bf16.msra.mxu0 0
    %1104 = vmatprep.mubr.bf16.mxu0 0
    %1105 = vmatmul.mubr.bf16.gmra.mrb[0].mxu0 %v1067
    %v1106 = vpop.f32.mrb[0].mxu0
    %v1107 = vadd.f32 0.0, %v1106
    %v1108 = vpop.f32.mrb[0].mxu0
    %v1109 = vpop.f32.mrb[0].mxu0
    %v1110 = vpop.f32.mrb[0].mxu0
    %1111 = vdwg.mxu0
    %1112 = vrot.lane.b32.xlu0 %v122, 40
    %v1113 = vpop.permute.xlu0 %1112
    %v1115 = vsel %vm126, %v1063, 0
    %v1118 = vsel %vm253, %v1113, 0
    %1120 = vmatprep.subr.bf16.mxu0 0
    %1121 = vmatpush1.bf16.msra.mxu0 %v1118
    %1122 = vmatprep.subr.bf16.mxu0 0
    %1123 = vmatpush1.bf16.msra.mxu0 0
    %1124 = vmatprep.subr.bf16.mxu0 0
    %1125 = vmatpush1.bf16.msra.mxu0 0
    %1126 = vmatprep.subr.bf16.mxu0 0
    %1127 = vmatpush1.bf16.msra.mxu0 0
    %1128 = vmatprep.subr.bf16.mxu0 0
    %1129 = vmatpush1.bf16.msra.mxu0 0
    %1130 = vmatprep.subr.bf16.mxu0 0
    %1131 = vmatpush1.bf16.msra.mxu0 0
    %1132 = vmatprep.subr.bf16.mxu0 0
    %1133 = vmatpush1.bf16.msra.mxu0 0
    %1134 = vmatprep.subr.bf16.mxu0 0
    %1135 = vmatpush1.bf16.msra.mxu0 0
    %1136 = vmatprep.subr.bf16.mxu0 0
    %1137 = vmatpush1.bf16.msra.mxu0 0
    %1138 = vmatprep.subr.bf16.mxu0 0
    %1139 = vmatpush1.bf16.msra.mxu0 0
    %1140 = vmatprep.subr.bf16.mxu0 0
    %1141 = vmatpush1.bf16.msra.mxu0 0
    %1142 = vmatprep.subr.bf16.mxu0 0
    %1143 = vmatpush1.bf16.msra.mxu0 0
    %1144 = vmatprep.subr.bf16.mxu0 0
    %1145 = vmatpush1.bf16.msra.mxu0 0
    %1146 = vmatprep.subr.bf16.mxu0 0
    %1147 = vmatpush1.bf16.msra.mxu0 0
    %1148 = vmatprep.subr.bf16.mxu0 0
    %1149 = vmatpush1.bf16.msra.mxu0 0
    %1150 = vmatprep.subr.bf16.mxu0 0
    %1151 = vmatpush1.bf16.msra.mxu0 0
    %1152 = vmatprep.mubr.bf16.mxu0 0
    %1153 = vmatmul.mubr.bf16.gmra.mrb[0].mxu0 %v1115
    %v1154 = vpop.f32.mrb[0].mxu0
    %v1155 = vadd.f32 0.0, %v1154
    %v1156 = vpop.f32.mrb[0].mxu0
    %v1157 = vpop.f32.mrb[0].mxu0
    %v1158 = vpop.f32.mrb[0].mxu0
    %1159 = vdwg.mxu0
    %v1160 = vpack.c.bf16 %v1155, %v1107
    %v1161 = vld [vmem:[%s3 + $0xc] sm:$0xf]
    %v1163 = vsel %vm126, %v1160, 0
    %v1166 = vsel %vm253, %v1161, 0
    %1168 = vmatprep.subr.bf16.mxu0 0
    %1169 = vmatpush1.bf16.msra.mxu0 %v1166
    %1170 = vmatprep.subr.bf16.mxu0 0
    %1171 = vmatpush1.bf16.msra.mxu0 0
    %1172 = vmatprep.subr.bf16.mxu0 0
    %1173 = vmatpush1.bf16.msra.mxu0 0
    %1174 = vmatprep.subr.bf16.mxu0 0
    %1175 = vmatpush1.bf16.msra.mxu0 0
    %1176 = vmatprep.subr.bf16.mxu0 0
    %1177 = vmatpush1.bf16.msra.mxu0 0
    %1178 = vmatprep.subr.bf16.mxu0 0
    %1179 = vmatpush1.bf16.msra.mxu0 0
    %1180 = vmatprep.subr.bf16.mxu0 0
    %1181 = vmatpush1.bf16.msra.mxu0 0
    %1182 = vmatprep.subr.bf16.mxu0 0
    %1183 = vmatpush1.bf16.msra.mxu0 0
    %1184 = vmatprep.subr.bf16.mxu0 0
    %1185 = vmatpush1.bf16.msra.mxu0 0
    %1186 = vmatprep.subr.bf16.mxu0 0
    %1187 = vmatpush1.bf16.msra.mxu0 0
    %1188 = vmatprep.subr.bf16.mxu0 0
    %1189 = vmatpush1.bf16.msra.mxu0 0
    %1190 = vmatprep.subr.bf16.mxu0 0
    %1191 = vmatpush1.bf16.msra.mxu0 0
    %1192 = vmatprep.subr.bf16.mxu0 0
    %1193 = vmatpush1.bf16.msra.mxu0 0
    %1194 = vmatprep.subr.bf16.mxu0 0
    %1195 = vmatpush1.bf16.msra.mxu0 0
    %1196 = vmatprep.subr.bf16.mxu0 0
    %1197 = vmatpush1.bf16.msra.mxu0 0
    %1198 = vmatprep.subr.bf16.mxu0 0
    %1199 = vmatpush1.bf16.msra.mxu0 0
    %1200 = vmatprep.mubr.bf16.mxu0 0
    %1201 = vmatmul.mubr.bf16.gmra.mrb[0].mxu0 %v1163
    %v1202 = vpop.f32.mrb[0].mxu0
    %v1203 = vadd.f32 0.0, %v1202
    %v1204 = vpop.f32.mrb[0].mxu0
    %v1205 = vpop.f32.mrb[0].mxu0
    %v1206 = vadd.f32 0.0, %v1205
    %v1207 = vpop.f32.mrb[0].mxu0
    %1208 = vdwg.mxu0
    %v1209 = vadd.f32 %v936, %v1203
    %v1210 = vadd.f32 %v937, %v1206
    %v1211 = vld [vmem:[%s4] sm:$0x1]
    %v1212 = vlaneseq
    %v1213 = vshrl.u32 %v1212, 7
    %v1214 = vsub.s32 0, %v1213
    %v1215 = vrot.slane %v1211, %v1214
    %v1216 = vadd.f32 %v1209, %v1215
    %v1217 = vadd.f32 %v1210, %v1215
    %v1218 = vadd.f32 %v52, %v1216
    %v1219 = vadd.f32 %v53, %v1217
    %v1220 = vld [vmem:[%s5] sm:$0x1]
    %v1221 = vld [vmem:[%s6] sm:$0x1]
    %v1222 = vsel %vm76, %v1218, 0.0
    %1223 = vadd.xlane.f32.xlu0 %v1222
    %v1224 = vpop.xlane.xlu0 %1223
    %v1225 = vsel %vm76, %v1219, 0.0
    %1226 = vadd.xlane.f32.xlu0 %v1225
    %v1227 = vpop.xlane.xlu0 %1226
    %v1228 = vrcp.pop 32.0
    %v1229 = vmul.f32 %v1224, %v1228
    %v1230 = vmul.f32 %v1227, %v1228
    %v1231 = vsub.f32 %v1218, %v1229
    %v1232 = vsub.f32 %v1219, %v1230
    %v1233 = vmul.f32 %v1231, %v1231
    %v1234 = vmul.f32 %v1232, %v1232
    %v1235 = vsel %vm76, %v1233, 0.0
    %1236 = vadd.xlane.f32.xlu0 %v1235
    %v1237 = vpop.xlane.xlu0 %1236
    %v1238 = vsel %vm76, %v1234, 0.0
    %1239 = vadd.xlane.f32.xlu0 %v1238
    %v1240 = vpop.xlane.xlu0 %1239
    %v1241 = vmul.f32 %v1237, %v1228
    %v1242 = vmul.f32 %v1240, %v1228
    %v1243 = vadd.f32 %v1241, 1e-05
    %v1244 = vadd.f32 %v1242, 1e-05
    %v1245 = vrsqrt.pop %v1243
    %v1246 = vrsqrt.pop %v1244
    %v1247 = vmul.f32 %v1231, %v1245
    %v1248 = vmul.f32 %v1232, %v1246
    %v1249 = vlaneseq
    %v1250 = vshrl.u32 %v1249, 7
    %v1251 = vsub.s32 0, %v1250
    %v1252 = vrot.slane %v1220, %v1251
    %v1253 = vmul.f32 %v1247, %v1252
    %v1254 = vmul.f32 %v1248, %v1252
    %v1255 = vlaneseq
    %v1256 = vshrl.u32 %v1255, 7
    %v1257 = vsub.s32 0, %v1256
    %v1258 = vrot.slane %v1221, %v1257
    %v1259 = vadd.f32 %v1253, %v1258
    %v1260 = vadd.f32 %v1254, %v1258
    %v1261 = vpack.c.bf16 %v1260, %v1259
    %v1262 = vld [vmem:[%s7] sm:$0xf]
    %v1263 = vld [vmem:[%s7 + $0x4] sm:$0xf]
    %v1264 = vld [vmem:[%s7 + $0x8] sm:$0xf]
    %v1265 = vld [vmem:[%s7 + $0xc] sm:$0xf]
    %v1266 = vld [vmem:[%s8] sm:$0x1]
    %v1267 = vlaneseq
    %v1268 = vshrl.u32 %v1267, 7
    %v1269 = vsub.s32 0, %v1268
    %v1270 = vrot.slane %v1266, %v1269
    %v1275 = vunpack.c.l.b16 %v1262
    %v1276 = vunpack.c.l.b16 %v1263
    %v1277 = vunpack.c.l.b16 %v1264
    %v1278 = vunpack.c.l.b16 %v1265
    %v1279 = vpack.c.b16 %v1276, %v1275
    %v1280 = vpack.c.b16 %v1278, %v1277
    %v1284 = vsel %vm76, %v1261, 0
    %1286 = vmatprep.subr.bf16.mxu0 0
    %1287 = vmatpush1.bf16.msra.mxu0 %v1279
    %1288 = vmatprep.subr.bf16.mxu0 0
    %1289 = vmatpush1.bf16.msra.mxu0 %v1280
    %1290 = vmatprep.subr.bf16.mxu0 0
    %1291 = vmatpush1.bf16.msra.mxu0 0
    %1292 = vmatprep.subr.bf16.mxu0 0
    %1293 = vmatpush1.bf16.msra.mxu0 0
    %1294 = vmatprep.subr.bf16.mxu0 0
    %1295 = vmatpush1.bf16.msra.mxu0 0
    %1296 = vmatprep.subr.bf16.mxu0 0
    %1297 = vmatpush1.bf16.msra.mxu0 0
    %1298 = vmatprep.subr.bf16.mxu0 0
    %1299 = vmatpush1.bf16.msra.mxu0 0
    %1300 = vmatprep.subr.bf16.mxu0 0
    %1301 = vmatpush1.bf16.msra.mxu0 0
    %1302 = vmatprep.subr.bf16.mxu0 0
    %1303 = vmatpush1.bf16.msra.mxu0 0
    %1304 = vmatprep.subr.bf16.mxu0 0
    %1305 = vmatpush1.bf16.msra.mxu0 0
    %1306 = vmatprep.subr.bf16.mxu0 0
    %1307 = vmatpush1.bf16.msra.mxu0 0
    %1308 = vmatprep.subr.bf16.mxu0 0
    %1309 = vmatpush1.bf16.msra.mxu0 0
    %1310 = vmatprep.subr.bf16.mxu0 0
    %1311 = vmatpush1.bf16.msra.mxu0 0
    %1312 = vmatprep.subr.bf16.mxu0 0
    %1313 = vmatpush1.bf16.msra.mxu0 0
    %1314 = vmatprep.subr.bf16.mxu0 0
    %1315 = vmatpush1.bf16.msra.mxu0 0
    %1316 = vmatprep.subr.bf16.mxu0 0
    %1317 = vmatpush1.bf16.msra.mxu0 0
    %1318 = vmatprep.mubr.bf16.mxu0 0
    %1319 = vmatmul.mubr.bf16.gmra.mrb[0].mxu0 %v1284
    %v1320 = vpop.f32.mrb[0].mxu0
    %v1321 = vadd.f32 %v1270, %v1320
    %v1322 = vpop.f32.mrb[0].mxu0
    %v1323 = vpop.f32.mrb[0].mxu0
    %v1324 = vadd.f32 %v1270, %v1323
    %v1325 = vpop.f32.mrb[0].mxu0
    %1326 = vdwg.mxu0
    %v1327 = vmax.f32 %v1321, 0.0
    %v1328 = vmax.f32 %v1324, 0.0
    %v1329 = vpack.c.bf16 %v1328, %v1327
    %v1330 = vld [vmem:[%s9] sm:$0xf]
    %v1331 = vld [vmem:[%s9 + $0x4] sm:$0xf]
    %v1332 = vld [vmem:[%s9 + $0x8] sm:$0xf]
    %v1333 = vld [vmem:[%s9 + $0xc] sm:$0xf]
    %v1334 = vld [vmem:[%s9 + $0x10] sm:$0xf]
    %v1335 = vld [vmem:[%s9 + $0x14] sm:$0xf]
    %v1336 = vld [vmem:[%s9 + $0x18] sm:$0xf]
    %v1337 = vld [vmem:[%s9 + $0x1c] sm:$0xf]
    %v1338 = vld [vmem:[%s9 + $0x20] sm:$0xf]
    %v1339 = vld [vmem:[%s9 + $0x24] sm:$0xf]
    %v1340 = vld [vmem:[%s9 + $0x28] sm:$0xf]
    %v1341 = vld [vmem:[%s9 + $0x2c] sm:$0xf]
    %v1342 = vld [vmem:[%s9 + $0x30] sm:$0xf]
    %v1343 = vld [vmem:[%s9 + $0x34] sm:$0xf]
    %v1344 = vld [vmem:[%s9 + $0x38] sm:$0xf]
    %v1345 = vld [vmem:[%s9 + $0x3c] sm:$0xf]
    %v1346 = vld [vmem:[%s10] sm:$0x1]
    %v1347 = vlaneseq
    %v1348 = vshrl.u32 %v1347, 7
    %v1349 = vsub.s32 0, %v1348
    %v1350 = vrot.slane %v1346, %v1349
    %v1367 = vunpack.c.l.b16 %v1330
    %v1368 = vunpack.c.l.b16 %v1331
    %v1369 = vunpack.c.l.b16 %v1332
    %v1370 = vunpack.c.l.b16 %v1333
    %v1371 = vunpack.c.l.b16 %v1334
    %v1372 = vunpack.c.l.b16 %v1335
    %v1373 = vunpack.c.l.b16 %v1336
    %v1374 = vunpack.c.l.b16 %v1337
    %v1375 = vunpack.c.l.b16 %v1338
    %v1376 = vunpack.c.l.b16 %v1339
    %v1377 = vunpack.c.l.b16 %v1340
    %v1378 = vunpack.c.l.b16 %v1341
    %v1379 = vunpack.c.l.b16 %v1342
    %v1380 = vunpack.c.l.b16 %v1343
    %v1381 = vunpack.c.l.b16 %v1344
    %v1382 = vunpack.c.l.b16 %v1345
    %v1383 = vpack.c.b16 %v1368, %v1367
    %v1384 = vpack.c.b16 %v1370, %v1369
    %v1385 = vpack.c.b16 %v1372, %v1371
    %v1386 = vpack.c.b16 %v1374, %v1373
    %v1387 = vpack.c.b16 %v1376, %v1375
    %v1388 = vpack.c.b16 %v1378, %v1377
    %v1389 = vpack.c.b16 %v1380, %v1379
    %v1390 = vpack.c.b16 %v1382, %v1381
    %1399 = vmatprep.subr.bf16.mxu0 0
    %1400 = vmatpush1.bf16.msra.mxu0 %v1383
    %1401 = vmatprep.subr.bf16.mxu0 0
    %1402 = vmatpush1.bf16.msra.mxu0 %v1384
    %1403 = vmatprep.subr.bf16.mxu0 0
    %1404 = vmatpush1.bf16.msra.mxu0 %v1385
    %1405 = vmatprep.subr.bf16.mxu0 0
    %1406 = vmatpush1.bf16.msra.mxu0 %v1386
    %1407 = vmatprep.subr.bf16.mxu0 0
    %1408 = vmatpush1.bf16.msra.mxu0 %v1387
    %1409 = vmatprep.subr.bf16.mxu0 0
    %1410 = vmatpush1.bf16.msra.mxu0 %v1388
    %1411 = vmatprep.subr.bf16.mxu0 0
    %1412 = vmatpush1.bf16.msra.mxu0 %v1389
    %1413 = vmatprep.subr.bf16.mxu0 0
    %1414 = vmatpush1.bf16.msra.mxu0 %v1390
    %1415 = vmatprep.subr.bf16.mxu0 0
    %1416 = vmatpush1.bf16.msra.mxu0 0
    %1417 = vmatprep.subr.bf16.mxu0 0
    %1418 = vmatpush1.bf16.msra.mxu0 0
    %1419 = vmatprep.subr.bf16.mxu0 0
    %1420 = vmatpush1.bf16.msra.mxu0 0
    %1421 = vmatprep.subr.bf16.mxu0 0
    %1422 = vmatpush1.bf16.msra.mxu0 0
    %1423 = vmatprep.subr.bf16.mxu0 0
    %1424 = vmatpush1.bf16.msra.mxu0 0
    %1425 = vmatprep.subr.bf16.mxu0 0
    %1426 = vmatpush1.bf16.msra.mxu0 0
    %1427 = vmatprep.subr.bf16.mxu0 0
    %1428 = vmatpush1.bf16.msra.mxu0 0
    %1429 = vmatprep.subr.bf16.mxu0 0
    %1430 = vmatpush1.bf16.msra.mxu0 0
    %1431 = vmatprep.mubr.bf16.mxu0 0
    %1432 = vmatmul.mubr.bf16.gmra.mrb[0].mxu0 %v1329
    %v1433 = vpop.f32.mrb[0].mxu0
    %v1434 = vadd.f32 %v1350, %v1433
    %v1435 = vpop.f32.mrb[0].mxu0
    %v1436 = vpop.f32.mrb[0].mxu0
    %v1437 = vadd.f32 %v1350, %v1436
    %v1438 = vpop.f32.mrb[0].mxu0
    %1439 = vdwg.mxu0
    %v1440 = vadd.f32 %v1259, %v1434
    %v1441 = vadd.f32 %v1260, %v1437
    %v1442 = vld [vmem:[%s11] sm:$0x1]
    %v1443 = vld [vmem:[%s12] sm:$0x1]
    %v1444 = vsel %vm76, %v1440, 0.0
    %1445 = vadd.xlane.f32.xlu0 %v1444
    %v1446 = vpop.xlane.xlu0 %1445
    %v1447 = vsel %vm76, %v1441, 0.0
    %1448 = vadd.xlane.f32.xlu0 %v1447
    %v1449 = vpop.xlane.xlu0 %1448
    %v1450 = vmul.f32 %v1446, %v1228
    %v1451 = vmul.f32 %v1449, %v1228
    %v1452 = vsub.f32 %v1440, %v1450
    %v1453 = vsub.f32 %v1441, %v1451
    %v1454 = vmul.f32 %v1452, %v1452
    %v1455 = vmul.f32 %v1453, %v1453
    %v1456 = vsel %vm76, %v1454, 0.0
    %1457 = vadd.xlane.f32.xlu0 %v1456
    %v1458 = vpop.xlane.xlu0 %1457
    %v1459 = vsel %vm76, %v1455, 0.0
    %1460 = vadd.xlane.f32.xlu0 %v1459
    %v1461 = vpop.xlane.xlu0 %1460
    %v1462 = vmul.f32 %v1458, %v1228
    %v1463 = vmul.f32 %v1461, %v1228
    %v1464 = vadd.f32 %v1462, 1e-05
    %v1465 = vadd.f32 %v1463, 1e-05
    %v1466 = vrsqrt.pop %v1464
    %v1467 = vrsqrt.pop %v1465
    %v1468 = vmul.f32 %v1452, %v1466
    %v1469 = vmul.f32 %v1453, %v1467
    %v1470 = vlaneseq
    %v1471 = vshrl.u32 %v1470, 7
    %v1472 = vsub.s32 0, %v1471
    %v1473 = vrot.slane %v1442, %v1472
    %v1474 = vmul.f32 %v1468, %v1473
    %v1475 = vmul.f32 %v1469, %v1473
    %v1476 = vlaneseq
    %v1477 = vshrl.u32 %v1476, 7
    %v1478 = vsub.s32 0, %v1477
    %v1479 = vrot.slane %v1443, %v1478
    %v1480 = vadd.f32 %v1474, %v1479
    %v1481 = vadd.f32 %v1475, %v1479
    %v1482 = vpack.c.bf16 %v1481, %v1480
    %s1483 = scalar_lea.vmem %s1, 16
    %v1484 = vld [vmem:[%s1483] sm:$0xf]
    %v1485 = vld [vmem:[%s1483 + $0x4] sm:$0xf]
    %v1486 = vld [vmem:[%s1483 + $0x8] sm:$0xf]
    %v1487 = vld [vmem:[%s1483 + $0xc] sm:$0xf]
    %v1488 = vld [vmem:[%s2 + $0x1] sm:$0x1]
    %v1489 = vlaneseq
    %v1490 = vshrl.u32 %v1489, 7
    %v1491 = vsub.s32 0, %v1490
    %v1492 = vrot.slane %v1488, %v1491
    %v1497 = vunpack.c.l.b16 %v1484
    %v1498 = vunpack.c.l.b16 %v1485
    %v1499 = vunpack.c.l.b16 %v1486
    %v1500 = vunpack.c.l.b16 %v1487
    %v1501 = vpack.c.b16 %v1498, %v1497
    %v1502 = vpack.c.b16 %v1500, %v1499
    %v1506 = vsel %vm76, %v1482, 0
    %1508 = vmatprep.subr.bf16.mxu0 0
    %1509 = vmatpush1.bf16.msra.mxu0 %v1501
    %1510 = vmatprep.subr.bf16.mxu0 0
    %1511 = vmatpush1.bf16.msra.mxu0 %v1502
    %1512 = vmatprep.subr.bf16.mxu0 0
    %1513 = vmatpush1.bf16.msra.mxu0 0
    %1514 = vmatprep.subr.bf16.mxu0 0
    %1515 = vmatpush1.bf16.msra.mxu0 0
    %1516 = vmatprep.subr.bf16.mxu0 0
    %1517 = vmatpush1.bf16.msra.mxu0 0
    %1518 = vmatprep.subr.bf16.mxu0 0
    %1519 = vmatpush1.bf16.msra.mxu0 0
    %1520 = vmatprep.subr.bf16.mxu0 0
    %1521 = vmatpush1.bf16.msra.mxu0 0
    %1522 = vmatprep.subr.bf16.mxu0 0
    %1523 = vmatpush1.bf16.msra.mxu0 0
    %1524 = vmatprep.subr.bf16.mxu0 0
    %1525 = vmatpush1.bf16.msra.mxu0 0
    %1526 = vmatprep.subr.bf16.mxu0 0
    %1527 = vmatpush1.bf16.msra.mxu0 0
    %1528 = vmatprep.subr.bf16.mxu0 0
    %1529 = vmatpush1.bf16.msra.mxu0 0
    %1530 = vmatprep.subr.bf16.mxu0 0
    %1531 = vmatpush1.bf16.msra.mxu0 0
    %1532 = vmatprep.subr.bf16.mxu0 0
    %1533 = vmatpush1.bf16.msra.mxu0 0
    %1534 = vmatprep.subr.bf16.mxu0 0
    %1535 = vmatpush1.bf16.msra.mxu0 0
    %1536 = vmatprep.subr.bf16.mxu0 0
    %1537 = vmatpush1.bf16.msra.mxu0 0
    %1538 = vmatprep.subr.bf16.mxu0 0
    %1539 = vmatpush1.bf16.msra.mxu0 0
    %1540 = vmatprep.mubr.bf16.mxu0 0
    %1541 = vmatmul.mubr.bf16.gmra.mrb[0].mxu0 %v1506
    %v1542 = vpop.f32.mrb[0].mxu0
    %v1543 = vadd.f32 %v1492, %v1542
    %v1544 = vpop.f32.mrb[0].mxu0
    %v1545 = vpop.f32.mrb[0].mxu0
    %v1546 = vadd.f32 %v1492, %v1545
    %v1547 = vpop.f32.mrb[0].mxu0
    %1548 = vdwg.mxu0
    %v1549 = vpack.c.bf16 %v1543, %v1543
    %v1550 = vpack.c.bf16 %v1546, %v1546
    %1552 = vrot.lane.b32.xlu0 %v1549, 96
    %v1553 = vpop.permute.xlu0 %1552
    %v1555 = vsel %vm126, %v1549, 0
    %v1558 = vsel %vm126, %v1553, 0
    %1560 = vmatprep.subr.bf16.mxu0 0
    %1561 = vmatpush1.bf16.xpose.msra.mxu0 %v1558
    %1562 = vmatprep.subr.bf16.mxu0 0
    %1563 = vmatpush1.bf16.xpose.msra.mxu0 0
    %1564 = vmatprep.subr.bf16.mxu0 0
    %1565 = vmatpush1.bf16.xpose.msra.mxu0 0
    %1566 = vmatprep.subr.bf16.mxu0 0
    %1567 = vmatpush1.bf16.xpose.msra.mxu0 0
    %1568 = vmatprep.subr.bf16.mxu0 0
    %1569 = vmatpush1.bf16.xpose.msra.mxu0 0
    %1570 = vmatprep.subr.bf16.mxu0 0
    %1571 = vmatpush1.bf16.xpose.msra.mxu0 0
    %1572 = vmatprep.subr.bf16.mxu0 0
    %1573 = vmatpush1.bf16.xpose.msra.mxu0 0
    %1574 = vmatprep.subr.bf16.mxu0 0
    %1575 = vmatpush1.bf16.xpose.msra.mxu0 0
    %1576 = vmatprep.subr.bf16.mxu0 0
    %1577 = vmatpush1.bf16.xpose.msra.mxu0 0
    %1578 = vmatprep.subr.bf16.mxu0 0
    %1579 = vmatpush1.bf16.xpose.msra.mxu0 0
    %1580 = vmatprep.subr.bf16.mxu0 0
    %1581 = vmatpush1.bf16.xpose.msra.mxu0 0
    %1582 = vmatprep.subr.bf16.mxu0 0
    %1583 = vmatpush1.bf16.xpose.msra.mxu0 0
    %1584 = vmatprep.subr.bf16.mxu0 0
    %1585 = vmatpush1.bf16.xpose.msra.mxu0 0
    %1586 = vmatprep.subr.bf16.mxu0 0
    %1587 = vmatpush1.bf16.xpose.msra.mxu0 0
    %1588 = vmatprep.subr.bf16.mxu0 0
    %1589 = vmatpush1.bf16.xpose.msra.mxu0 0
    %1590 = vmatprep.subr.bf16.mxu0 0
    %1591 = vmatpush1.bf16.xpose.msra.mxu0 0
    %1592 = vmatprep.mubr.bf16.mxu0 0
    %1593 = vmatmul.mubr.bf16.gmra.mrb[0].mxu0 %v1555
    %v1594 = vpop.f32.mrb[0].mxu0
    %v1595 = vadd.f32 0.0, %v1594
    %v1596 = vpop.f32.mrb[0].mxu0
    %v1597 = vpop.f32.mrb[0].mxu0
    %v1598 = vpop.f32.mrb[0].mxu0
    %1599 = vdwg.mxu0
    %1601 = vrot.lane.b32.xlu0 %v1550, 96
    %v1602 = vpop.permute.xlu0 %1601
    %v1604 = vsel %vm126, %v1550, 0
    %v1607 = vsel %vm126, %v1602, 0
    %1609 = vmatprep.subr.bf16.mxu0 0
    %1610 = vmatpush1.bf16.xpose.msra.mxu0 %v1607
    %1611 = vmatprep.subr.bf16.mxu0 0
    %1612 = vmatpush1.bf16.xpose.msra.mxu0 0
    %1613 = vmatprep.subr.bf16.mxu0 0
    %1614 = vmatpush1.bf16.xpose.msra.mxu0 0
    %1615 = vmatprep.subr.bf16.mxu0 0
    %1616 = vmatpush1.bf16.xpose.msra.mxu0 0
    %1617 = vmatprep.subr.bf16.mxu0 0
    %1618 = vmatpush1.bf16.xpose.msra.mxu0 0
    %1619 = vmatprep.subr.bf16.mxu0 0
    %1620 = vmatpush1.bf16.xpose.msra.mxu0 0
    %1621 = vmatprep.subr.bf16.mxu0 0
    %1622 = vmatpush1.bf16.xpose.msra.mxu0 0
    %1623 = vmatprep.subr.bf16.mxu0 0
    %1624 = vmatpush1.bf16.xpose.msra.mxu0 0
    %1625 = vmatprep.subr.bf16.mxu0 0
    %1626 = vmatpush1.bf16.xpose.msra.mxu0 0
    %1627 = vmatprep.subr.bf16.mxu0 0
    %1628 = vmatpush1.bf16.xpose.msra.mxu0 0
    %1629 = vmatprep.subr.bf16.mxu0 0
    %1630 = vmatpush1.bf16.xpose.msra.mxu0 0
    %1631 = vmatprep.subr.bf16.mxu0 0
    %1632 = vmatpush1.bf16.xpose.msra.mxu0 0
    %1633 = vmatprep.subr.bf16.mxu0 0
    %1634 = vmatpush1.bf16.xpose.msra.mxu0 0
    %1635 = vmatprep.subr.bf16.mxu0 0
    %1636 = vmatpush1.bf16.xpose.msra.mxu0 0
    %1637 = vmatprep.subr.bf16.mxu0 0
    %1638 = vmatpush1.bf16.xpose.msra.mxu0 0
    %1639 = vmatprep.subr.bf16.mxu0 0
    %1640 = vmatpush1.bf16.xpose.msra.mxu0 0
    %1641 = vmatprep.mubr.bf16.mxu0 0
    %1642 = vmatmul.mubr.bf16.gmra.mrb[0].mxu0 %v1604
    %v1643 = vpop.f32.mrb[0].mxu0
    %v1644 = vadd.f32 0.0, %v1643
    %v1645 = vpop.f32.mrb[0].mxu0
    %v1646 = vpop.f32.mrb[0].mxu0
    %v1647 = vpop.f32.mrb[0].mxu0
    %1648 = vdwg.mxu0
    %v1649 = vmul.f32 %v1595, 0.35355338
    %v1650 = vmul.f32 %v1644, 0.35355338
    %v1651 = vsel %vm126, %v1649, -inf
    %1652 = vmax.xlane.f32.xlu0 %v1651
    %v1653 = vpop.xlane.xlu0 %1652
    %v1654 = vsel %vm126, %v1650, -inf
    %1655 = vmax.xlane.f32.xlu0 %v1654
    %v1656 = vpop.xlane.xlu0 %1655
    %v1657 = vsub.f32 %v1649, %v1653
    %v1658 = vsub.f32 %v1650, %v1656
    %v1659 = vmul.f32 %v1657, 1.442695
    %v1660 = vpow.pop %v1659
    %v1661 = vmul.f32 %v1658, 1.442695
    %v1662 = vpow.pop %v1661
    %v1663 = vsel %vm126, %v1660, 0.0
    %1664 = vadd.xlane.f32.xlu0 %v1663
    %v1665 = vpop.xlane.xlu0 %1664
    %v1666 = vsel %vm126, %v1662, 0.0
    %1667 = vadd.xlane.f32.xlu0 %v1666
    %v1668 = vpop.xlane.xlu0 %1667
    %v1669 = vrcp.pop %v1665
    %v1670 = vrcp.pop %v1668
    %v1671 = vmul.f32 %v1660, %v1669
    %v1672 = vmul.f32 %v1662, %v1670
    %v1673 = vpack.c.bf16 %v1671, %v1671
    %v1674 = vpack.c.bf16 %v1672, %v1672
    %1675 = vrot.lane.b32.xlu0 %v1549, 64
    %v1676 = vpop.permute.xlu0 %1675
    %v1678 = vsel %vm126, %v1673, 0
    %v1681 = vsel %vm253, %v1676, 0
    %1683 = vmatprep.subr.bf16.mxu0 0
    %1684 = vmatpush1.bf16.msra.mxu0 %v1681
    %1685 = vmatprep.subr.bf16.mxu0 0
    %1686 = vmatpush1.bf16.msra.mxu0 0
    %1687 = vmatprep.subr.bf16.mxu0 0
    %1688 = vmatpush1.bf16.msra.mxu0 0
    %1689 = vmatprep.subr.bf16.mxu0 0
    %1690 = vmatpush1.bf16.msra.mxu0 0
    %1691 = vmatprep.subr.bf16.mxu0 0
    %1692 = vmatpush1.bf16.msra.mxu0 0
    %1693 = vmatprep.subr.bf16.mxu0 0
    %1694 = vmatpush1.bf16.msra.mxu0 0
    %1695 = vmatprep.subr.bf16.mxu0 0
    %1696 = vmatpush1.bf16.msra.mxu0 0
    %1697 = vmatprep.subr.bf16.mxu0 0
    %1698 = vmatpush1.bf16.msra.mxu0 0
    %1699 = vmatprep.subr.bf16.mxu0 0
    %1700 = vmatpush1.bf16.msra.mxu0 0
    %1701 = vmatprep.subr.bf16.mxu0 0
    %1702 = vmatpush1.bf16.msra.mxu0 0
    %1703 = vmatprep.subr.bf16.mxu0 0
    %1704 = vmatpush1.bf16.msra.mxu0 0
    %1705 = vmatprep.subr.bf16.mxu0 0
    %1706 = vmatpush1.bf16.msra.mxu0 0
    %1707 = vmatprep.subr.bf16.mxu0 0
    %1708 = vmatpush1.bf16.msra.mxu0 0
    %1709 = vmatprep.subr.bf16.mxu0 0
    %1710 = vmatpush1.bf16.msra.mxu0 0
    %1711 = vmatprep.subr.bf16.mxu0 0
    %1712 = vmatpush1.bf16.msra.mxu0 0
    %1713 = vmatprep.subr.bf16.mxu0 0
    %1714 = vmatpush1.bf16.msra.mxu0 0
    %1715 = vmatprep.mubr.bf16.mxu0 0
    %1716 = vmatmul.mubr.bf16.gmra.mrb[0].mxu0 %v1678
    %v1717 = vpop.f32.mrb[0].mxu0
    %v1718 = vadd.f32 0.0, %v1717
    %v1719 = vpop.f32.mrb[0].mxu0
    %v1720 = vpop.f32.mrb[0].mxu0
    %v1721 = vpop.f32.mrb[0].mxu0
    %1722 = vdwg.mxu0
    %1723 = vrot.lane.b32.xlu0 %v1550, 64
    %v1724 = vpop.permute.xlu0 %1723
    %v1726 = vsel %vm126, %v1674, 0
    %v1729 = vsel %vm253, %v1724, 0
    %1731 = vmatprep.subr.bf16.mxu0 0
    %1732 = vmatpush1.bf16.msra.mxu0 %v1729
    %1733 = vmatprep.subr.bf16.mxu0 0
    %1734 = vmatpush1.bf16.msra.mxu0 0
    %1735 = vmatprep.subr.bf16.mxu0 0
    %1736 = vmatpush1.bf16.msra.mxu0 0
    %1737 = vmatprep.subr.bf16.mxu0 0
    %1738 = vmatpush1.bf16.msra.mxu0 0
    %1739 = vmatprep.subr.bf16.mxu0 0
    %1740 = vmatpush1.bf16.msra.mxu0 0
    %1741 = vmatprep.subr.bf16.mxu0 0
    %1742 = vmatpush1.bf16.msra.mxu0 0
    %1743 = vmatprep.subr.bf16.mxu0 0
    %1744 = vmatpush1.bf16.msra.mxu0 0
    %1745 = vmatprep.subr.bf16.mxu0 0
    %1746 = vmatpush1.bf16.msra.mxu0 0
    %1747 = vmatprep.subr.bf16.mxu0 0
    %1748 = vmatpush1.bf16.msra.mxu0 0
    %1749 = vmatprep.subr.bf16.mxu0 0
    %1750 = vmatpush1.bf16.msra.mxu0 0
    %1751 = vmatprep.subr.bf16.mxu0 0
    %1752 = vmatpush1.bf16.msra.mxu0 0
    %1753 = vmatprep.subr.bf16.mxu0 0
    %1754 = vmatpush1.bf16.msra.mxu0 0
    %1755 = vmatprep.subr.bf16.mxu0 0
    %1756 = vmatpush1.bf16.msra.mxu0 0
    %1757 = vmatprep.subr.bf16.mxu0 0
    %1758 = vmatpush1.bf16.msra.mxu0 0
    %1759 = vmatprep.subr.bf16.mxu0 0
    %1760 = vmatpush1.bf16.msra.mxu0 0
    %1761 = vmatprep.subr.bf16.mxu0 0
    %1762 = vmatpush1.bf16.msra.mxu0 0
    %1763 = vmatprep.mubr.bf16.mxu0 0
    %1764 = vmatmul.mubr.bf16.gmra.mrb[0].mxu0 %v1726
    %v1765 = vpop.f32.mrb[0].mxu0
    %v1766 = vadd.f32 0.0, %v1765
    %v1767 = vpop.f32.mrb[0].mxu0
    %v1768 = vpop.f32.mrb[0].mxu0
    %v1769 = vpop.f32.mrb[0].mxu0
    %1770 = vdwg.mxu0
    %v1771 = vpack.c.bf16 %v1766, %v1718
    %s1772 = scalar_lea.vmem %s3, 16
    %v1773 = vld [vmem:[%s1772] sm:$0xf]
    %1774 = vrot.lane.b32.xlu0 %v1549, 120
    %v1775 = vpop.permute.xlu0 %1774
    %1776 = vrot.lane.b32.xlu0 %v1549, 88
    %v1777 = vpop.permute.xlu0 %1776
    %v1779 = vsel %vm126, %v1775, 0
    %v1782 = vsel %vm126, %v1777, 0
    %1784 = vmatprep.subr.bf16.mxu0 0
    %1785 = vmatpush1.bf16.xpose.msra.mxu0 %v1782
    %1786 = vmatprep.subr.bf16.mxu0 0
    %1787 = vmatpush1.bf16.xpose.msra.mxu0 0
    %1788 = vmatprep.subr.bf16.mxu0 0
    %1789 = vmatpush1.bf16.xpose.msra.mxu0 0
    %1790 = vmatprep.subr.bf16.mxu0 0
    %1791 = vmatpush1.bf16.xpose.msra.mxu0 0
    %1792 = vmatprep.subr.bf16.mxu0 0
    %1793 = vmatpush1.bf16.xpose.msra.mxu0 0
    %1794 = vmatprep.subr.bf16.mxu0 0
    %1795 = vmatpush1.bf16.xpose.msra.mxu0 0
    %1796 = vmatprep.subr.bf16.mxu0 0
    %1797 = vmatpush1.bf16.xpose.msra.mxu0 0
    %1798 = vmatprep.subr.bf16.mxu0 0
    %1799 = vmatpush1.bf16.xpose.msra.mxu0 0
    %1800 = vmatprep.subr.bf16.mxu0 0
    %1801 = vmatpush1.bf16.xpose.msra.mxu0 0
    %1802 = vmatprep.subr.bf16.mxu0 0
    %1803 = vmatpush1.bf16.xpose.msra.mxu0 0
    %1804 = vmatprep.subr.bf16.mxu0 0
    %1805 = vmatpush1.bf16.xpose.msra.mxu0 0
    %1806 = vmatprep.subr.bf16.mxu0 0
    %1807 = vmatpush1.bf16.xpose.msra.mxu0 0
    %1808 = vmatprep.subr.bf16.mxu0 0
    %1809 = vmatpush1.bf16.xpose.msra.mxu0 0
    %1810 = vmatprep.subr.bf16.mxu0 0
    %1811 = vmatpush1.bf16.xpose.msra.mxu0 0
    %1812 = vmatprep.subr.bf16.mxu0 0
    %1813 = vmatpush1.bf16.xpose.msra.mxu0 0
    %1814 = vmatprep.subr.bf16.mxu0 0
    %1815 = vmatpush1.bf16.xpose.msra.mxu0 0
    %1816 = vmatprep.mubr.bf16.mxu0 0
    %1817 = vmatmul.mubr.bf16.gmra.mrb[0].mxu0 %v1779
    %v1818 = vpop.f32.mrb[0].mxu0
    %v1819 = vadd.f32 0.0, %v1818
    %v1820 = vpop.f32.mrb[0].mxu0
    %v1821 = vpop.f32.mrb[0].mxu0
    %v1822 = vpop.f32.mrb[0].mxu0
    %1823 = vdwg.mxu0
    %1824 = vrot.lane.b32.xlu0 %v1550, 120
    %v1825 = vpop.permute.xlu0 %1824
    %1826 = vrot.lane.b32.xlu0 %v1550, 88
    %v1827 = vpop.permute.xlu0 %1826
    %v1829 = vsel %vm126, %v1825, 0
    %v1832 = vsel %vm126, %v1827, 0
    %1834 = vmatprep.subr.bf16.mxu0 0
    %1835 = vmatpush1.bf16.xpose.msra.mxu0 %v1832
    %1836 = vmatprep.subr.bf16.mxu0 0
    %1837 = vmatpush1.bf16.xpose.msra.mxu0 0
    %1838 = vmatprep.subr.bf16.mxu0 0
    %1839 = vmatpush1.bf16.xpose.msra.mxu0 0
    %1840 = vmatprep.subr.bf16.mxu0 0
    %1841 = vmatpush1.bf16.xpose.msra.mxu0 0
    %1842 = vmatprep.subr.bf16.mxu0 0
    %1843 = vmatpush1.bf16.xpose.msra.mxu0 0
    %1844 = vmatprep.subr.bf16.mxu0 0
    %1845 = vmatpush1.bf16.xpose.msra.mxu0 0
    %1846 = vmatprep.subr.bf16.mxu0 0
    %1847 = vmatpush1.bf16.xpose.msra.mxu0 0
    %1848 = vmatprep.subr.bf16.mxu0 0
    %1849 = vmatpush1.bf16.xpose.msra.mxu0 0
    %1850 = vmatprep.subr.bf16.mxu0 0
    %1851 = vmatpush1.bf16.xpose.msra.mxu0 0
    %1852 = vmatprep.subr.bf16.mxu0 0
    %1853 = vmatpush1.bf16.xpose.msra.mxu0 0
    %1854 = vmatprep.subr.bf16.mxu0 0
    %1855 = vmatpush1.bf16.xpose.msra.mxu0 0
    %1856 = vmatprep.subr.bf16.mxu0 0
    %1857 = vmatpush1.bf16.xpose.msra.mxu0 0
    %1858 = vmatprep.subr.bf16.mxu0 0
    %1859 = vmatpush1.bf16.xpose.msra.mxu0 0
    %1860 = vmatprep.subr.bf16.mxu0 0
    %1861 = vmatpush1.bf16.xpose.msra.mxu0 0
    %1862 = vmatprep.subr.bf16.mxu0 0
    %1863 = vmatpush1.bf16.xpose.msra.mxu0 0
    %1864 = vmatprep.subr.bf16.mxu0 0
    %1865 = vmatpush1.bf16.xpose.msra.mxu0 0
    %1866 = vmatprep.mubr.bf16.mxu0 0
    %1867 = vmatmul.mubr.bf16.gmra.mrb[0].mxu0 %v1829
    %v1868 = vpop.f32.mrb[0].mxu0
    %v1869 = vadd.f32 0.0, %v1868
    %v1870 = vpop.f32.mrb[0].mxu0
    %v1871 = vpop.f32.mrb[0].mxu0
    %v1872 = vpop.f32.mrb[0].mxu0
    %1873 = vdwg.mxu0
    %v1874 = vmul.f32 %v1819, 0.35355338
    %v1875 = vmul.f32 %v1869, 0.35355338
    %v1876 = vsel %vm126, %v1874, -inf
    %1877 = vmax.xlane.f32.xlu0 %v1876
    %v1878 = vpop.xlane.xlu0 %1877
    %v1879 = vsel %vm126, %v1875, -inf
    %1880 = vmax.xlane.f32.xlu0 %v1879
    %v1881 = vpop.xlane.xlu0 %1880
    %v1882 = vsub.f32 %v1874, %v1878
    %v1883 = vsub.f32 %v1875, %v1881
    %v1884 = vmul.f32 %v1882, 1.442695
    %v1885 = vpow.pop %v1884
    %v1886 = vmul.f32 %v1883, 1.442695
    %v1887 = vpow.pop %v1886
    %v1888 = vsel %vm126, %v1885, 0.0
    %1889 = vadd.xlane.f32.xlu0 %v1888
    %v1890 = vpop.xlane.xlu0 %1889
    %v1891 = vsel %vm126, %v1887, 0.0
    %1892 = vadd.xlane.f32.xlu0 %v1891
    %v1893 = vpop.xlane.xlu0 %1892
    %v1894 = vrcp.pop %v1890
    %v1895 = vrcp.pop %v1893
    %v1896 = vmul.f32 %v1885, %v1894
    %v1897 = vmul.f32 %v1887, %v1895
    %v1898 = vpack.c.bf16 %v1896, %v1896
    %v1899 = vpack.c.bf16 %v1897, %v1897
    %1900 = vrot.lane.b32.xlu0 %v1549, 56
    %v1901 = vpop.permute.xlu0 %1900
    %v1903 = vsel %vm126, %v1898, 0
    %v1906 = vsel %vm253, %v1901, 0
    %1908 = vmatprep.subr.bf16.mxu0 0
    %1909 = vmatpush1.bf16.msra.mxu0 %v1906
    %1910 = vmatprep.subr.bf16.mxu0 0
    %1911 = vmatpush1.bf16.msra.mxu0 0
    %1912 = vmatprep.subr.bf16.mxu0 0
    %1913 = vmatpush1.bf16.msra.mxu0 0
    %1914 = vmatprep.subr.bf16.mxu0 0
    %1915 = vmatpush1.bf16.msra.mxu0 0
    %1916 = vmatprep.subr.bf16.mxu0 0
    %1917 = vmatpush1.bf16.msra.mxu0 0
    %1918 = vmatprep.subr.bf16.mxu0 0
    %1919 = vmatpush1.bf16.msra.mxu0 0
    %1920 = vmatprep.subr.bf16.mxu0 0
    %1921 = vmatpush1.bf16.msra.mxu0 0
    %1922 = vmatprep.subr.bf16.mxu0 0
    %1923 = vmatpush1.bf16.msra.mxu0 0
    %1924 = vmatprep.subr.bf16.mxu0 0
    %1925 = vmatpush1.bf16.msra.mxu0 0
    %1926 = vmatprep.subr.bf16.mxu0 0
    %1927 = vmatpush1.bf16.msra.mxu0 0
    %1928 = vmatprep.subr.bf16.mxu0 0
    %1929 = vmatpush1.bf16.msra.mxu0 0
    %1930 = vmatprep.subr.bf16.mxu0 0
    %1931 = vmatpush1.bf16.msra.mxu0 0
    %1932 = vmatprep.subr.bf16.mxu0 0
    %1933 = vmatpush1.bf16.msra.mxu0 0
    %1934 = vmatprep.subr.bf16.mxu0 0
    %1935 = vmatpush1.bf16.msra.mxu0 0
    %1936 = vmatprep.subr.bf16.mxu0 0
    %1937 = vmatpush1.bf16.msra.mxu0 0
    %1938 = vmatprep.subr.bf16.mxu0 0
    %1939 = vmatpush1.bf16.msra.mxu0 0
    %1940 = vmatprep.mubr.bf16.mxu0 0
    %1941 = vmatmul.mubr.bf16.gmra.mrb[0].mxu0 %v1903
    %v1942 = vpop.f32.mrb[0].mxu0
    %v1943 = vadd.f32 0.0, %v1942
    %v1944 = vpop.f32.mrb[0].mxu0
    %v1945 = vpop.f32.mrb[0].mxu0
    %v1946 = vpop.f32.mrb[0].mxu0
    %1947 = vdwg.mxu0
    %1948 = vrot.lane.b32.xlu0 %v1550, 56
    %v1949 = vpop.permute.xlu0 %1948
    %v1951 = vsel %vm126, %v1899, 0
    %v1954 = vsel %vm253, %v1949, 0
    %1956 = vmatprep.subr.bf16.mxu0 0
    %1957 = vmatpush1.bf16.msra.mxu0 %v1954
    %1958 = vmatprep.subr.bf16.mxu0 0
    %1959 = vmatpush1.bf16.msra.mxu0 0
    %1960 = vmatprep.subr.bf16.mxu0 0
    %1961 = vmatpush1.bf16.msra.mxu0 0
    %1962 = vmatprep.subr.bf16.mxu0 0
    %1963 = vmatpush1.bf16.msra.mxu0 0
    %1964 = vmatprep.subr.bf16.mxu0 0
    %1965 = vmatpush1.bf16.msra.mxu0 0
    %1966 = vmatprep.subr.bf16.mxu0 0
    %1967 = vmatpush1.bf16.msra.mxu0 0
    %1968 = vmatprep.subr.bf16.mxu0 0
    %1969 = vmatpush1.bf16.msra.mxu0 0
    %1970 = vmatprep.subr.bf16.mxu0 0
    %1971 = vmatpush1.bf16.msra.mxu0 0
    %1972 = vmatprep.subr.bf16.mxu0 0
    %1973 = vmatpush1.bf16.msra.mxu0 0
    %1974 = vmatprep.subr.bf16.mxu0 0
    %1975 = vmatpush1.bf16.msra.mxu0 0
    %1976 = vmatprep.subr.bf16.mxu0 0
    %1977 = vmatpush1.bf16.msra.mxu0 0
    %1978 = vmatprep.subr.bf16.mxu0 0
    %1979 = vmatpush1.bf16.msra.mxu0 0
    %1980 = vmatprep.subr.bf16.mxu0 0
    %1981 = vmatpush1.bf16.msra.mxu0 0
    %1982 = vmatprep.subr.bf16.mxu0 0
    %1983 = vmatpush1.bf16.msra.mxu0 0
    %1984 = vmatprep.subr.bf16.mxu0 0
    %1985 = vmatpush1.bf16.msra.mxu0 0
    %1986 = vmatprep.subr.bf16.mxu0 0
    %1987 = vmatpush1.bf16.msra.mxu0 0
    %1988 = vmatprep.mubr.bf16.mxu0 0
    %1989 = vmatmul.mubr.bf16.gmra.mrb[0].mxu0 %v1951
    %v1990 = vpop.f32.mrb[0].mxu0
    %v1991 = vadd.f32 0.0, %v1990
    %v1992 = vpop.f32.mrb[0].mxu0
    %v1993 = vpop.f32.mrb[0].mxu0
    %v1994 = vpop.f32.mrb[0].mxu0
    %1995 = vdwg.mxu0
    %v1996 = vpack.c.bf16 %v1991, %v1943
    %v1997 = vld [vmem:[%s1772 + $0x4] sm:$0xf]
    %v1999 = vsel %vm126, %v1996, 0
    %v2002 = vsel %vm253, %v1997, 0
    %2004 = vmatprep.subr.bf16.mxu0 0
    %2005 = vmatpush1.bf16.msra.mxu0 %v2002
    %2006 = vmatprep.subr.bf16.mxu0 0
    %2007 = vmatpush1.bf16.msra.mxu0 0
    %2008 = vmatprep.subr.bf16.mxu0 0
    %2009 = vmatpush1.bf16.msra.mxu0 0
    %2010 = vmatprep.subr.bf16.mxu0 0
    %2011 = vmatpush1.bf16.msra.mxu0 0
    %2012 = vmatprep.subr.bf16.mxu0 0
    %2013 = vmatpush1.bf16.msra.mxu0 0
    %2014 = vmatprep.subr.bf16.mxu0 0
    %2015 = vmatpush1.bf16.msra.mxu0 0
    %2016 = vmatprep.subr.bf16.mxu0 0
    %2017 = vmatpush1.bf16.msra.mxu0 0
    %2018 = vmatprep.subr.bf16.mxu0 0
    %2019 = vmatpush1.bf16.msra.mxu0 0
    %2020 = vmatprep.subr.bf16.mxu0 0
    %2021 = vmatpush1.bf16.msra.mxu0 0
    %2022 = vmatprep.subr.bf16.mxu0 0
    %2023 = vmatpush1.bf16.msra.mxu0 0
    %2024 = vmatprep.subr.bf16.mxu0 0
    %2025 = vmatpush1.bf16.msra.mxu0 0
    %2026 = vmatprep.subr.bf16.mxu0 0
    %2027 = vmatpush1.bf16.msra.mxu0 0
    %2028 = vmatprep.subr.bf16.mxu0 0
    %2029 = vmatpush1.bf16.msra.mxu0 0
    %2030 = vmatprep.subr.bf16.mxu0 0
    %2031 = vmatpush1.bf16.msra.mxu0 0
    %2032 = vmatprep.subr.bf16.mxu0 0
    %2033 = vmatpush1.bf16.msra.mxu0 0
    %2034 = vmatprep.subr.bf16.mxu0 0
    %2035 = vmatpush1.bf16.msra.mxu0 0
    %2036 = vmatprep.mubr.bf16.mxu0 0
    %2037 = vmatmul.mubr.bf16.gmra.mrb[0].mxu0 %v1999
    %v2038 = vpop.f32.mrb[0].mxu0
    %v2039 = vadd.f32 0.0, %v2038
    %v2040 = vpop.f32.mrb[0].mxu0
    %v2041 = vpop.f32.mrb[0].mxu0
    %v2042 = vadd.f32 0.0, %v2041
    %v2043 = vpop.f32.mrb[0].mxu0
    %2044 = vdwg.mxu0
    %v2046 = vsel %vm126, %v1771, 0
    %v2049 = vsel %vm253, %v1773, 0
    %2051 = vmatprep.subr.bf16.mxu0 0
    %2052 = vmatpush1.bf16.msra.mxu0 %v2049
    %2053 = vmatprep.subr.bf16.mxu0 0
    %2054 = vmatpush1.bf16.msra.mxu0 0
    %2055 = vmatprep.subr.bf16.mxu0 0
    %2056 = vmatpush1.bf16.msra.mxu0 0
    %2057 = vmatprep.subr.bf16.mxu0 0
    %2058 = vmatpush1.bf16.msra.mxu0 0
    %2059 = vmatprep.subr.bf16.mxu0 0
    %2060 = vmatpush1.bf16.msra.mxu0 0
    %2061 = vmatprep.subr.bf16.mxu0 0
    %2062 = vmatpush1.bf16.msra.mxu0 0
    %2063 = vmatprep.subr.bf16.mxu0 0
    %2064 = vmatpush1.bf16.msra.mxu0 0
    %2065 = vmatprep.subr.bf16.mxu0 0
    %2066 = vmatpush1.bf16.msra.mxu0 0
    %2067 = vmatprep.subr.bf16.mxu0 0
    %2068 = vmatpush1.bf16.msra.mxu0 0
    %2069 = vmatprep.subr.bf16.mxu0 0
    %2070 = vmatpush1.bf16.msra.mxu0 0
    %2071 = vmatprep.subr.bf16.mxu0 0
    %2072 = vmatpush1.bf16.msra.mxu0 0
    %2073 = vmatprep.subr.bf16.mxu0 0
    %2074 = vmatpush1.bf16.msra.mxu0 0
    %2075 = vmatprep.subr.bf16.mxu0 0
    %2076 = vmatpush1.bf16.msra.mxu0 0
    %2077 = vmatprep.subr.bf16.mxu0 0
    %2078 = vmatpush1.bf16.msra.mxu0 0
    %2079 = vmatprep.subr.bf16.mxu0 0
    %2080 = vmatpush1.bf16.msra.mxu0 0
    %2081 = vmatprep.subr.bf16.mxu0 0
    %2082 = vmatpush1.bf16.msra.mxu0 0
    %2083 = vmatprep.mubr.bf16.mxu0 0
    %2084 = vmatmul.mubr.bf16.gmra.mrb[0].mxu0 %v2046
    %v2085 = vpop.f32.mrb[0].mxu0
    %v2086 = vadd.f32 %v2039, %v2085
    %v2087 = vpop.f32.mrb[0].mxu0
    %v2088 = vpop.f32.mrb[0].mxu0
    %v2089 = vadd.f32 %v2042, %v2088
    %v2090 = vpop.f32.mrb[0].mxu0
    %2091 = vdwg.mxu0
    %2092 = vrot.lane.b32.xlu0 %v1549, 112
    %v2093 = vpop.permute.xlu0 %2092
    %2094 = vrot.lane.b32.xlu0 %v1549, 80
    %v2095 = vpop.permute.xlu0 %2094
    %v2097 = vsel %vm126, %v2093, 0
    %v2100 = vsel %vm126, %v2095, 0
    %2102 = vmatprep.subr.bf16.mxu0 0
    %2103 = vmatpush1.bf16.xpose.msra.mxu0 %v2100
    %2104 = vmatprep.subr.bf16.mxu0 0
    %2105 = vmatpush1.bf16.xpose.msra.mxu0 0
    %2106 = vmatprep.subr.bf16.mxu0 0
    %2107 = vmatpush1.bf16.xpose.msra.mxu0 0
    %2108 = vmatprep.subr.bf16.mxu0 0
    %2109 = vmatpush1.bf16.xpose.msra.mxu0 0
    %2110 = vmatprep.subr.bf16.mxu0 0
    %2111 = vmatpush1.bf16.xpose.msra.mxu0 0
    %2112 = vmatprep.subr.bf16.mxu0 0
    %2113 = vmatpush1.bf16.xpose.msra.mxu0 0
    %2114 = vmatprep.subr.bf16.mxu0 0
    %2115 = vmatpush1.bf16.xpose.msra.mxu0 0
    %2116 = vmatprep.subr.bf16.mxu0 0
    %2117 = vmatpush1.bf16.xpose.msra.mxu0 0
    %2118 = vmatprep.subr.bf16.mxu0 0
    %2119 = vmatpush1.bf16.xpose.msra.mxu0 0
    %2120 = vmatprep.subr.bf16.mxu0 0
    %2121 = vmatpush1.bf16.xpose.msra.mxu0 0
    %2122 = vmatprep.subr.bf16.mxu0 0
    %2123 = vmatpush1.bf16.xpose.msra.mxu0 0
    %2124 = vmatprep.subr.bf16.mxu0 0
    %2125 = vmatpush1.bf16.xpose.msra.mxu0 0
    %2126 = vmatprep.subr.bf16.mxu0 0
    %2127 = vmatpush1.bf16.xpose.msra.mxu0 0
    %2128 = vmatprep.subr.bf16.mxu0 0
    %2129 = vmatpush1.bf16.xpose.msra.mxu0 0
    %2130 = vmatprep.subr.bf16.mxu0 0
    %2131 = vmatpush1.bf16.xpose.msra.mxu0 0
    %2132 = vmatprep.subr.bf16.mxu0 0
    %2133 = vmatpush1.bf16.xpose.msra.mxu0 0
    %2134 = vmatprep.mubr.bf16.mxu0 0
    %2135 = vmatmul.mubr.bf16.gmra.mrb[0].mxu0 %v2097
    %v2136 = vpop.f32.mrb[0].mxu0
    %v2137 = vadd.f32 0.0, %v2136
    %v2138 = vpop.f32.mrb[0].mxu0
    %v2139 = vpop.f32.mrb[0].mxu0
    %v2140 = vpop.f32.mrb[0].mxu0
    %2141 = vdwg.mxu0
    %2142 = vrot.lane.b32.xlu0 %v1550, 112
    %v2143 = vpop.permute.xlu0 %2142
    %2144 = vrot.lane.b32.xlu0 %v1550, 80
    %v2145 = vpop.permute.xlu0 %2144
    %v2147 = vsel %vm126, %v2143, 0
    %v2150 = vsel %vm126, %v2145, 0
    %2152 = vmatprep.subr.bf16.mxu0 0
    %2153 = vmatpush1.bf16.xpose.msra.mxu0 %v2150
    %2154 = vmatprep.subr.bf16.mxu0 0
    %2155 = vmatpush1.bf16.xpose.msra.mxu0 0
    %2156 = vmatprep.subr.bf16.mxu0 0
    %2157 = vmatpush1.bf16.xpose.msra.mxu0 0
    %2158 = vmatprep.subr.bf16.mxu0 0
    %2159 = vmatpush1.bf16.xpose.msra.mxu0 0
    %2160 = vmatprep.subr.bf16.mxu0 0
    %2161 = vmatpush1.bf16.xpose.msra.mxu0 0
    %2162 = vmatprep.subr.bf16.mxu0 0
    %2163 = vmatpush1.bf16.xpose.msra.mxu0 0
    %2164 = vmatprep.subr.bf16.mxu0 0
    %2165 = vmatpush1.bf16.xpose.msra.mxu0 0
    %2166 = vmatprep.subr.bf16.mxu0 0
    %2167 = vmatpush1.bf16.xpose.msra.mxu0 0
    %2168 = vmatprep.subr.bf16.mxu0 0
    %2169 = vmatpush1.bf16.xpose.msra.mxu0 0
    %2170 = vmatprep.subr.bf16.mxu0 0
    %2171 = vmatpush1.bf16.xpose.msra.mxu0 0
    %2172 = vmatprep.subr.bf16.mxu0 0
    %2173 = vmatpush1.bf16.xpose.msra.mxu0 0
    %2174 = vmatprep.subr.bf16.mxu0 0
    %2175 = vmatpush1.bf16.xpose.msra.mxu0 0
    %2176 = vmatprep.subr.bf16.mxu0 0
    %2177 = vmatpush1.bf16.xpose.msra.mxu0 0
    %2178 = vmatprep.subr.bf16.mxu0 0
    %2179 = vmatpush1.bf16.xpose.msra.mxu0 0
    %2180 = vmatprep.subr.bf16.mxu0 0
    %2181 = vmatpush1.bf16.xpose.msra.mxu0 0
    %2182 = vmatprep.subr.bf16.mxu0 0
    %2183 = vmatpush1.bf16.xpose.msra.mxu0 0
    %2184 = vmatprep.mubr.bf16.mxu0 0
    %2185 = vmatmul.mubr.bf16.gmra.mrb[0].mxu0 %v2147
    %v2186 = vpop.f32.mrb[0].mxu0
    %v2187 = vadd.f32 0.0, %v2186
    %v2188 = vpop.f32.mrb[0].mxu0
    %v2189 = vpop.f32.mrb[0].mxu0
    %v2190 = vpop.f32.mrb[0].mxu0
    %2191 = vdwg.mxu0
    %v2192 = vmul.f32 %v2137, 0.35355338
    %v2193 = vmul.f32 %v2187, 0.35355338
    %v2194 = vsel %vm126, %v2192, -inf
    %2195 = vmax.xlane.f32.xlu0 %v2194
    %v2196 = vpop.xlane.xlu0 %2195
    %v2197 = vsel %vm126, %v2193, -inf
    %2198 = vmax.xlane.f32.xlu0 %v2197
    %v2199 = vpop.xlane.xlu0 %2198
    %v2200 = vsub.f32 %v2192, %v2196
    %v2201 = vsub.f32 %v2193, %v2199
    %v2202 = vmul.f32 %v2200, 1.442695
    %v2203 = vpow.pop %v2202
    %v2204 = vmul.f32 %v2201, 1.442695
    %v2205 = vpow.pop %v2204
    %v2206 = vsel %vm126, %v2203, 0.0
    %2207 = vadd.xlane.f32.xlu0 %v2206
    %v2208 = vpop.xlane.xlu0 %2207
    %v2209 = vsel %vm126, %v2205, 0.0
    %2210 = vadd.xlane.f32.xlu0 %v2209
    %v2211 = vpop.xlane.xlu0 %2210
    %v2212 = vrcp.pop %v2208
    %v2213 = vrcp.pop %v2211
    %v2214 = vmul.f32 %v2203, %v2212
    %v2215 = vmul.f32 %v2205, %v2213
    %v2216 = vpack.c.bf16 %v2214, %v2214
    %v2217 = vpack.c.bf16 %v2215, %v2215
    %2218 = vrot.lane.b32.xlu0 %v1549, 48
    %v2219 = vpop.permute.xlu0 %2218
    %v2221 = vsel %vm126, %v2216, 0
    %v2224 = vsel %vm253, %v2219, 0
    %2226 = vmatprep.subr.bf16.mxu0 0
    %2227 = vmatpush1.bf16.msra.mxu0 %v2224
    %2228 = vmatprep.subr.bf16.mxu0 0
    %2229 = vmatpush1.bf16.msra.mxu0 0
    %2230 = vmatprep.subr.bf16.mxu0 0
    %2231 = vmatpush1.bf16.msra.mxu0 0
    %2232 = vmatprep.subr.bf16.mxu0 0
    %2233 = vmatpush1.bf16.msra.mxu0 0
    %2234 = vmatprep.subr.bf16.mxu0 0
    %2235 = vmatpush1.bf16.msra.mxu0 0
    %2236 = vmatprep.subr.bf16.mxu0 0
    %2237 = vmatpush1.bf16.msra.mxu0 0
    %2238 = vmatprep.subr.bf16.mxu0 0
    %2239 = vmatpush1.bf16.msra.mxu0 0
    %2240 = vmatprep.subr.bf16.mxu0 0
    %2241 = vmatpush1.bf16.msra.mxu0 0
    %2242 = vmatprep.subr.bf16.mxu0 0
    %2243 = vmatpush1.bf16.msra.mxu0 0
    %2244 = vmatprep.subr.bf16.mxu0 0
    %2245 = vmatpush1.bf16.msra.mxu0 0
    %2246 = vmatprep.subr.bf16.mxu0 0
    %2247 = vmatpush1.bf16.msra.mxu0 0
    %2248 = vmatprep.subr.bf16.mxu0 0
    %2249 = vmatpush1.bf16.msra.mxu0 0
    %2250 = vmatprep.subr.bf16.mxu0 0
    %2251 = vmatpush1.bf16.msra.mxu0 0
    %2252 = vmatprep.subr.bf16.mxu0 0
    %2253 = vmatpush1.bf16.msra.mxu0 0
    %2254 = vmatprep.subr.bf16.mxu0 0
    %2255 = vmatpush1.bf16.msra.mxu0 0
    %2256 = vmatprep.subr.bf16.mxu0 0
    %2257 = vmatpush1.bf16.msra.mxu0 0
    %2258 = vmatprep.mubr.bf16.mxu0 0
    %2259 = vmatmul.mubr.bf16.gmra.mrb[0].mxu0 %v2221
    %v2260 = vpop.f32.mrb[0].mxu0
    %v2261 = vadd.f32 0.0, %v2260
    %v2262 = vpop.f32.mrb[0].mxu0
    %v2263 = vpop.f32.mrb[0].mxu0
    %v2264 = vpop.f32.mrb[0].mxu0
    %2265 = vdwg.mxu0
    %2266 = vrot.lane.b32.xlu0 %v1550, 48
    %v2267 = vpop.permute.xlu0 %2266
    %v2269 = vsel %vm126, %v2217, 0
    %v2272 = vsel %vm253, %v2267, 0
    %2274 = vmatprep.subr.bf16.mxu0 0
    %2275 = vmatpush1.bf16.msra.mxu0 %v2272
    %2276 = vmatprep.subr.bf16.mxu0 0
    %2277 = vmatpush1.bf16.msra.mxu0 0
    %2278 = vmatprep.subr.bf16.mxu0 0
    %2279 = vmatpush1.bf16.msra.mxu0 0
    %2280 = vmatprep.subr.bf16.mxu0 0
    %2281 = vmatpush1.bf16.msra.mxu0 0
    %2282 = vmatprep.subr.bf16.mxu0 0
    %2283 = vmatpush1.bf16.msra.mxu0 0
    %2284 = vmatprep.subr.bf16.mxu0 0
    %2285 = vmatpush1.bf16.msra.mxu0 0
    %2286 = vmatprep.subr.bf16.mxu0 0
    %2287 = vmatpush1.bf16.msra.mxu0 0
    %2288 = vmatprep.subr.bf16.mxu0 0
    %2289 = vmatpush1.bf16.msra.mxu0 0
    %2290 = vmatprep.subr.bf16.mxu0 0
    %2291 = vmatpush1.bf16.msra.mxu0 0
    %2292 = vmatprep.subr.bf16.mxu0 0
    %2293 = vmatpush1.bf16.msra.mxu0 0
    %2294 = vmatprep.subr.bf16.mxu0 0
    %2295 = vmatpush1.bf16.msra.mxu0 0
    %2296 = vmatprep.subr.bf16.mxu0 0
    %2297 = vmatpush1.bf16.msra.mxu0 0
    %2298 = vmatprep.subr.bf16.mxu0 0
    %2299 = vmatpush1.bf16.msra.mxu0 0
    %2300 = vmatprep.subr.bf16.mxu0 0
    %2301 = vmatpush1.bf16.msra.mxu0 0
    %2302 = vmatprep.subr.bf16.mxu0 0
    %2303 = vmatpush1.bf16.msra.mxu0 0
    %2304 = vmatprep.subr.bf16.mxu0 0
    %2305 = vmatpush1.bf16.msra.mxu0 0
    %2306 = vmatprep.mubr.bf16.mxu0 0
    %2307 = vmatmul.mubr.bf16.gmra.mrb[0].mxu0 %v2269
    %v2308 = vpop.f32.mrb[0].mxu0
    %v2309 = vadd.f32 0.0, %v2308
    %v2310 = vpop.f32.mrb[0].mxu0
    %v2311 = vpop.f32.mrb[0].mxu0
    %v2312 = vpop.f32.mrb[0].mxu0
    %2313 = vdwg.mxu0
    %v2314 = vpack.c.bf16 %v2309, %v2261
    %v2315 = vld [vmem:[%s1772 + $0x8] sm:$0xf]
    %v2317 = vsel %vm126, %v2314, 0
    %v2320 = vsel %vm253, %v2315, 0
    %2322 = vmatprep.subr.bf16.mxu0 0
    %2323 = vmatpush1.bf16.msra.mxu0 %v2320
    %2324 = vmatprep.subr.bf16.mxu0 0
    %2325 = vmatpush1.bf16.msra.mxu0 0
    %2326 = vmatprep.subr.bf16.mxu0 0
    %2327 = vmatpush1.bf16.msra.mxu0 0
    %2328 = vmatprep.subr.bf16.mxu0 0
    %2329 = vmatpush1.bf16.msra.mxu0 0
    %2330 = vmatprep.subr.bf16.mxu0 0
    %2331 = vmatpush1.bf16.msra.mxu0 0
    %2332 = vmatprep.subr.bf16.mxu0 0
    %2333 = vmatpush1.bf16.msra.mxu0 0
    %2334 = vmatprep.subr.bf16.mxu0 0
    %2335 = vmatpush1.bf16.msra.mxu0 0
    %2336 = vmatprep.subr.bf16.mxu0 0
    %2337 = vmatpush1.bf16.msra.mxu0 0
    %2338 = vmatprep.subr.bf16.mxu0 0
    %2339 = vmatpush1.bf16.msra.mxu0 0
    %2340 = vmatprep.subr.bf16.mxu0 0
    %2341 = vmatpush1.bf16.msra.mxu0 0
    %2342 = vmatprep.subr.bf16.mxu0 0
    %2343 = vmatpush1.bf16.msra.mxu0 0
    %2344 = vmatprep.subr.bf16.mxu0 0
    %2345 = vmatpush1.bf16.msra.mxu0 0
    %2346 = vmatprep.subr.bf16.mxu0 0
    %2347 = vmatpush1.bf16.msra.mxu0 0
    %2348 = vmatprep.subr.bf16.mxu0 0
    %2349 = vmatpush1.bf16.msra.mxu0 0
    %2350 = vmatprep.subr.bf16.mxu0 0
    %2351 = vmatpush1.bf16.msra.mxu0 0
    %2352 = vmatprep.subr.bf16.mxu0 0
    %2353 = vmatpush1.bf16.msra.mxu0 0
    %2354 = vmatprep.mubr.bf16.mxu0 0
    %2355 = vmatmul.mubr.bf16.gmra.mrb[0].mxu0 %v2317
    %v2356 = vpop.f32.mrb[0].mxu0
    %v2357 = vadd.f32 0.0, %v2356
    %v2358 = vpop.f32.mrb[0].mxu0
    %v2359 = vpop.f32.mrb[0].mxu0
    %v2360 = vadd.f32 0.0, %v2359
    %v2361 = vpop.f32.mrb[0].mxu0
    %2362 = vdwg.mxu0
    %v2363 = vadd.f32 %v2086, %v2357
    %v2364 = vadd.f32 %v2089, %v2360
    %2365 = vrot.lane.b32.xlu0 %v1549, 104
    %v2366 = vpop.permute.xlu0 %2365
    %2367 = vrot.lane.b32.xlu0 %v1549, 72
    %v2368 = vpop.permute.xlu0 %2367
    %v2370 = vsel %vm126, %v2366, 0
    %v2373 = vsel %vm126, %v2368, 0
    %2375 = vmatprep.subr.bf16.mxu0 0
    %2376 = vmatpush1.bf16.xpose.msra.mxu0 %v2373
    %2377 = vmatprep.subr.bf16.mxu0 0
    %2378 = vmatpush1.bf16.xpose.msra.mxu0 0
    %2379 = vmatprep.subr.bf16.mxu0 0
    %2380 = vmatpush1.bf16.xpose.msra.mxu0 0
    %2381 = vmatprep.subr.bf16.mxu0 0
    %2382 = vmatpush1.bf16.xpose.msra.mxu0 0
    %2383 = vmatprep.subr.bf16.mxu0 0
    %2384 = vmatpush1.bf16.xpose.msra.mxu0 0
    %2385 = vmatprep.subr.bf16.mxu0 0
    %2386 = vmatpush1.bf16.xpose.msra.mxu0 0
    %2387 = vmatprep.subr.bf16.mxu0 0
    %2388 = vmatpush1.bf16.xpose.msra.mxu0 0
    %2389 = vmatprep.subr.bf16.mxu0 0
    %2390 = vmatpush1.bf16.xpose.msra.mxu0 0
    %2391 = vmatprep.subr.bf16.mxu0 0
    %2392 = vmatpush1.bf16.xpose.msra.mxu0 0
    %2393 = vmatprep.subr.bf16.mxu0 0
    %2394 = vmatpush1.bf16.xpose.msra.mxu0 0
    %2395 = vmatprep.subr.bf16.mxu0 0
    %2396 = vmatpush1.bf16.xpose.msra.mxu0 0
    %2397 = vmatprep.subr.bf16.mxu0 0
    %2398 = vmatpush1.bf16.xpose.msra.mxu0 0
    %2399 = vmatprep.subr.bf16.mxu0 0
    %2400 = vmatpush1.bf16.xpose.msra.mxu0 0
    %2401 = vmatprep.subr.bf16.mxu0 0
    %2402 = vmatpush1.bf16.xpose.msra.mxu0 0
    %2403 = vmatprep.subr.bf16.mxu0 0
    %2404 = vmatpush1.bf16.xpose.msra.mxu0 0
    %2405 = vmatprep.subr.bf16.mxu0 0
    %2406 = vmatpush1.bf16.xpose.msra.mxu0 0
    %2407 = vmatprep.mubr.bf16.mxu0 0
    %2408 = vmatmul.mubr.bf16.gmra.mrb[0].mxu0 %v2370
    %v2409 = vpop.f32.mrb[0].mxu0
    %v2410 = vadd.f32 0.0, %v2409
    %v2411 = vpop.f32.mrb[0].mxu0
    %v2412 = vpop.f32.mrb[0].mxu0
    %v2413 = vpop.f32.mrb[0].mxu0
    %2414 = vdwg.mxu0
    %2415 = vrot.lane.b32.xlu0 %v1550, 104
    %v2416 = vpop.permute.xlu0 %2415
    %2417 = vrot.lane.b32.xlu0 %v1550, 72
    %v2418 = vpop.permute.xlu0 %2417
    %v2420 = vsel %vm126, %v2416, 0
    %v2423 = vsel %vm126, %v2418, 0
    %2425 = vmatprep.subr.bf16.mxu0 0
    %2426 = vmatpush1.bf16.xpose.msra.mxu0 %v2423
    %2427 = vmatprep.subr.bf16.mxu0 0
    %2428 = vmatpush1.bf16.xpose.msra.mxu0 0
    %2429 = vmatprep.subr.bf16.mxu0 0
    %2430 = vmatpush1.bf16.xpose.msra.mxu0 0
    %2431 = vmatprep.subr.bf16.mxu0 0
    %2432 = vmatpush1.bf16.xpose.msra.mxu0 0
    %2433 = vmatprep.subr.bf16.mxu0 0
    %2434 = vmatpush1.bf16.xpose.msra.mxu0 0
    %2435 = vmatprep.subr.bf16.mxu0 0
    %2436 = vmatpush1.bf16.xpose.msra.mxu0 0
    %2437 = vmatprep.subr.bf16.mxu0 0
    %2438 = vmatpush1.bf16.xpose.msra.mxu0 0
    %2439 = vmatprep.subr.bf16.mxu0 0
    %2440 = vmatpush1.bf16.xpose.msra.mxu0 0
    %2441 = vmatprep.subr.bf16.mxu0 0
    %2442 = vmatpush1.bf16.xpose.msra.mxu0 0
    %2443 = vmatprep.subr.bf16.mxu0 0
    %2444 = vmatpush1.bf16.xpose.msra.mxu0 0
    %2445 = vmatprep.subr.bf16.mxu0 0
    %2446 = vmatpush1.bf16.xpose.msra.mxu0 0
    %2447 = vmatprep.subr.bf16.mxu0 0
    %2448 = vmatpush1.bf16.xpose.msra.mxu0 0
    %2449 = vmatprep.subr.bf16.mxu0 0
    %2450 = vmatpush1.bf16.xpose.msra.mxu0 0
    %2451 = vmatprep.subr.bf16.mxu0 0
    %2452 = vmatpush1.bf16.xpose.msra.mxu0 0
    %2453 = vmatprep.subr.bf16.mxu0 0
    %2454 = vmatpush1.bf16.xpose.msra.mxu0 0
    %2455 = vmatprep.subr.bf16.mxu0 0
    %2456 = vmatpush1.bf16.xpose.msra.mxu0 0
    %2457 = vmatprep.mubr.bf16.mxu0 0
    %2458 = vmatmul.mubr.bf16.gmra.mrb[0].mxu0 %v2420
    %v2459 = vpop.f32.mrb[0].mxu0
    %v2460 = vadd.f32 0.0, %v2459
    %v2461 = vpop.f32.mrb[0].mxu0
    %v2462 = vpop.f32.mrb[0].mxu0
    %v2463 = vpop.f32.mrb[0].mxu0
    %2464 = vdwg.mxu0
    %v2465 = vmul.f32 %v2410, 0.35355338
    %v2466 = vmul.f32 %v2460, 0.35355338
    %v2467 = vsel %vm126, %v2465, -inf
    %2468 = vmax.xlane.f32.xlu0 %v2467
    %v2469 = vpop.xlane.xlu0 %2468
    %v2470 = vsel %vm126, %v2466, -inf
    %2471 = vmax.xlane.f32.xlu0 %v2470
    %v2472 = vpop.xlane.xlu0 %2471
    %v2473 = vsub.f32 %v2465, %v2469
    %v2474 = vsub.f32 %v2466, %v2472
    %v2475 = vmul.f32 %v2473, 1.442695
    %v2476 = vpow.pop %v2475
    %v2477 = vmul.f32 %v2474, 1.442695
    %v2478 = vpow.pop %v2477
    %v2479 = vsel %vm126, %v2476, 0.0
    %2480 = vadd.xlane.f32.xlu0 %v2479
    %v2481 = vpop.xlane.xlu0 %2480
    %v2482 = vsel %vm126, %v2478, 0.0
    %2483 = vadd.xlane.f32.xlu0 %v2482
    %v2484 = vpop.xlane.xlu0 %2483
    %v2485 = vrcp.pop %v2481
    %v2486 = vrcp.pop %v2484
    %v2487 = vmul.f32 %v2476, %v2485
    %v2488 = vmul.f32 %v2478, %v2486
    %v2489 = vpack.c.bf16 %v2487, %v2487
    %v2490 = vpack.c.bf16 %v2488, %v2488
    %2491 = vrot.lane.b32.xlu0 %v1549, 40
    %v2492 = vpop.permute.xlu0 %2491
    %v2494 = vsel %vm126, %v2489, 0
    %v2497 = vsel %vm253, %v2492, 0
    %2499 = vmatprep.subr.bf16.mxu0 0
    %2500 = vmatpush1.bf16.msra.mxu0 %v2497
    %2501 = vmatprep.subr.bf16.mxu0 0
    %2502 = vmatpush1.bf16.msra.mxu0 0
    %2503 = vmatprep.subr.bf16.mxu0 0
    %2504 = vmatpush1.bf16.msra.mxu0 0
    %2505 = vmatprep.subr.bf16.mxu0 0
    %2506 = vmatpush1.bf16.msra.mxu0 0
    %2507 = vmatprep.subr.bf16.mxu0 0
    %2508 = vmatpush1.bf16.msra.mxu0 0
    %2509 = vmatprep.subr.bf16.mxu0 0
    %2510 = vmatpush1.bf16.msra.mxu0 0
    %2511 = vmatprep.subr.bf16.mxu0 0
    %2512 = vmatpush1.bf16.msra.mxu0 0
    %2513 = vmatprep.subr.bf16.mxu0 0
    %2514 = vmatpush1.bf16.msra.mxu0 0
    %2515 = vmatprep.subr.bf16.mxu0 0
    %2516 = vmatpush1.bf16.msra.mxu0 0
    %2517 = vmatprep.subr.bf16.mxu0 0
    %2518 = vmatpush1.bf16.msra.mxu0 0
    %2519 = vmatprep.subr.bf16.mxu0 0
    %2520 = vmatpush1.bf16.msra.mxu0 0
    %2521 = vmatprep.subr.bf16.mxu0 0
    %2522 = vmatpush1.bf16.msra.mxu0 0
    %2523 = vmatprep.subr.bf16.mxu0 0
    %2524 = vmatpush1.bf16.msra.mxu0 0
    %2525 = vmatprep.subr.bf16.mxu0 0
    %2526 = vmatpush1.bf16.msra.mxu0 0
    %2527 = vmatprep.subr.bf16.mxu0 0
    %2528 = vmatpush1.bf16.msra.mxu0 0
    %2529 = vmatprep.subr.bf16.mxu0 0
    %2530 = vmatpush1.bf16.msra.mxu0 0
    %2531 = vmatprep.mubr.bf16.mxu0 0
    %2532 = vmatmul.mubr.bf16.gmra.mrb[0].mxu0 %v2494
    %v2533 = vpop.f32.mrb[0].mxu0
    %v2534 = vadd.f32 0.0, %v2533
    %v2535 = vpop.f32.mrb[0].mxu0
    %v2536 = vpop.f32.mrb[0].mxu0
    %v2537 = vpop.f32.mrb[0].mxu0
    %2538 = vdwg.mxu0
    %2539 = vrot.lane.b32.xlu0 %v1550, 40
    %v2540 = vpop.permute.xlu0 %2539
    %v2542 = vsel %vm126, %v2490, 0
    %v2545 = vsel %vm253, %v2540, 0
    %2547 = vmatprep.subr.bf16.mxu0 0
    %2548 = vmatpush1.bf16.msra.mxu0 %v2545
    %2549 = vmatprep.subr.bf16.mxu0 0
    %2550 = vmatpush1.bf16.msra.mxu0 0
    %2551 = vmatprep.subr.bf16.mxu0 0
    %2552 = vmatpush1.bf16.msra.mxu0 0
    %2553 = vmatprep.subr.bf16.mxu0 0
    %2554 = vmatpush1.bf16.msra.mxu0 0
    %2555 = vmatprep.subr.bf16.mxu0 0
    %2556 = vmatpush1.bf16.msra.mxu0 0
    %2557 = vmatprep.subr.bf16.mxu0 0
    %2558 = vmatpush1.bf16.msra.mxu0 0
    %2559 = vmatprep.subr.bf16.mxu0 0
    %2560 = vmatpush1.bf16.msra.mxu0 0
    %2561 = vmatprep.subr.bf16.mxu0 0
    %2562 = vmatpush1.bf16.msra.mxu0 0
    %2563 = vmatprep.subr.bf16.mxu0 0
    %2564 = vmatpush1.bf16.msra.mxu0 0
    %2565 = vmatprep.subr.bf16.mxu0 0
    %2566 = vmatpush1.bf16.msra.mxu0 0
    %2567 = vmatprep.subr.bf16.mxu0 0
    %2568 = vmatpush1.bf16.msra.mxu0 0
    %2569 = vmatprep.subr.bf16.mxu0 0
    %2570 = vmatpush1.bf16.msra.mxu0 0
    %2571 = vmatprep.subr.bf16.mxu0 0
    %2572 = vmatpush1.bf16.msra.mxu0 0
    %2573 = vmatprep.subr.bf16.mxu0 0
    %2574 = vmatpush1.bf16.msra.mxu0 0
    %2575 = vmatprep.subr.bf16.mxu0 0
    %2576 = vmatpush1.bf16.msra.mxu0 0
    %2577 = vmatprep.subr.bf16.mxu0 0
    %2578 = vmatpush1.bf16.msra.mxu0 0
    %2579 = vmatprep.mubr.bf16.mxu0 0
    %2580 = vmatmul.mubr.bf16.gmra.mrb[0].mxu0 %v2542
    %v2581 = vpop.f32.mrb[0].mxu0
    %v2582 = vadd.f32 0.0, %v2581
    %v2583 = vpop.f32.mrb[0].mxu0
    %v2584 = vpop.f32.mrb[0].mxu0
    %v2585 = vpop.f32.mrb[0].mxu0
    %2586 = vdwg.mxu0
    %v2587 = vpack.c.bf16 %v2582, %v2534
    %v2588 = vld [vmem:[%s1772 + $0xc] sm:$0xf]
    %v2590 = vsel %vm126, %v2587, 0
    %v2593 = vsel %vm253, %v2588, 0
    %2595 = vmatprep.subr.bf16.mxu0 0
    %2596 = vmatpush1.bf16.msra.mxu0 %v2593
    %2597 = vmatprep.subr.bf16.mxu0 0
    %2598 = vmatpush1.bf16.msra.mxu0 0
    %2599 = vmatprep.subr.bf16.mxu0 0
    %2600 = vmatpush1.bf16.msra.mxu0 0
    %2601 = vmatprep.subr.bf16.mxu0 0
    %2602 = vmatpush1.bf16.msra.mxu0 0
    %2603 = vmatprep.subr.bf16.mxu0 0
    %2604 = vmatpush1.bf16.msra.mxu0 0
    %2605 = vmatprep.subr.bf16.mxu0 0
    %2606 = vmatpush1.bf16.msra.mxu0 0
    %2607 = vmatprep.subr.bf16.mxu0 0
    %2608 = vmatpush1.bf16.msra.mxu0 0
    %2609 = vmatprep.subr.bf16.mxu0 0
    %2610 = vmatpush1.bf16.msra.mxu0 0
    %2611 = vmatprep.subr.bf16.mxu0 0
    %2612 = vmatpush1.bf16.msra.mxu0 0
    %2613 = vmatprep.subr.bf16.mxu0 0
    %2614 = vmatpush1.bf16.msra.mxu0 0
    %2615 = vmatprep.subr.bf16.mxu0 0
    %2616 = vmatpush1.bf16.msra.mxu0 0
    %2617 = vmatprep.subr.bf16.mxu0 0
    %2618 = vmatpush1.bf16.msra.mxu0 0
    %2619 = vmatprep.subr.bf16.mxu0 0
    %2620 = vmatpush1.bf16.msra.mxu0 0
    %2621 = vmatprep.subr.bf16.mxu0 0
    %2622 = vmatpush1.bf16.msra.mxu0 0
    %2623 = vmatprep.subr.bf16.mxu0 0
    %2624 = vmatpush1.bf16.msra.mxu0 0
    %2625 = vmatprep.subr.bf16.mxu0 0
    %2626 = vmatpush1.bf16.msra.mxu0 0
    %2627 = vmatprep.mubr.bf16.mxu0 0
    %2628 = vmatmul.mubr.bf16.gmra.mrb[0].mxu0 %v2590
    %v2629 = vpop.f32.mrb[0].mxu0
    %v2630 = vadd.f32 0.0, %v2629
    %v2631 = vpop.f32.mrb[0].mxu0
    %v2632 = vpop.f32.mrb[0].mxu0
    %v2633 = vadd.f32 0.0, %v2632
    %v2634 = vpop.f32.mrb[0].mxu0
    %2635 = vdwg.mxu0
    %v2636 = vadd.f32 %v2363, %v2630
    %v2637 = vadd.f32 %v2364, %v2633
    %v2638 = vld [vmem:[%s4 + $0x1] sm:$0x1]
    %v2639 = vlaneseq
    %v2640 = vshrl.u32 %v2639, 7
    %v2641 = vsub.s32 0, %v2640
    %v2642 = vrot.slane %v2638, %v2641
    %v2643 = vadd.f32 %v2636, %v2642
    %v2644 = vadd.f32 %v2637, %v2642
    %v2645 = vadd.f32 %v1480, %v2643
    %v2646 = vadd.f32 %v1481, %v2644
    %v2647 = vld [vmem:[%s5 + $0x1] sm:$0x1]
    %v2648 = vld [vmem:[%s6 + $0x1] sm:$0x1]
    %v2649 = vsel %vm76, %v2645, 0.0
    %2650 = vadd.xlane.f32.xlu0 %v2649
    %v2651 = vpop.xlane.xlu0 %2650
    %v2652 = vsel %vm76, %v2646, 0.0
    %2653 = vadd.xlane.f32.xlu0 %v2652
    %v2654 = vpop.xlane.xlu0 %2653
    %v2655 = vmul.f32 %v2651, %v1228
    %v2656 = vmul.f32 %v2654, %v1228
    %v2657 = vsub.f32 %v2645, %v2655
    %v2658 = vsub.f32 %v2646, %v2656
    %v2659 = vmul.f32 %v2657, %v2657
    %v2660 = vmul.f32 %v2658, %v2658
    %v2661 = vsel %vm76, %v2659, 0.0
    %2662 = vadd.xlane.f32.xlu0 %v2661
    %v2663 = vpop.xlane.xlu0 %2662
    %v2664 = vsel %vm76, %v2660, 0.0
    %2665 = vadd.xlane.f32.xlu0 %v2664
    %v2666 = vpop.xlane.xlu0 %2665
    %v2667 = vmul.f32 %v2663, %v1228
    %v2668 = vmul.f32 %v2666, %v1228
    %v2669 = vadd.f32 %v2667, 1e-05
    %v2670 = vadd.f32 %v2668, 1e-05
    %v2671 = vrsqrt.pop %v2669
    %v2672 = vrsqrt.pop %v2670
    %v2673 = vmul.f32 %v2657, %v2671
    %v2674 = vmul.f32 %v2658, %v2672
    %v2675 = vlaneseq
    %v2676 = vshrl.u32 %v2675, 7
    %v2677 = vsub.s32 0, %v2676
    %v2678 = vrot.slane %v2647, %v2677
    %v2679 = vmul.f32 %v2673, %v2678
    %v2680 = vmul.f32 %v2674, %v2678
    %v2681 = vlaneseq
    %v2682 = vshrl.u32 %v2681, 7
    %v2683 = vsub.s32 0, %v2682
    %v2684 = vrot.slane %v2648, %v2683
    %v2685 = vadd.f32 %v2679, %v2684
    %v2686 = vadd.f32 %v2680, %v2684
    %v2687 = vpack.c.bf16 %v2686, %v2685
    %s2688 = scalar_lea.vmem %s7, 16
    %v2689 = vld [vmem:[%s2688] sm:$0xf]
    %v2690 = vld [vmem:[%s2688 + $0x4] sm:$0xf]
    %v2691 = vld [vmem:[%s2688 + $0x8] sm:$0xf]
    %v2692 = vld [vmem:[%s2688 + $0xc] sm:$0xf]
    %v2693 = vld [vmem:[%s8 + $0x1] sm:$0x1]
    %v2694 = vlaneseq
    %v2695 = vshrl.u32 %v2694, 7
    %v2696 = vsub.s32 0, %v2695
    %v2697 = vrot.slane %v2693, %v2696
    %v2702 = vunpack.c.l.b16 %v2689
    %v2703 = vunpack.c.l.b16 %v2690
    %v2704 = vunpack.c.l.b16 %v2691
    %v2705 = vunpack.c.l.b16 %v2692
    %v2706 = vpack.c.b16 %v2703, %v2702
    %v2707 = vpack.c.b16 %v2705, %v2704
    %v2711 = vsel %vm76, %v2687, 0
    %2713 = vmatprep.subr.bf16.mxu0 0
    %2714 = vmatpush1.bf16.msra.mxu0 %v2706
    %2715 = vmatprep.subr.bf16.mxu0 0
    %2716 = vmatpush1.bf16.msra.mxu0 %v2707
    %2717 = vmatprep.subr.bf16.mxu0 0
    %2718 = vmatpush1.bf16.msra.mxu0 0
    %2719 = vmatprep.subr.bf16.mxu0 0
    %2720 = vmatpush1.bf16.msra.mxu0 0
    %2721 = vmatprep.subr.bf16.mxu0 0
    %2722 = vmatpush1.bf16.msra.mxu0 0
    %2723 = vmatprep.subr.bf16.mxu0 0
    %2724 = vmatpush1.bf16.msra.mxu0 0
    %2725 = vmatprep.subr.bf16.mxu0 0
    %2726 = vmatpush1.bf16.msra.mxu0 0
    %2727 = vmatprep.subr.bf16.mxu0 0
    %2728 = vmatpush1.bf16.msra.mxu0 0
    %2729 = vmatprep.subr.bf16.mxu0 0
    %2730 = vmatpush1.bf16.msra.mxu0 0
    %2731 = vmatprep.subr.bf16.mxu0 0
    %2732 = vmatpush1.bf16.msra.mxu0 0
    %2733 = vmatprep.subr.bf16.mxu0 0
    %2734 = vmatpush1.bf16.msra.mxu0 0
    %2735 = vmatprep.subr.bf16.mxu0 0
    %2736 = vmatpush1.bf16.msra.mxu0 0
    %2737 = vmatprep.subr.bf16.mxu0 0
    %2738 = vmatpush1.bf16.msra.mxu0 0
    %2739 = vmatprep.subr.bf16.mxu0 0
    %2740 = vmatpush1.bf16.msra.mxu0 0
    %2741 = vmatprep.subr.bf16.mxu0 0
    %2742 = vmatpush1.bf16.msra.mxu0 0
    %2743 = vmatprep.subr.bf16.mxu0 0
    %2744 = vmatpush1.bf16.msra.mxu0 0
    %2745 = vmatprep.mubr.bf16.mxu0 0
    %2746 = vmatmul.mubr.bf16.gmra.mrb[0].mxu0 %v2711
    %v2747 = vpop.f32.mrb[0].mxu0
    %v2748 = vadd.f32 %v2697, %v2747
    %v2749 = vpop.f32.mrb[0].mxu0
    %v2750 = vpop.f32.mrb[0].mxu0
    %v2751 = vadd.f32 %v2697, %v2750
    %v2752 = vpop.f32.mrb[0].mxu0
    %2753 = vdwg.mxu0
    %v2754 = vmax.f32 %v2748, 0.0
    %v2755 = vmax.f32 %v2751, 0.0
    %v2756 = vpack.c.bf16 %v2755, %v2754
    %s2757 = scalar_lea.vmem %s9, 64
    %v2758 = vld [vmem:[%s2757] sm:$0xf]
    %v2759 = vld [vmem:[%s2757 + $0x4] sm:$0xf]
    %v2760 = vld [vmem:[%s2757 + $0x8] sm:$0xf]
    %v2761 = vld [vmem:[%s2757 + $0xc] sm:$0xf]
    %v2762 = vld [vmem:[%s2757 + $0x10] sm:$0xf]
    %v2763 = vld [vmem:[%s2757 + $0x14] sm:$0xf]
    %v2764 = vld [vmem:[%s2757 + $0x18] sm:$0xf]
    %v2765 = vld [vmem:[%s2757 + $0x1c] sm:$0xf]
    %v2766 = vld [vmem:[%s2757 + $0x20] sm:$0xf]
    %v2767 = vld [vmem:[%s2757 + $0x24] sm:$0xf]
    %v2768 = vld [vmem:[%s2757 + $0x28] sm:$0xf]
    %v2769 = vld [vmem:[%s2757 + $0x2c] sm:$0xf]
    %v2770 = vld [vmem:[%s2757 + $0x30] sm:$0xf]
    %v2771 = vld [vmem:[%s2757 + $0x34] sm:$0xf]
    %v2772 = vld [vmem:[%s2757 + $0x38] sm:$0xf]
    %v2773 = vld [vmem:[%s2757 + $0x3c] sm:$0xf]
    %v2774 = vld [vmem:[%s10 + $0x1] sm:$0x1]
    %v2775 = vlaneseq
    %v2776 = vshrl.u32 %v2775, 7
    %v2777 = vsub.s32 0, %v2776
    %v2778 = vrot.slane %v2774, %v2777
    %v2795 = vunpack.c.l.b16 %v2758
    %v2796 = vunpack.c.l.b16 %v2759
    %v2797 = vunpack.c.l.b16 %v2760
    %v2798 = vunpack.c.l.b16 %v2761
    %v2799 = vunpack.c.l.b16 %v2762
    %v2800 = vunpack.c.l.b16 %v2763
    %v2801 = vunpack.c.l.b16 %v2764
    %v2802 = vunpack.c.l.b16 %v2765
    %v2803 = vunpack.c.l.b16 %v2766
    %v2804 = vunpack.c.l.b16 %v2767
    %v2805 = vunpack.c.l.b16 %v2768
    %v2806 = vunpack.c.l.b16 %v2769
    %v2807 = vunpack.c.l.b16 %v2770
    %v2808 = vunpack.c.l.b16 %v2771
    %v2809 = vunpack.c.l.b16 %v2772
    %v2810 = vunpack.c.l.b16 %v2773
    %v2811 = vpack.c.b16 %v2796, %v2795
    %v2812 = vpack.c.b16 %v2798, %v2797
    %v2813 = vpack.c.b16 %v2800, %v2799
    %v2814 = vpack.c.b16 %v2802, %v2801
    %v2815 = vpack.c.b16 %v2804, %v2803
    %v2816 = vpack.c.b16 %v2806, %v2805
    %v2817 = vpack.c.b16 %v2808, %v2807
    %v2818 = vpack.c.b16 %v2810, %v2809
    %2827 = vmatprep.subr.bf16.mxu0 0
    %2828 = vmatpush1.bf16.msra.mxu0 %v2811
    %2829 = vmatprep.subr.bf16.mxu0 0
    %2830 = vmatpush1.bf16.msra.mxu0 %v2812
    %2831 = vmatprep.subr.bf16.mxu0 0
    %2832 = vmatpush1.bf16.msra.mxu0 %v2813
    %2833 = vmatprep.subr.bf16.mxu0 0
    %2834 = vmatpush1.bf16.msra.mxu0 %v2814
    %2835 = vmatprep.subr.bf16.mxu0 0
    %2836 = vmatpush1.bf16.msra.mxu0 %v2815
    %2837 = vmatprep.subr.bf16.mxu0 0
    %2838 = vmatpush1.bf16.msra.mxu0 %v2816
    %2839 = vmatprep.subr.bf16.mxu0 0
    %2840 = vmatpush1.bf16.msra.mxu0 %v2817
    %2841 = vmatprep.subr.bf16.mxu0 0
    %2842 = vmatpush1.bf16.msra.mxu0 %v2818
    %2843 = vmatprep.subr.bf16.mxu0 0
    %2844 = vmatpush1.bf16.msra.mxu0 0
    %2845 = vmatprep.subr.bf16.mxu0 0
    %2846 = vmatpush1.bf16.msra.mxu0 0
    %2847 = vmatprep.subr.bf16.mxu0 0
    %2848 = vmatpush1.bf16.msra.mxu0 0
    %2849 = vmatprep.subr.bf16.mxu0 0
    %2850 = vmatpush1.bf16.msra.mxu0 0
    %2851 = vmatprep.subr.bf16.mxu0 0
    %2852 = vmatpush1.bf16.msra.mxu0 0
    %2853 = vmatprep.subr.bf16.mxu0 0
    %2854 = vmatpush1.bf16.msra.mxu0 0
    %2855 = vmatprep.subr.bf16.mxu0 0
    %2856 = vmatpush1.bf16.msra.mxu0 0
    %2857 = vmatprep.subr.bf16.mxu0 0
    %2858 = vmatpush1.bf16.msra.mxu0 0
    %2859 = vmatprep.mubr.bf16.mxu0 0
    %2860 = vmatmul.mubr.bf16.gmra.mrb[0].mxu0 %v2756
    %v2861 = vpop.f32.mrb[0].mxu0
    %v2862 = vadd.f32 %v2778, %v2861
    %v2863 = vpop.f32.mrb[0].mxu0
    %v2864 = vpop.f32.mrb[0].mxu0
    %v2865 = vadd.f32 %v2778, %v2864
    %v2866 = vpop.f32.mrb[0].mxu0
    %2867 = vdwg.mxu0
    %v2868 = vadd.f32 %v2685, %v2862
    %v2869 = vadd.f32 %v2686, %v2865
    %v2870 = vld [vmem:[%s11 + $0x1] sm:$0x1]
    %v2871 = vld [vmem:[%s12 + $0x1] sm:$0x1]
    %v2872 = vsel %vm76, %v2868, 0.0
    %2873 = vadd.xlane.f32.xlu0 %v2872
    %v2874 = vpop.xlane.xlu0 %2873
    %v2875 = vsel %vm76, %v2869, 0.0
    %2876 = vadd.xlane.f32.xlu0 %v2875
    %v2877 = vpop.xlane.xlu0 %2876
    %v2878 = vmul.f32 %v2874, %v1228
    %v2879 = vmul.f32 %v2877, %v1228
    %v2880 = vsub.f32 %v2868, %v2878
    %v2881 = vsub.f32 %v2869, %v2879
    %v2882 = vmul.f32 %v2880, %v2880
    %v2883 = vmul.f32 %v2881, %v2881
    %v2884 = vsel %vm76, %v2882, 0.0
    %2885 = vadd.xlane.f32.xlu0 %v2884
    %v2886 = vpop.xlane.xlu0 %2885
    %v2887 = vsel %vm76, %v2883, 0.0
    %2888 = vadd.xlane.f32.xlu0 %v2887
    %v2889 = vpop.xlane.xlu0 %2888
    %v2890 = vmul.f32 %v2886, %v1228
    %v2891 = vmul.f32 %v2889, %v1228
    %v2892 = vadd.f32 %v2890, 1e-05
    %v2893 = vadd.f32 %v2891, 1e-05
    %v2894 = vrsqrt.pop %v2892
    %v2895 = vrsqrt.pop %v2893
    %v2896 = vmul.f32 %v2880, %v2894
    %v2897 = vmul.f32 %v2881, %v2895
    %v2898 = vlaneseq
    %v2899 = vshrl.u32 %v2898, 7
    %v2900 = vsub.s32 0, %v2899
    %v2901 = vrot.slane %v2870, %v2900
    %v2902 = vmul.f32 %v2896, %v2901
    %v2903 = vmul.f32 %v2897, %v2901
    %v2904 = vlaneseq
    %v2905 = vshrl.u32 %v2904, 7
    %v2906 = vsub.s32 0, %v2905
    %v2907 = vrot.slane %v2871, %v2906
    %v2908 = vadd.f32 %v2902, %v2907
    %v2909 = vadd.f32 %v2903, %v2907
    %v2910 = vsel %vm76, %v2908, 0.0
    %v2911 = vrot.slane %v2910, 4
    %v2912 = vadd.f32 %v2910, %v2911
    %v2913 = vrot.slane %v2912, 2
    %v2914 = vadd.f32 %v2912, %v2913
    %v2915 = vrot.slane %v2914, 1
    %v2916 = vadd.f32 %v2914, %v2915
    %v2917 = vsel %vm76, %v2909, 0.0
    %v2918 = vrot.slane %v2917, 4
    %v2919 = vadd.f32 %v2917, %v2918
    %v2920 = vrot.slane %v2919, 2
    %v2921 = vadd.f32 %v2919, %v2920
    %v2922 = vrot.slane %v2921, 1
    %v2923 = vadd.f32 %v2921, %v2922
    %v2924 = vrcp.pop 8.0
    %v2925 = vmul.f32 %v2916, %v2924
    %v2926 = vmul.f32 %v2923, %v2924
    %v2927 = vpack.c.bf16 %v2925, %v2925
    %v2928 = vpack.c.bf16 %v2926, %v2926
    %v2929 = vld [vmem:[%s13] sm:$0xf]
    %v2930 = vld [vmem:[%s13 + $0x4] sm:$0xf]
    %v2931 = vld [vmem:[%s13 + $0x8] sm:$0xf]
    %v2932 = vld [vmem:[%s13 + $0xc] sm:$0xf]
    %v2933 = vld [vmem:[%s14] sm:$0x1]
    %v2935 = vlaneseq
    %v2936 = vshrl.u32 %v2935, 7
    %v2937 = vsub.s32 0, %v2936
    %v2938 = vrot.slane %v2933, %v2937
    %v2942 = vunpack.c.l.b16 %v2927
    %v2943 = vunpack.c.l.b16 %v2928
    %vm2944 = vcmask 1041409
    %v2945 = vsel %vm2944, %v2943, %v2942
    %v2946 = vpack.c.b16 %v2945, %v2945
    %v2951 = vunpack.c.l.b16 %v2929
    %v2952 = vunpack.c.l.b16 %v2930
    %v2953 = vunpack.c.l.b16 %v2931
    %v2954 = vunpack.c.l.b16 %v2932
    %v2955 = vpack.c.b16 %v2952, %v2951
    %v2956 = vpack.c.b16 %v2954, %v2953
    %v2960 = vsel %vm76, %v2946, 0
    %2962 = vmatprep.subr.bf16.mxu0 0
    %2963 = vmatpush1.bf16.msra.mxu0 %v2955
    %2964 = vmatprep.subr.bf16.mxu0 0
    %2965 = vmatpush1.bf16.msra.mxu0 %v2956
    %2966 = vmatprep.subr.bf16.mxu0 0
    %2967 = vmatpush1.bf16.msra.mxu0 0
    %2968 = vmatprep.subr.bf16.mxu0 0
    %2969 = vmatpush1.bf16.msra.mxu0 0
    %2970 = vmatprep.subr.bf16.mxu0 0
    %2971 = vmatpush1.bf16.msra.mxu0 0
    %2972 = vmatprep.subr.bf16.mxu0 0
    %2973 = vmatpush1.bf16.msra.mxu0 0
    %2974 = vmatprep.subr.bf16.mxu0 0
    %2975 = vmatpush1.bf16.msra.mxu0 0
    %2976 = vmatprep.subr.bf16.mxu0 0
    %2977 = vmatpush1.bf16.msra.mxu0 0
    %2978 = vmatprep.subr.bf16.mxu0 0
    %2979 = vmatpush1.bf16.msra.mxu0 0
    %2980 = vmatprep.subr.bf16.mxu0 0
    %2981 = vmatpush1.bf16.msra.mxu0 0
    %2982 = vmatprep.subr.bf16.mxu0 0
    %2983 = vmatpush1.bf16.msra.mxu0 0
    %2984 = vmatprep.subr.bf16.mxu0 0
    %2985 = vmatpush1.bf16.msra.mxu0 0
    %2986 = vmatprep.subr.bf16.mxu0 0
    %2987 = vmatpush1.bf16.msra.mxu0 0
    %2988 = vmatprep.subr.bf16.mxu0 0
    %2989 = vmatpush1.bf16.msra.mxu0 0
    %2990 = vmatprep.subr.bf16.mxu0 0
    %2991 = vmatpush1.bf16.msra.mxu0 0
    %2992 = vmatprep.subr.bf16.mxu0 0
    %2993 = vmatpush1.bf16.msra.mxu0 0
    %2994 = vmatprep.mubr.bf16.mxu0 0
    %2995 = vmatmul.mubr.bf16.gmra.mrb[0].mxu0 %v2960
    %v2996 = vpop.f32.mrb[0].mxu0
    %v2997 = vadd.f32 %v2938, %v2996
    %v2998 = vpop.f32.mrb[0].mxu0
    %v2999 = vpop.f32.mrb[0].mxu0
    %v3000 = vpop.f32.mrb[0].mxu0
    %3001 = vdwg.mxu0
    %vm3002 = vcmask 25600
    %3003 = vst.msk [vmem:[#allocation2] sm:$0x3] %vm3002, %v2997
    // Predicated region
    $region62: #{tpu_custom_call.1} parent=1 // pred_check
      _
    $region63: #{tpu_custom_call.1} parent=1 // pred_check_branch
      %3005 = sbr.rel (0) target = $region65
    $region64: #{tpu_custom_call.1} parent=1 // pred_region
      %s3007 = ssub.s32 32, 32
      %3008 = vsyncadd [#allocation3], %s3007
      %s3010 = sshll.u32 [#allocation2], 4
      %s3011 = int_to_ptr.vmem [resolvable:$true] %s3010
      %3013 = dma.vmem_to_hbm [thread:$0]  %s3011, 32, %s15, [#allocation3]
    $region65: #{tpu_custom_call.1} parent=1 // pred_fallthru
      _
    // Predicated region
    $region66: #{tpu_custom_call.1} parent=1 // pred_check
      _
    $region67: #{tpu_custom_call.1} parent=1 // pred_check_branch
      %3015 = sbr.rel (0) target = $region69
    $region68: #{tpu_custom_call.1} parent=1 // pred_region
      %3016 = dma.done [#allocation3], 32
    $region69: #{tpu_custom_call.1} parent=1 // pred_fallthru
      _
    %3017 = vsyncpa [#allocation3], 1

</llo_original>
